<compile_context>
chip_gen: v7x
topology: tpu7x:2x2x1
jax: 0.10.0
libtpu: 0.0.40
codegen_flags: <defaults>
</compile_context>

<pallas_src>
import functools

import jax
import jax.numpy as jnp
from jax import lax
from jax.experimental import pallas as pl
from jax.experimental.pallas import tpu as pltpu

# ---- small GPT-2-style config ----
VOCAB = 64
VOCAB_PAD = 128            # lane-dense logits / embedding width (multiple of 128)
N_CTX = 16
D_MODEL = 32
N_HEAD = 4
N_LAYER = 2
D_FF = 4 * D_MODEL
HEAD_DIM = D_MODEL // N_HEAD
LN_EPS = 1e-5


# ---------------- in-kernel helpers (f32 elementwise math) ----------------
def _layernorm(x, g, b):
    # x: (S, D), g/b: (1, D)
    mu = jnp.mean(x, axis=-1, keepdims=True)
    xc = x - mu
    var = jnp.mean(xc * xc, axis=-1, keepdims=True)
    return xc * lax.rsqrt(var + LN_EPS) * g + b


def _gelu_new(x):
    # GPT-2 "gelu_new" (tanh approximation)
    return 0.5 * x * (1.0 + jnp.tanh(0.7978845608028654 * (x + 0.044715 * x * x * x)))


# ---------------- fused whole-model kernel (per batch row) ----------------
def gpt2_fused_kernel(ids_ref, mask_ref, wpe_ref,
                      ln1g_ref, ln1b_ref, wqkv_ref, bqkv_ref, woh_ref, bo_ref,
                      ln2g_ref, ln2b_ref, wfc_ref, bfc_ref, wproj_ref, bproj_ref,
                      lnfg_ref, lnfb_ref, wte_ref,
                      o_ref, *, seq_len):
    ids = ids_ref[0]           # (S, 1) int32 token ids for this batch row
    mask_row = mask_ref[0]     # (1, S), 1.0 = attend, 0.0 = padding

    # --- fused token embedding (one-hot @ tied wte, MXU) + position embedding ---
    vocab_iota = lax.broadcasted_iota(jnp.int32, (seq_len, VOCAB_PAD), 1)
    onehot = jnp.where(vocab_iota == ids, 1.0, 0.0).astype(jnp.bfloat16)   # (S, Vp)
    x = jnp.dot(onehot, wte_ref[...],
                preferred_element_type=jnp.float32) + wpe_ref[...]          # (S, D) f32
    # x stays on-chip for the whole model (never written back between layers)

    # causal + key-padding mask, hoisted out of the layer loop
    q_ids = lax.broadcasted_iota(jnp.int32, (seq_len, seq_len), 0)
    k_ids = lax.broadcasted_iota(jnp.int32, (seq_len, seq_len), 1)
    allowed = jnp.logical_and(k_ids <= q_ids, mask_row > 0.5)               # (S, S)

    scale = 1.0 / (HEAD_DIM ** 0.5)

    for li in range(N_LAYER):                      # static unroll over layers
        # --- causal multi-head self-attention ---
        h1 = _layernorm(x, ln1g_ref[li], ln1b_ref[li])
        qkv = jnp.dot(h1.astype(jnp.bfloat16), wqkv_ref[li],
                      preferred_element_type=jnp.float32) + bqkv_ref[li]   # (S, 3D) f32

        parts = []
        for hi in range(N_HEAD):                   # static unroll over heads
            lo = hi * HEAD_DIM
            qh = qkv[:, lo:lo + HEAD_DIM]
            kh = qkv[:, D_MODEL + lo:D_MODEL + lo + HEAD_DIM]
            vh = qkv[:, 2 * D_MODEL + lo:2 * D_MODEL + lo + HEAD_DIM]
            # scores = qh @ kh.T  (contract last dims, no explicit transpose)
            s = lax.dot_general(qh.astype(jnp.bfloat16), kh.astype(jnp.bfloat16),
                                (((1,), (1,)), ((), ())),
                                preferred_element_type=jnp.float32) * scale
            s = jnp.where(allowed, s, -1e9)
            s = s - jnp.max(s, axis=-1, keepdims=True)
            p = jnp.exp(s)                                           # f32 softmax
            p = p * pl.reciprocal(jnp.sum(p, axis=-1, keepdims=True), approx=True)
            ctx_h = jnp.dot(p.astype(jnp.bfloat16), vh.astype(jnp.bfloat16),
                            preferred_element_type=jnp.float32)      # (S, hd)
            # per-head output-projection slab (hd, D): avoids lane-axis concat
            parts.append(jnp.dot(ctx_h.astype(jnp.bfloat16), woh_ref[li, hi],
                                 preferred_element_type=jnp.float32))  # (S, D)
        x = x + sum(parts) + bo_ref[li]

        # --- MLP ---
        h2 = _layernorm(x, ln2g_ref[li], ln2b_ref[li])
        f = jnp.dot(h2.astype(jnp.bfloat16), wfc_ref[li],
                    preferred_element_type=jnp.float32) + bfc_ref[li]
        f = _gelu_new(f)                                              # f32 gelu
        y = jnp.dot(f.astype(jnp.bfloat16), wproj_ref[li],
                    preferred_element_type=jnp.float32) + bproj_ref[li]
        x = x + y

    # --- final LN + tied LM head (lane-dense padded vocab) ---
    hf = _layernorm(x, lnfg_ref[...], lnfb_ref[...])
    o_ref[0] = lax.dot_general(hf.astype(jnp.bfloat16), wte_ref[...],
                               (((1,), (1,)), ((), ())),
                               preferred_element_type=jnp.float32)    # (S, VOCAB_PAD)


def gpt2_forward_fused(ids_bs1, mask_b1s, wpe_s, fp):
    B, S, _ = ids_bs1.shape

    weight_args = (fp['ln1_g'], fp['ln1_b'], fp['w_qkv'], fp['b_qkv'],
                   fp['w_o_h'], fp['b_o'], fp['ln2_g'], fp['ln2_b'],
                   fp['w_fc'], fp['b_fc'], fp['w_proj'], fp['b_proj'],
                   fp['lnf_g'], fp['lnf_b'], fp['wte_pad'])

    def full_spec(a):
        return pl.BlockSpec(a.shape, lambda b, _nd=a.ndim: (0,) * _nd)

    # advisory cost estimate for XLA scheduling around the custom call
    per_layer_flops = (2 * S * D_MODEL * 3 * D_MODEL   # qkv proj
                       + 2 * S * S * D_MODEL           # q @ k.T  (all heads)
                       + 2 * S * S * D_MODEL           # p @ v
                       + 2 * S * D_MODEL * D_MODEL     # output proj
                       + 2 * S * D_MODEL * D_FF        # fc
                       + 2 * S * D_FF * D_MODEL)       # proj
    flops = B * (N_LAYER * per_layer_flops
                 + 2 * S * VOCAB_PAD * D_MODEL         # embedding one-hot matmul
                 + 2 * S * D_MODEL * VOCAB_PAD)        # lm head
    transcendentals = B * N_LAYER * (N_HEAD * S * S + S * D_FF)
    bytes_accessed = (int(ids_bs1.size) * 4 + int(mask_b1s.size) * 4
                      + int(wpe_s.size) * 4 + B * S * VOCAB_PAD * 4
                      + sum(int(a.size) * a.dtype.itemsize for a in weight_args))

    return pl.pallas_call(
        functools.partial(gpt2_fused_kernel, seq_len=S),
        out_shape=jax.ShapeDtypeStruct((B, S, VOCAB_PAD), jnp.float32),
        grid=(B,),
        in_specs=[pl.BlockSpec((1, S, 1), lambda b: (b, 0, 0)),        # token ids
                  pl.BlockSpec((1, 1, S), lambda b: (b, 0, 0)),        # attention mask
                  pl.BlockSpec((S, D_MODEL), lambda b: (0, 0))]        # position emb slice
                 + [full_spec(a) for a in weight_args],
        out_specs=pl.BlockSpec((1, S, VOCAB_PAD), lambda b: (b, 0, 0)),
        compiler_params=pltpu.CompilerParams(dimension_semantics=("parallel",)),
        cost_estimate=pl.CostEstimate(flops=int(flops),
                                      transcendentals=int(transcendentals),
                                      bytes_accessed=int(bytes_accessed)),
    )(ids_bs1, mask_b1s, wpe_s, *weight_args)


# ---------------- parameters (deterministic synthetic init, GPT-2 std=0.02) ----------------
def init_params(key):
    def nrm(k, shape):
        return 0.02 * jax.random.normal(k, shape, jnp.float32)

    keys = jax.random.split(key, 2 + N_LAYER)
    params = {
        'wte': nrm(keys[0], (VOCAB, D_MODEL)),
        'wpe': nrm(keys[1], (N_CTX, D_MODEL)),
        'lnf_g': jnp.ones((D_MODEL,), jnp.float32),
        'lnf_b': jnp.zeros((D_MODEL,), jnp.float32),
        'blocks': [],
    }
    for i in range(N_LAYER):
        bk = jax.random.split(keys[2 + i], 4)
        params['blocks'].append({
            'ln1_g': jnp.ones((D_MODEL,), jnp.float32),
            'ln1_b': jnp.zeros((D_MODEL,), jnp.float32),
            'w_qkv': nrm(bk[0], (D_MODEL, 3 * D_MODEL)),
            'b_qkv': jnp.zeros((3 * D_MODEL,), jnp.float32),
            'w_o': nrm(bk[1], (D_MODEL, D_MODEL)),
            'b_o': jnp.zeros((D_MODEL,), jnp.float32),
            'ln2_g': jnp.ones((D_MODEL,), jnp.float32),
            'ln2_b': jnp.zeros((D_MODEL,), jnp.float32),
            'w_fc': nrm(bk[2], (D_MODEL, D_FF)),
            'b_fc': jnp.zeros((D_FF,), jnp.float32),
            'w_proj': nrm(bk[3], (D_FF, D_MODEL)),
            'b_proj': jnp.zeros((D_MODEL,), jnp.float32),
        })
    return params


def prepare_fused_params(params):
    """Stack per-layer weights on a leading layer axis, reshape 1-D params to (1, D)
    tiles, cast MXU weight operands to bf16, pad the tied embedding/head slab to a
    lane-dense width (padded rows are zero, never selected by valid token ids)."""
    blocks = params['blocks']

    def stk(name):
        return jnp.stack([b[name] for b in blocks], axis=0)

    return {
        'ln1_g': stk('ln1_g').reshape(N_LAYER, 1, D_MODEL),
        'ln1_b': stk('ln1_b').reshape(N_LAYER, 1, D_MODEL),
        'w_qkv': stk('w_qkv').astype(jnp.bfloat16),                         # (L, D, 3D)
        'b_qkv': stk('b_qkv').reshape(N_LAYER, 1, 3 * D_MODEL),
        'w_o_h': stk('w_o').reshape(N_LAYER, N_HEAD, HEAD_DIM, D_MODEL)
                           .astype(jnp.bfloat16),                           # (L, H, hd, D)
        'b_o': stk('b_o').reshape(N_LAYER, 1, D_MODEL),
        'ln2_g': stk('ln2_g').reshape(N_LAYER, 1, D_MODEL),
        'ln2_b': stk('ln2_b').reshape(N_LAYER, 1, D_MODEL),
        'w_fc': stk('w_fc').astype(jnp.bfloat16),                           # (L, D, F)
        'b_fc': stk('b_fc').reshape(N_LAYER, 1, D_FF),
        'w_proj': stk('w_proj').astype(jnp.bfloat16),                       # (L, F, D)
        'b_proj': stk('b_proj').reshape(N_LAYER, 1, D_MODEL),
        'lnf_g': params['lnf_g'].reshape(1, D_MODEL),
        'lnf_b': params['lnf_b'].reshape(1, D_MODEL),
        'wte_pad': jnp.pad(params['wte'],
                           ((0, VOCAB_PAD - VOCAB), (0, 0))).astype(jnp.bfloat16),
    }
    # NOTE (scale-up guard): at real GPT-2 sizes the head/wte and MLP weights must be
    # tiled with grid axes instead of full-tensor specs (VMEM limits, esp. v7x's 64 MiB).


# ---------------- full forward (mirrors GPT2LMHeadModel.forward) ----------------
def transformer_forward(params, input_ids, attention_mask=None, labels=None):
    B, S = input_ids.shape
    if attention_mask is None:
        attention_mask = jnp.ones((B, S), jnp.float32)
    mask_b1s = attention_mask.astype(jnp.float32).reshape(B, 1, S)
    ids_bs1 = input_ids.astype(jnp.int32).reshape(B, S, 1)
    wpe_s = params['wpe'][:S]                                              # (S, D) f32

    fused = prepare_fused_params(params)
    logits = gpt2_forward_fused(ids_bs1, mask_b1s, wpe_s, fused)[:, :, :VOCAB]

    out = {'logits': logits}
    if labels is not None:
        # TODO(synk): GPT-2 shifted cross-entropy with HF ignore_index=-100 -- scalar
        # reduction kept as plain-JAX glue (data-dependent gather + global mean).
        shift_logits = logits[:, :-1, :]
        shift_labels = labels[:, 1:]
        valid = shift_labels != -100
        safe_labels = jnp.where(valid, shift_labels, 0)
        logp = jax.nn.log_softmax(shift_logits, axis=-1)
        nll = -jnp.take_along_axis(logp, safe_labels[..., None], axis=-1)[..., 0]
        denom = jnp.maximum(jnp.sum(valid), 1).astype(jnp.float32)
        out['loss'] = jnp.sum(jnp.where(valid, nll, 0.0)) / denom
    return out


if __name__ == "__main__":
    key = jax.random.PRNGKey(0)
    pkey, ikey = jax.random.split(key, 2)

    params = init_params(pkey)

    B, S = 2, 8
    input_ids = jax.random.randint(ikey, (B, S), 0, VOCAB, dtype=jnp.int32)
    attention_mask = jnp.ones((B, S), jnp.float32).at[1, -2:].set(0.0)   # pad tail of batch 1
    labels = input_ids

    out = transformer_forward(params, input_ids, attention_mask, labels)
    jax.block_until_ready(out['logits'])
    jax.block_until_ready(out['loss'])

    assert out['logits'].shape == (B, S, VOCAB)
    assert out['loss'].shape == ()
    print("KERNEL_OK")
</pallas_src>

<mosaic_0001>
module attributes {stable_mosaic.version = 11 : i64} {
  func.func @gpt2_fused_kernel(%arg0: i32, %arg1: memref<1x8x1xi32, #tpu.memory_space<vmem>>, %arg2: memref<1x1x8xf32, #tpu.memory_space<vmem>>, %arg3: memref<8x32xf32, #tpu.memory_space<vmem>>, %arg4: memref<2x1x32xf32, #tpu.memory_space<vmem>>, %arg5: memref<2x1x32xf32, #tpu.memory_space<vmem>>, %arg6: memref<2x32x96xbf16, #tpu.memory_space<vmem>>, %arg7: memref<2x1x96xf32, #tpu.memory_space<vmem>>, %arg8: memref<2x4x8x32xbf16, #tpu.memory_space<vmem>>, %arg9: memref<2x1x32xf32, #tpu.memory_space<vmem>>, %arg10: memref<2x1x32xf32, #tpu.memory_space<vmem>>, %arg11: memref<2x1x32xf32, #tpu.memory_space<vmem>>, %arg12: memref<2x32x128xbf16, #tpu.memory_space<vmem>>, %arg13: memref<2x1x128xf32, #tpu.memory_space<vmem>>, %arg14: memref<2x128x32xbf16, #tpu.memory_space<vmem>>, %arg15: memref<2x1x32xf32, #tpu.memory_space<vmem>>, %arg16: memref<1x32xf32, #tpu.memory_space<vmem>>, %arg17: memref<1x32xf32, #tpu.memory_space<vmem>>, %arg18: memref<128x32xbf16, #tpu.memory_space<vmem>>, %arg19: memref<1x8x128xf32, #tpu.memory_space<vmem>>) attributes {dimension_semantics = [#tpu.dimension_semantics<parallel>], iteration_bounds = array<i64: 2>, scalar_prefetch = 0 : i64, scratch_operands = 0 : i64, tpu.core_type = #tpu.core_type<tc>, window_params = [{transform_indices = @transform_0, window_bounds = array<i64: 1, 8, 1>}, {transform_indices = @transform_1, window_bounds = array<i64: 1, 1, 8>}, {pipeline_mode = #tpu.pipeline_mode<synchronous>, transform_indices = @transform_2, window_bounds = array<i64: 8, 32>}, {pipeline_mode = #tpu.pipeline_mode<synchronous>, transform_indices = @transform_3, window_bounds = array<i64: 2, 1, 32>}, {pipeline_mode = #tpu.pipeline_mode<synchronous>, transform_indices = @transform_4, window_bounds = array<i64: 2, 1, 32>}, {pipeline_mode = #tpu.pipeline_mode<synchronous>, transform_indices = @transform_5, window_bounds = array<i64: 2, 32, 96>}, {pipeline_mode = #tpu.pipeline_mode<synchronous>, transform_indices = @transform_6, window_bounds = array<i64: 2, 1, 96>}, {pipeline_mode = #tpu.pipeline_mode<synchronous>, transform_indices = @transform_7, window_bounds = array<i64: 2, 4, 8, 32>}, {pipeline_mode = #tpu.pipeline_mode<synchronous>, transform_indices = @transform_8, window_bounds = array<i64: 2, 1, 32>}, {pipeline_mode = #tpu.pipeline_mode<synchronous>, transform_indices = @transform_9, window_bounds = array<i64: 2, 1, 32>}, {pipeline_mode = #tpu.pipeline_mode<synchronous>, transform_indices = @transform_10, window_bounds = array<i64: 2, 1, 32>}, {pipeline_mode = #tpu.pipeline_mode<synchronous>, transform_indices = @transform_11, window_bounds = array<i64: 2, 32, 128>}, {pipeline_mode = #tpu.pipeline_mode<synchronous>, transform_indices = @transform_12, window_bounds = array<i64: 2, 1, 128>}, {pipeline_mode = #tpu.pipeline_mode<synchronous>, transform_indices = @transform_13, window_bounds = array<i64: 2, 128, 32>}, {pipeline_mode = #tpu.pipeline_mode<synchronous>, transform_indices = @transform_14, window_bounds = array<i64: 2, 1, 32>}, {pipeline_mode = #tpu.pipeline_mode<synchronous>, transform_indices = @transform_15, window_bounds = array<i64: 1, 32>}, {pipeline_mode = #tpu.pipeline_mode<synchronous>, transform_indices = @transform_16, window_bounds = array<i64: 1, 32>}, {pipeline_mode = #tpu.pipeline_mode<synchronous>, transform_indices = @transform_17, window_bounds = array<i64: 128, 32>}, {transform_indices = @transform_18, window_bounds = array<i64: 1, 8, 128>}]} {
    %c0 = arith.constant 0 : index
    %c0_0 = arith.constant 0 : index
    %c0_1 = arith.constant 0 : index
    %0 = vector.load %arg1[%c0, %c0_0, %c0_1] : memref<1x8x1xi32, #tpu.memory_space<vmem>>, vector<1x8x1xi32>
    %1 = vector.shape_cast %0 : vector<1x8x1xi32> to vector<8x1xi32>
    %c0_2 = arith.constant 0 : index
    %c0_3 = arith.constant 0 : index
    %c0_4 = arith.constant 0 : index
    %2 = vector.load %arg2[%c0_2, %c0_3, %c0_4] : memref<1x1x8xf32, #tpu.memory_space<vmem>>, vector<1x1x8xf32>
    %3 = vector.shape_cast %2 : vector<1x1x8xf32> to vector<1x8xf32>
    %4 = tpu.iota {dimensions = array<i32: 1>} : vector<8x128xi32>
    %5 = vector.broadcast %1 : vector<8x1xi32> to vector<8x128xi32>
    %6 = arith.cmpi eq, %4, %5 : vector<8x128xi32>
    %cst = arith.constant 1.000000e+00 : f32
    %cst_5 = arith.constant 0.000000e+00 : f32
    %7 = vector.broadcast %cst : f32 to vector<8x128xf32>
    %8 = vector.broadcast %cst_5 : f32 to vector<8x128xf32>
    %9 = arith.select %6, %7, %8 : vector<8x128xi1>, vector<8x128xf32>
    %10 = arith.truncf %9 : vector<8x128xf32> to vector<8x128xbf16>
    %c0_6 = arith.constant 0 : index
    %c0_7 = arith.constant 0 : index
    %11 = vector.load %arg18[%c0_6, %c0_7] : memref<128x32xbf16, #tpu.memory_space<vmem>>, vector<128x32xbf16>
    %cst_8 = arith.constant dense<0.000000e+00> : vector<8x32xf32>
    %12 = tpu.matmul %10, %11, %cst_8 {dimension_numbers = #tpu.dot_dimension_numbers<[1], [0], [0], [1], [0, 0, 1, 1], [], []>} : vector<8x128xbf16>, vector<128x32xbf16>, vector<8x32xf32> -> vector<8x32xf32>
    %c0_9 = arith.constant 0 : index
    %c0_10 = arith.constant 0 : index
    %13 = vector.load %arg3[%c0_9, %c0_10] : memref<8x32xf32, #tpu.memory_space<vmem>>, vector<8x32xf32>
    %14 = arith.addf %12, %13 : vector<8x32xf32>
    %15 = tpu.iota {dimensions = array<i32: 0>} : vector<8x8xi32>
    %16 = tpu.iota {dimensions = array<i32: 1>} : vector<8x8xi32>
    %17 = arith.cmpi sle, %16, %15 : vector<8x8xi32>
    %cst_11 = arith.constant 5.000000e-01 : f32
    %18 = vector.broadcast %cst_11 : f32 to vector<1x8xf32>
    %19 = arith.cmpf ogt, %3, %18 : vector<1x8xf32>
    %20 = vector.broadcast %19 : vector<1x8xi1> to vector<8x8xi1>
    %21 = arith.andi %17, %20 : vector<8x8xi1>
    %c0_12 = arith.constant 0 : index
    %c0_13 = arith.constant 0 : index
    %c0_14 = arith.constant 0 : index
    %22 = vector.load %arg4[%c0_12, %c0_13, %c0_14] : memref<2x1x32xf32, #tpu.memory_space<vmem>>, vector<1x1x32xf32>
    %23 = vector.shape_cast %22 : vector<1x1x32xf32> to vector<1x32xf32>
    %c0_15 = arith.constant 0 : index
    %c0_16 = arith.constant 0 : index
    %c0_17 = arith.constant 0 : index
    %24 = vector.load %arg5[%c0_15, %c0_16, %c0_17] : memref<2x1x32xf32, #tpu.memory_space<vmem>>, vector<1x1x32xf32>
    %25 = vector.shape_cast %24 : vector<1x1x32xf32> to vector<1x32xf32>
    %cst_18 = arith.constant dense<0.000000e+00> : vector<8xf32>
    %26 = vector.multi_reduction <add>, %14, %cst_18 [1] : vector<8x32xf32> to vector<8xf32>
    %27 = vector.shape_cast %26 : vector<8xf32> to vector<8x1xf32>
    %cst_19 = arith.constant 3.200000e+01 : f32
    %28 = vector.broadcast %cst_19 : f32 to vector<8x1xf32>
    %29 = arith.divf %27, %28 : vector<8x1xf32>
    %30 = vector.broadcast %29 : vector<8x1xf32> to vector<8x32xf32>
    %31 = arith.subf %14, %30 : vector<8x32xf32>
    %32 = arith.mulf %31, %31 : vector<8x32xf32>
    %cst_20 = arith.constant dense<0.000000e+00> : vector<8xf32>
    %33 = vector.multi_reduction <add>, %32, %cst_20 [1] : vector<8x32xf32> to vector<8xf32>
    %34 = vector.shape_cast %33 : vector<8xf32> to vector<8x1xf32>
    %cst_21 = arith.constant 3.200000e+01 : f32
    %35 = vector.broadcast %cst_21 : f32 to vector<8x1xf32>
    %36 = arith.divf %34, %35 : vector<8x1xf32>
    %cst_22 = arith.constant 9.99999974E-6 : f32
    %37 = vector.broadcast %cst_22 : f32 to vector<8x1xf32>
    %38 = arith.addf %36, %37 : vector<8x1xf32>
    %39 = math.rsqrt %38 : vector<8x1xf32>
    %40 = vector.broadcast %39 : vector<8x1xf32> to vector<8x32xf32>
    %41 = arith.mulf %31, %40 : vector<8x32xf32>
    %42 = vector.broadcast %23 : vector<1x32xf32> to vector<8x32xf32>
    %43 = arith.mulf %41, %42 : vector<8x32xf32>
    %44 = vector.broadcast %25 : vector<1x32xf32> to vector<8x32xf32>
    %45 = arith.addf %43, %44 : vector<8x32xf32>
    %46 = arith.truncf %45 : vector<8x32xf32> to vector<8x32xbf16>
    %c0_23 = arith.constant 0 : index
    %c0_24 = arith.constant 0 : index
    %c0_25 = arith.constant 0 : index
    %47 = vector.load %arg6[%c0_23, %c0_24, %c0_25] : memref<2x32x96xbf16, #tpu.memory_space<vmem>>, vector<1x32x96xbf16>
    %48 = vector.shape_cast %47 : vector<1x32x96xbf16> to vector<32x96xbf16>
    %cst_26 = arith.constant dense<0.000000e+00> : vector<8x96xf32>
    %49 = tpu.matmul %46, %48, %cst_26 {dimension_numbers = #tpu.dot_dimension_numbers<[1], [0], [0], [1], [0, 0, 1, 1], [], []>} : vector<8x32xbf16>, vector<32x96xbf16>, vector<8x96xf32> -> vector<8x96xf32>
    %c0_27 = arith.constant 0 : index
    %c0_28 = arith.constant 0 : index
    %c0_29 = arith.constant 0 : index
    %50 = vector.load %arg7[%c0_27, %c0_28, %c0_29] : memref<2x1x96xf32, #tpu.memory_space<vmem>>, vector<1x1x96xf32>
    %51 = vector.shape_cast %50 : vector<1x1x96xf32> to vector<1x96xf32>
    %52 = vector.broadcast %51 : vector<1x96xf32> to vector<8x96xf32>
    %53 = arith.addf %49, %52 : vector<8x96xf32>
    %54 = vector.extract_strided_slice %53 {offsets = [0, 0], sizes = [8, 8], strides = [1, 1]} : vector<8x96xf32> to vector<8x8xf32>
    %55 = vector.extract_strided_slice %53 {offsets = [0, 32], sizes = [8, 8], strides = [1, 1]} : vector<8x96xf32> to vector<8x8xf32>
    %56 = vector.extract_strided_slice %53 {offsets = [0, 64], sizes = [8, 8], strides = [1, 1]} : vector<8x96xf32> to vector<8x8xf32>
    %57 = arith.truncf %54 : vector<8x8xf32> to vector<8x8xbf16>
    %58 = arith.truncf %55 : vector<8x8xf32> to vector<8x8xbf16>
    %cst_30 = arith.constant dense<0.000000e+00> : vector<8x8xf32>
    %59 = tpu.matmul %57, %58, %cst_30 {dimension_numbers = #tpu.dot_dimension_numbers<[1], [1], [0], [0], [0, 0, 1, 0], [], []>} : vector<8x8xbf16>, vector<8x8xbf16>, vector<8x8xf32> -> vector<8x8xf32>
    %cst_31 = arith.constant 0.353553385 : f32
    %60 = vector.broadcast %cst_31 : f32 to vector<8x8xf32>
    %61 = arith.mulf %59, %60 : vector<8x8xf32>
    %cst_32 = arith.constant -1.000000e+09 : f32
    %62 = vector.broadcast %cst_32 : f32 to vector<8x8xf32>
    %63 = arith.select %21, %61, %62 : vector<8x8xi1>, vector<8x8xf32>
    %cst_33 = arith.constant dense<0xFF800000> : vector<8xf32>
    %64 = vector.multi_reduction <maximumf>, %63, %cst_33 [1] : vector<8x8xf32> to vector<8xf32>
    %65 = vector.shape_cast %64 : vector<8xf32> to vector<8x1xf32>
    %66 = vector.broadcast %65 : vector<8x1xf32> to vector<8x8xf32>
    %67 = arith.subf %63, %66 : vector<8x8xf32>
    %68 = math.exp %67 : vector<8x8xf32>
    %cst_34 = arith.constant dense<0.000000e+00> : vector<8xf32>
    %69 = vector.multi_reduction <add>, %68, %cst_34 [1] : vector<8x8xf32> to vector<8xf32>
    %70 = vector.shape_cast %69 : vector<8xf32> to vector<8x1xf32>
    %71 = tpu.reciprocal %70 {approx = true} : vector<8x1xf32> -> vector<8x1xf32>
    %72 = vector.broadcast %71 : vector<8x1xf32> to vector<8x8xf32>
    %73 = arith.mulf %68, %72 : vector<8x8xf32>
    %74 = arith.truncf %73 : vector<8x8xf32> to vector<8x8xbf16>
    %75 = arith.truncf %56 : vector<8x8xf32> to vector<8x8xbf16>
    %cst_35 = arith.constant dense<0.000000e+00> : vector<8x8xf32>
    %76 = tpu.matmul %74, %75, %cst_35 {dimension_numbers = #tpu.dot_dimension_numbers<[1], [0], [0], [1], [0, 0, 1, 1], [], []>} : vector<8x8xbf16>, vector<8x8xbf16>, vector<8x8xf32> -> vector<8x8xf32>
    %77 = arith.truncf %76 : vector<8x8xf32> to vector<8x8xbf16>
    %c0_36 = arith.constant 0 : index
    %c0_37 = arith.constant 0 : index
    %c0_38 = arith.constant 0 : index
    %c0_39 = arith.constant 0 : index
    %78 = vector.load %arg8[%c0_36, %c0_37, %c0_38, %c0_39] : memref<2x4x8x32xbf16, #tpu.memory_space<vmem>>, vector<1x1x8x32xbf16>
    %79 = vector.shape_cast %78 : vector<1x1x8x32xbf16> to vector<8x32xbf16>
    %cst_40 = arith.constant dense<0.000000e+00> : vector<8x32xf32>
    %80 = tpu.matmul %77, %79, %cst_40 {dimension_numbers = #tpu.dot_dimension_numbers<[1], [0], [0], [1], [0, 0, 1, 1], [], []>} : vector<8x8xbf16>, vector<8x32xbf16>, vector<8x32xf32> -> vector<8x32xf32>
    %81 = vector.extract_strided_slice %53 {offsets = [0, 8], sizes = [8, 8], strides = [1, 1]} : vector<8x96xf32> to vector<8x8xf32>
    %82 = vector.extract_strided_slice %53 {offsets = [0, 40], sizes = [8, 8], strides = [1, 1]} : vector<8x96xf32> to vector<8x8xf32>
    %83 = vector.extract_strided_slice %53 {offsets = [0, 72], sizes = [8, 8], strides = [1, 1]} : vector<8x96xf32> to vector<8x8xf32>
    %84 = arith.truncf %81 : vector<8x8xf32> to vector<8x8xbf16>
    %85 = arith.truncf %82 : vector<8x8xf32> to vector<8x8xbf16>
    %cst_41 = arith.constant dense<0.000000e+00> : vector<8x8xf32>
    %86 = tpu.matmul %84, %85, %cst_41 {dimension_numbers = #tpu.dot_dimension_numbers<[1], [1], [0], [0], [0, 0, 1, 0], [], []>} : vector<8x8xbf16>, vector<8x8xbf16>, vector<8x8xf32> -> vector<8x8xf32>
    %cst_42 = arith.constant 0.353553385 : f32
    %87 = vector.broadcast %cst_42 : f32 to vector<8x8xf32>
    %88 = arith.mulf %86, %87 : vector<8x8xf32>
    %cst_43 = arith.constant -1.000000e+09 : f32
    %89 = vector.broadcast %cst_43 : f32 to vector<8x8xf32>
    %90 = arith.select %21, %88, %89 : vector<8x8xi1>, vector<8x8xf32>
    %cst_44 = arith.constant dense<0xFF800000> : vector<8xf32>
    %91 = vector.multi_reduction <maximumf>, %90, %cst_44 [1] : vector<8x8xf32> to vector<8xf32>
    %92 = vector.shape_cast %91 : vector<8xf32> to vector<8x1xf32>
    %93 = vector.broadcast %92 : vector<8x1xf32> to vector<8x8xf32>
    %94 = arith.subf %90, %93 : vector<8x8xf32>
    %95 = math.exp %94 : vector<8x8xf32>
    %cst_45 = arith.constant dense<0.000000e+00> : vector<8xf32>
    %96 = vector.multi_reduction <add>, %95, %cst_45 [1] : vector<8x8xf32> to vector<8xf32>
    %97 = vector.shape_cast %96 : vector<8xf32> to vector<8x1xf32>
    %98 = tpu.reciprocal %97 {approx = true} : vector<8x1xf32> -> vector<8x1xf32>
    %99 = vector.broadcast %98 : vector<8x1xf32> to vector<8x8xf32>
    %100 = arith.mulf %95, %99 : vector<8x8xf32>
    %101 = arith.truncf %100 : vector<8x8xf32> to vector<8x8xbf16>
    %102 = arith.truncf %83 : vector<8x8xf32> to vector<8x8xbf16>
    %cst_46 = arith.constant dense<0.000000e+00> : vector<8x8xf32>
    %103 = tpu.matmul %101, %102, %cst_46 {dimension_numbers = #tpu.dot_dimension_numbers<[1], [0], [0], [1], [0, 0, 1, 1], [], []>} : vector<8x8xbf16>, vector<8x8xbf16>, vector<8x8xf32> -> vector<8x8xf32>
    %104 = arith.truncf %103 : vector<8x8xf32> to vector<8x8xbf16>
    %c0_47 = arith.constant 0 : index
    %c1 = arith.constant 1 : index
    %c0_48 = arith.constant 0 : index
    %c0_49 = arith.constant 0 : index
    %105 = vector.load %arg8[%c0_47, %c1, %c0_48, %c0_49] : memref<2x4x8x32xbf16, #tpu.memory_space<vmem>>, vector<1x1x8x32xbf16>
    %106 = vector.shape_cast %105 : vector<1x1x8x32xbf16> to vector<8x32xbf16>
    %cst_50 = arith.constant dense<0.000000e+00> : vector<8x32xf32>
    %107 = tpu.matmul %104, %106, %cst_50 {dimension_numbers = #tpu.dot_dimension_numbers<[1], [0], [0], [1], [0, 0, 1, 1], [], []>} : vector<8x8xbf16>, vector<8x32xbf16>, vector<8x32xf32> -> vector<8x32xf32>
    %108 = vector.extract_strided_slice %53 {offsets = [0, 16], sizes = [8, 8], strides = [1, 1]} : vector<8x96xf32> to vector<8x8xf32>
    %109 = vector.extract_strided_slice %53 {offsets = [0, 48], sizes = [8, 8], strides = [1, 1]} : vector<8x96xf32> to vector<8x8xf32>
    %110 = vector.extract_strided_slice %53 {offsets = [0, 80], sizes = [8, 8], strides = [1, 1]} : vector<8x96xf32> to vector<8x8xf32>
    %111 = arith.truncf %108 : vector<8x8xf32> to vector<8x8xbf16>
    %112 = arith.truncf %109 : vector<8x8xf32> to vector<8x8xbf16>
    %cst_51 = arith.constant dense<0.000000e+00> : vector<8x8xf32>
    %113 = tpu.matmul %111, %112, %cst_51 {dimension_numbers = #tpu.dot_dimension_numbers<[1], [1], [0], [0], [0, 0, 1, 0], [], []>} : vector<8x8xbf16>, vector<8x8xbf16>, vector<8x8xf32> -> vector<8x8xf32>
    %cst_52 = arith.constant 0.353553385 : f32
    %114 = vector.broadcast %cst_52 : f32 to vector<8x8xf32>
    %115 = arith.mulf %113, %114 : vector<8x8xf32>
    %cst_53 = arith.constant -1.000000e+09 : f32
    %116 = vector.broadcast %cst_53 : f32 to vector<8x8xf32>
    %117 = arith.select %21, %115, %116 : vector<8x8xi1>, vector<8x8xf32>
    %cst_54 = arith.constant dense<0xFF800000> : vector<8xf32>
    %118 = vector.multi_reduction <maximumf>, %117, %cst_54 [1] : vector<8x8xf32> to vector<8xf32>
    %119 = vector.shape_cast %118 : vector<8xf32> to vector<8x1xf32>
    %120 = vector.broadcast %119 : vector<8x1xf32> to vector<8x8xf32>
    %121 = arith.subf %117, %120 : vector<8x8xf32>
    %122 = math.exp %121 : vector<8x8xf32>
    %cst_55 = arith.constant dense<0.000000e+00> : vector<8xf32>
    %123 = vector.multi_reduction <add>, %122, %cst_55 [1] : vector<8x8xf32> to vector<8xf32>
    %124 = vector.shape_cast %123 : vector<8xf32> to vector<8x1xf32>
    %125 = tpu.reciprocal %124 {approx = true} : vector<8x1xf32> -> vector<8x1xf32>
    %126 = vector.broadcast %125 : vector<8x1xf32> to vector<8x8xf32>
    %127 = arith.mulf %122, %126 : vector<8x8xf32>
    %128 = arith.truncf %127 : vector<8x8xf32> to vector<8x8xbf16>
    %129 = arith.truncf %110 : vector<8x8xf32> to vector<8x8xbf16>
    %cst_56 = arith.constant dense<0.000000e+00> : vector<8x8xf32>
    %130 = tpu.matmul %128, %129, %cst_56 {dimension_numbers = #tpu.dot_dimension_numbers<[1], [0], [0], [1], [0, 0, 1, 1], [], []>} : vector<8x8xbf16>, vector<8x8xbf16>, vector<8x8xf32> -> vector<8x8xf32>
    %131 = arith.truncf %130 : vector<8x8xf32> to vector<8x8xbf16>
    %c0_57 = arith.constant 0 : index
    %c2 = arith.constant 2 : index
    %c0_58 = arith.constant 0 : index
    %c0_59 = arith.constant 0 : index
    %132 = vector.load %arg8[%c0_57, %c2, %c0_58, %c0_59] : memref<2x4x8x32xbf16, #tpu.memory_space<vmem>>, vector<1x1x8x32xbf16>
    %133 = vector.shape_cast %132 : vector<1x1x8x32xbf16> to vector<8x32xbf16>
    %cst_60 = arith.constant dense<0.000000e+00> : vector<8x32xf32>
    %134 = tpu.matmul %131, %133, %cst_60 {dimension_numbers = #tpu.dot_dimension_numbers<[1], [0], [0], [1], [0, 0, 1, 1], [], []>} : vector<8x8xbf16>, vector<8x32xbf16>, vector<8x32xf32> -> vector<8x32xf32>
    %135 = vector.extract_strided_slice %53 {offsets = [0, 24], sizes = [8, 8], strides = [1, 1]} : vector<8x96xf32> to vector<8x8xf32>
    %136 = vector.extract_strided_slice %53 {offsets = [0, 56], sizes = [8, 8], strides = [1, 1]} : vector<8x96xf32> to vector<8x8xf32>
    %137 = vector.extract_strided_slice %53 {offsets = [0, 88], sizes = [8, 8], strides = [1, 1]} : vector<8x96xf32> to vector<8x8xf32>
    %138 = arith.truncf %135 : vector<8x8xf32> to vector<8x8xbf16>
    %139 = arith.truncf %136 : vector<8x8xf32> to vector<8x8xbf16>
    %cst_61 = arith.constant dense<0.000000e+00> : vector<8x8xf32>
    %140 = tpu.matmul %138, %139, %cst_61 {dimension_numbers = #tpu.dot_dimension_numbers<[1], [1], [0], [0], [0, 0, 1, 0], [], []>} : vector<8x8xbf16>, vector<8x8xbf16>, vector<8x8xf32> -> vector<8x8xf32>
    %cst_62 = arith.constant 0.353553385 : f32
    %141 = vector.broadcast %cst_62 : f32 to vector<8x8xf32>
    %142 = arith.mulf %140, %141 : vector<8x8xf32>
    %cst_63 = arith.constant -1.000000e+09 : f32
    %143 = vector.broadcast %cst_63 : f32 to vector<8x8xf32>
    %144 = arith.select %21, %142, %143 : vector<8x8xi1>, vector<8x8xf32>
    %cst_64 = arith.constant dense<0xFF800000> : vector<8xf32>
    %145 = vector.multi_reduction <maximumf>, %144, %cst_64 [1] : vector<8x8xf32> to vector<8xf32>
    %146 = vector.shape_cast %145 : vector<8xf32> to vector<8x1xf32>
    %147 = vector.broadcast %146 : vector<8x1xf32> to vector<8x8xf32>
    %148 = arith.subf %144, %147 : vector<8x8xf32>
    %149 = math.exp %148 : vector<8x8xf32>
    %cst_65 = arith.constant dense<0.000000e+00> : vector<8xf32>
    %150 = vector.multi_reduction <add>, %149, %cst_65 [1] : vector<8x8xf32> to vector<8xf32>
    %151 = vector.shape_cast %150 : vector<8xf32> to vector<8x1xf32>
    %152 = tpu.reciprocal %151 {approx = true} : vector<8x1xf32> -> vector<8x1xf32>
    %153 = vector.broadcast %152 : vector<8x1xf32> to vector<8x8xf32>
    %154 = arith.mulf %149, %153 : vector<8x8xf32>
    %155 = arith.truncf %154 : vector<8x8xf32> to vector<8x8xbf16>
    %156 = arith.truncf %137 : vector<8x8xf32> to vector<8x8xbf16>
    %cst_66 = arith.constant dense<0.000000e+00> : vector<8x8xf32>
    %157 = tpu.matmul %155, %156, %cst_66 {dimension_numbers = #tpu.dot_dimension_numbers<[1], [0], [0], [1], [0, 0, 1, 1], [], []>} : vector<8x8xbf16>, vector<8x8xbf16>, vector<8x8xf32> -> vector<8x8xf32>
    %158 = arith.truncf %157 : vector<8x8xf32> to vector<8x8xbf16>
    %c0_67 = arith.constant 0 : index
    %c3 = arith.constant 3 : index
    %c0_68 = arith.constant 0 : index
    %c0_69 = arith.constant 0 : index
    %159 = vector.load %arg8[%c0_67, %c3, %c0_68, %c0_69] : memref<2x4x8x32xbf16, #tpu.memory_space<vmem>>, vector<1x1x8x32xbf16>
    %160 = vector.shape_cast %159 : vector<1x1x8x32xbf16> to vector<8x32xbf16>
    %cst_70 = arith.constant dense<0.000000e+00> : vector<8x32xf32>
    %161 = tpu.matmul %158, %160, %cst_70 {dimension_numbers = #tpu.dot_dimension_numbers<[1], [0], [0], [1], [0, 0, 1, 1], [], []>} : vector<8x8xbf16>, vector<8x32xbf16>, vector<8x32xf32> -> vector<8x32xf32>
    %cst_71 = arith.constant 0.000000e+00 : f32
    %162 = vector.broadcast %cst_71 : f32 to vector<8x32xf32>
    %163 = arith.addf %162, %80 : vector<8x32xf32>
    %164 = arith.addf %163, %107 : vector<8x32xf32>
    %165 = arith.addf %164, %134 : vector<8x32xf32>
    %166 = arith.addf %165, %161 : vector<8x32xf32>
    %167 = arith.addf %14, %166 : vector<8x32xf32>
    %c0_72 = arith.constant 0 : index
    %c0_73 = arith.constant 0 : index
    %c0_74 = arith.constant 0 : index
    %168 = vector.load %arg9[%c0_72, %c0_73, %c0_74] : memref<2x1x32xf32, #tpu.memory_space<vmem>>, vector<1x1x32xf32>
    %169 = vector.shape_cast %168 : vector<1x1x32xf32> to vector<1x32xf32>
    %170 = vector.broadcast %169 : vector<1x32xf32> to vector<8x32xf32>
    %171 = arith.addf %167, %170 : vector<8x32xf32>
    %c0_75 = arith.constant 0 : index
    %c0_76 = arith.constant 0 : index
    %c0_77 = arith.constant 0 : index
    %172 = vector.load %arg10[%c0_75, %c0_76, %c0_77] : memref<2x1x32xf32, #tpu.memory_space<vmem>>, vector<1x1x32xf32>
    %173 = vector.shape_cast %172 : vector<1x1x32xf32> to vector<1x32xf32>
    %c0_78 = arith.constant 0 : index
    %c0_79 = arith.constant 0 : index
    %c0_80 = arith.constant 0 : index
    %174 = vector.load %arg11[%c0_78, %c0_79, %c0_80] : memref<2x1x32xf32, #tpu.memory_space<vmem>>, vector<1x1x32xf32>
    %175 = vector.shape_cast %174 : vector<1x1x32xf32> to vector<1x32xf32>
    %cst_81 = arith.constant dense<0.000000e+00> : vector<8xf32>
    %176 = vector.multi_reduction <add>, %171, %cst_81 [1] : vector<8x32xf32> to vector<8xf32>
    %177 = vector.shape_cast %176 : vector<8xf32> to vector<8x1xf32>
    %cst_82 = arith.constant 3.200000e+01 : f32
    %178 = vector.broadcast %cst_82 : f32 to vector<8x1xf32>
    %179 = arith.divf %177, %178 : vector<8x1xf32>
    %180 = vector.broadcast %179 : vector<8x1xf32> to vector<8x32xf32>
    %181 = arith.subf %171, %180 : vector<8x32xf32>
    %182 = arith.mulf %181, %181 : vector<8x32xf32>
    %cst_83 = arith.constant dense<0.000000e+00> : vector<8xf32>
    %183 = vector.multi_reduction <add>, %182, %cst_83 [1] : vector<8x32xf32> to vector<8xf32>
    %184 = vector.shape_cast %183 : vector<8xf32> to vector<8x1xf32>
    %cst_84 = arith.constant 3.200000e+01 : f32
    %185 = vector.broadcast %cst_84 : f32 to vector<8x1xf32>
    %186 = arith.divf %184, %185 : vector<8x1xf32>
    %cst_85 = arith.constant 9.99999974E-6 : f32
    %187 = vector.broadcast %cst_85 : f32 to vector<8x1xf32>
    %188 = arith.addf %186, %187 : vector<8x1xf32>
    %189 = math.rsqrt %188 : vector<8x1xf32>
    %190 = vector.broadcast %189 : vector<8x1xf32> to vector<8x32xf32>
    %191 = arith.mulf %181, %190 : vector<8x32xf32>
    %192 = vector.broadcast %173 : vector<1x32xf32> to vector<8x32xf32>
    %193 = arith.mulf %191, %192 : vector<8x32xf32>
    %194 = vector.broadcast %175 : vector<1x32xf32> to vector<8x32xf32>
    %195 = arith.addf %193, %194 : vector<8x32xf32>
    %196 = arith.truncf %195 : vector<8x32xf32> to vector<8x32xbf16>
    %c0_86 = arith.constant 0 : index
    %c0_87 = arith.constant 0 : index
    %c0_88 = arith.constant 0 : index
    %197 = vector.load %arg12[%c0_86, %c0_87, %c0_88] : memref<2x32x128xbf16, #tpu.memory_space<vmem>>, vector<1x32x128xbf16>
    %198 = vector.shape_cast %197 : vector<1x32x128xbf16> to vector<32x128xbf16>
    %cst_89 = arith.constant dense<0.000000e+00> : vector<8x128xf32>
    %199 = tpu.matmul %196, %198, %cst_89 {dimension_numbers = #tpu.dot_dimension_numbers<[1], [0], [0], [1], [0, 0, 1, 1], [], []>} : vector<8x32xbf16>, vector<32x128xbf16>, vector<8x128xf32> -> vector<8x128xf32>
    %c0_90 = arith.constant 0 : index
    %c0_91 = arith.constant 0 : index
    %c0_92 = arith.constant 0 : index
    %200 = vector.load %arg13[%c0_90, %c0_91, %c0_92] : memref<2x1x128xf32, #tpu.memory_space<vmem>>, vector<1x1x128xf32>
    %201 = vector.shape_cast %200 : vector<1x1x128xf32> to vector<1x128xf32>
    %202 = vector.broadcast %201 : vector<1x128xf32> to vector<8x128xf32>
    %203 = arith.addf %199, %202 : vector<8x128xf32>
    %cst_93 = arith.constant 5.000000e-01 : f32
    %204 = vector.broadcast %cst_93 : f32 to vector<8x128xf32>
    %205 = arith.mulf %204, %203 : vector<8x128xf32>
    %cst_94 = arith.constant 4.471500e-02 : f32
    %206 = vector.broadcast %cst_94 : f32 to vector<8x128xf32>
    %207 = arith.mulf %206, %203 : vector<8x128xf32>
    %208 = arith.mulf %207, %203 : vector<8x128xf32>
    %209 = arith.mulf %208, %203 : vector<8x128xf32>
    %210 = arith.addf %203, %209 : vector<8x128xf32>
    %cst_95 = arith.constant 0.797884583 : f32
    %211 = vector.broadcast %cst_95 : f32 to vector<8x128xf32>
    %212 = arith.mulf %211, %210 : vector<8x128xf32>
    %213 = math.tanh %212 : vector<8x128xf32>
    %cst_96 = arith.constant 1.000000e+00 : f32
    %214 = vector.broadcast %cst_96 : f32 to vector<8x128xf32>
    %215 = arith.addf %214, %213 : vector<8x128xf32>
    %216 = arith.mulf %205, %215 : vector<8x128xf32>
    %217 = arith.truncf %216 : vector<8x128xf32> to vector<8x128xbf16>
    %c0_97 = arith.constant 0 : index
    %c0_98 = arith.constant 0 : index
    %c0_99 = arith.constant 0 : index
    %218 = vector.load %arg14[%c0_97, %c0_98, %c0_99] : memref<2x128x32xbf16, #tpu.memory_space<vmem>>, vector<1x128x32xbf16>
    %219 = vector.shape_cast %218 : vector<1x128x32xbf16> to vector<128x32xbf16>
    %cst_100 = arith.constant dense<0.000000e+00> : vector<8x32xf32>
    %220 = tpu.matmul %217, %219, %cst_100 {dimension_numbers = #tpu.dot_dimension_numbers<[1], [0], [0], [1], [0, 0, 1, 1], [], []>} : vector<8x128xbf16>, vector<128x32xbf16>, vector<8x32xf32> -> vector<8x32xf32>
    %c0_101 = arith.constant 0 : index
    %c0_102 = arith.constant 0 : index
    %c0_103 = arith.constant 0 : index
    %221 = vector.load %arg15[%c0_101, %c0_102, %c0_103] : memref<2x1x32xf32, #tpu.memory_space<vmem>>, vector<1x1x32xf32>
    %222 = vector.shape_cast %221 : vector<1x1x32xf32> to vector<1x32xf32>
    %223 = vector.broadcast %222 : vector<1x32xf32> to vector<8x32xf32>
    %224 = arith.addf %220, %223 : vector<8x32xf32>
    %225 = arith.addf %171, %224 : vector<8x32xf32>
    %c1_104 = arith.constant 1 : index
    %c0_105 = arith.constant 0 : index
    %c0_106 = arith.constant 0 : index
    %226 = vector.load %arg4[%c1_104, %c0_105, %c0_106] : memref<2x1x32xf32, #tpu.memory_space<vmem>>, vector<1x1x32xf32>
    %227 = vector.shape_cast %226 : vector<1x1x32xf32> to vector<1x32xf32>
    %c1_107 = arith.constant 1 : index
    %c0_108 = arith.constant 0 : index
    %c0_109 = arith.constant 0 : index
    %228 = vector.load %arg5[%c1_107, %c0_108, %c0_109] : memref<2x1x32xf32, #tpu.memory_space<vmem>>, vector<1x1x32xf32>
    %229 = vector.shape_cast %228 : vector<1x1x32xf32> to vector<1x32xf32>
    %cst_110 = arith.constant dense<0.000000e+00> : vector<8xf32>
    %230 = vector.multi_reduction <add>, %225, %cst_110 [1] : vector<8x32xf32> to vector<8xf32>
    %231 = vector.shape_cast %230 : vector<8xf32> to vector<8x1xf32>
    %cst_111 = arith.constant 3.200000e+01 : f32
    %232 = vector.broadcast %cst_111 : f32 to vector<8x1xf32>
    %233 = arith.divf %231, %232 : vector<8x1xf32>
    %234 = vector.broadcast %233 : vector<8x1xf32> to vector<8x32xf32>
    %235 = arith.subf %225, %234 : vector<8x32xf32>
    %236 = arith.mulf %235, %235 : vector<8x32xf32>
    %cst_112 = arith.constant dense<0.000000e+00> : vector<8xf32>
    %237 = vector.multi_reduction <add>, %236, %cst_112 [1] : vector<8x32xf32> to vector<8xf32>
    %238 = vector.shape_cast %237 : vector<8xf32> to vector<8x1xf32>
    %cst_113 = arith.constant 3.200000e+01 : f32
    %239 = vector.broadcast %cst_113 : f32 to vector<8x1xf32>
    %240 = arith.divf %238, %239 : vector<8x1xf32>
    %cst_114 = arith.constant 9.99999974E-6 : f32
    %241 = vector.broadcast %cst_114 : f32 to vector<8x1xf32>
    %242 = arith.addf %240, %241 : vector<8x1xf32>
    %243 = math.rsqrt %242 : vector<8x1xf32>
    %244 = vector.broadcast %243 : vector<8x1xf32> to vector<8x32xf32>
    %245 = arith.mulf %235, %244 : vector<8x32xf32>
    %246 = vector.broadcast %227 : vector<1x32xf32> to vector<8x32xf32>
    %247 = arith.mulf %245, %246 : vector<8x32xf32>
    %248 = vector.broadcast %229 : vector<1x32xf32> to vector<8x32xf32>
    %249 = arith.addf %247, %248 : vector<8x32xf32>
    %250 = arith.truncf %249 : vector<8x32xf32> to vector<8x32xbf16>
    %c1_115 = arith.constant 1 : index
    %c0_116 = arith.constant 0 : index
    %c0_117 = arith.constant 0 : index
    %251 = vector.load %arg6[%c1_115, %c0_116, %c0_117] : memref<2x32x96xbf16, #tpu.memory_space<vmem>>, vector<1x32x96xbf16>
    %252 = vector.shape_cast %251 : vector<1x32x96xbf16> to vector<32x96xbf16>
    %cst_118 = arith.constant dense<0.000000e+00> : vector<8x96xf32>
    %253 = tpu.matmul %250, %252, %cst_118 {dimension_numbers = #tpu.dot_dimension_numbers<[1], [0], [0], [1], [0, 0, 1, 1], [], []>} : vector<8x32xbf16>, vector<32x96xbf16>, vector<8x96xf32> -> vector<8x96xf32>
    %c1_119 = arith.constant 1 : index
    %c0_120 = arith.constant 0 : index
    %c0_121 = arith.constant 0 : index
    %254 = vector.load %arg7[%c1_119, %c0_120, %c0_121] : memref<2x1x96xf32, #tpu.memory_space<vmem>>, vector<1x1x96xf32>
    %255 = vector.shape_cast %254 : vector<1x1x96xf32> to vector<1x96xf32>
    %256 = vector.broadcast %255 : vector<1x96xf32> to vector<8x96xf32>
    %257 = arith.addf %253, %256 : vector<8x96xf32>
    %258 = vector.extract_strided_slice %257 {offsets = [0, 0], sizes = [8, 8], strides = [1, 1]} : vector<8x96xf32> to vector<8x8xf32>
    %259 = vector.extract_strided_slice %257 {offsets = [0, 32], sizes = [8, 8], strides = [1, 1]} : vector<8x96xf32> to vector<8x8xf32>
    %260 = vector.extract_strided_slice %257 {offsets = [0, 64], sizes = [8, 8], strides = [1, 1]} : vector<8x96xf32> to vector<8x8xf32>
    %261 = arith.truncf %258 : vector<8x8xf32> to vector<8x8xbf16>
    %262 = arith.truncf %259 : vector<8x8xf32> to vector<8x8xbf16>
    %cst_122 = arith.constant dense<0.000000e+00> : vector<8x8xf32>
    %263 = tpu.matmul %261, %262, %cst_122 {dimension_numbers = #tpu.dot_dimension_numbers<[1], [1], [0], [0], [0, 0, 1, 0], [], []>} : vector<8x8xbf16>, vector<8x8xbf16>, vector<8x8xf32> -> vector<8x8xf32>
    %cst_123 = arith.constant 0.353553385 : f32
    %264 = vector.broadcast %cst_123 : f32 to vector<8x8xf32>
    %265 = arith.mulf %263, %264 : vector<8x8xf32>
    %cst_124 = arith.constant -1.000000e+09 : f32
    %266 = vector.broadcast %cst_124 : f32 to vector<8x8xf32>
    %267 = arith.select %21, %265, %266 : vector<8x8xi1>, vector<8x8xf32>
    %cst_125 = arith.constant dense<0xFF800000> : vector<8xf32>
    %268 = vector.multi_reduction <maximumf>, %267, %cst_125 [1] : vector<8x8xf32> to vector<8xf32>
    %269 = vector.shape_cast %268 : vector<8xf32> to vector<8x1xf32>
    %270 = vector.broadcast %269 : vector<8x1xf32> to vector<8x8xf32>
    %271 = arith.subf %267, %270 : vector<8x8xf32>
    %272 = math.exp %271 : vector<8x8xf32>
    %cst_126 = arith.constant dense<0.000000e+00> : vector<8xf32>
    %273 = vector.multi_reduction <add>, %272, %cst_126 [1] : vector<8x8xf32> to vector<8xf32>
    %274 = vector.shape_cast %273 : vector<8xf32> to vector<8x1xf32>
    %275 = tpu.reciprocal %274 {approx = true} : vector<8x1xf32> -> vector<8x1xf32>
    %276 = vector.broadcast %275 : vector<8x1xf32> to vector<8x8xf32>
    %277 = arith.mulf %272, %276 : vector<8x8xf32>
    %278 = arith.truncf %277 : vector<8x8xf32> to vector<8x8xbf16>
    %279 = arith.truncf %260 : vector<8x8xf32> to vector<8x8xbf16>
    %cst_127 = arith.constant dense<0.000000e+00> : vector<8x8xf32>
    %280 = tpu.matmul %278, %279, %cst_127 {dimension_numbers = #tpu.dot_dimension_numbers<[1], [0], [0], [1], [0, 0, 1, 1], [], []>} : vector<8x8xbf16>, vector<8x8xbf16>, vector<8x8xf32> -> vector<8x8xf32>
    %281 = arith.truncf %280 : vector<8x8xf32> to vector<8x8xbf16>
    %c1_128 = arith.constant 1 : index
    %c0_129 = arith.constant 0 : index
    %c0_130 = arith.constant 0 : index
    %c0_131 = arith.constant 0 : index
    %282 = vector.load %arg8[%c1_128, %c0_129, %c0_130, %c0_131] : memref<2x4x8x32xbf16, #tpu.memory_space<vmem>>, vector<1x1x8x32xbf16>
    %283 = vector.shape_cast %282 : vector<1x1x8x32xbf16> to vector<8x32xbf16>
    %cst_132 = arith.constant dense<0.000000e+00> : vector<8x32xf32>
    %284 = tpu.matmul %281, %283, %cst_132 {dimension_numbers = #tpu.dot_dimension_numbers<[1], [0], [0], [1], [0, 0, 1, 1], [], []>} : vector<8x8xbf16>, vector<8x32xbf16>, vector<8x32xf32> -> vector<8x32xf32>
    %285 = vector.extract_strided_slice %257 {offsets = [0, 8], sizes = [8, 8], strides = [1, 1]} : vector<8x96xf32> to vector<8x8xf32>
    %286 = vector.extract_strided_slice %257 {offsets = [0, 40], sizes = [8, 8], strides = [1, 1]} : vector<8x96xf32> to vector<8x8xf32>
    %287 = vector.extract_strided_slice %257 {offsets = [0, 72], sizes = [8, 8], strides = [1, 1]} : vector<8x96xf32> to vector<8x8xf32>
    %288 = arith.truncf %285 : vector<8x8xf32> to vector<8x8xbf16>
    %289 = arith.truncf %286 : vector<8x8xf32> to vector<8x8xbf16>
    %cst_133 = arith.constant dense<0.000000e+00> : vector<8x8xf32>
    %290 = tpu.matmul %288, %289, %cst_133 {dimension_numbers = #tpu.dot_dimension_numbers<[1], [1], [0], [0], [0, 0, 1, 0], [], []>} : vector<8x8xbf16>, vector<8x8xbf16>, vector<8x8xf32> -> vector<8x8xf32>
    %cst_134 = arith.constant 0.353553385 : f32
    %291 = vector.broadcast %cst_134 : f32 to vector<8x8xf32>
    %292 = arith.mulf %290, %291 : vector<8x8xf32>
    %cst_135 = arith.constant -1.000000e+09 : f32
    %293 = vector.broadcast %cst_135 : f32 to vector<8x8xf32>
    %294 = arith.select %21, %292, %293 : vector<8x8xi1>, vector<8x8xf32>
    %cst_136 = arith.constant dense<0xFF800000> : vector<8xf32>
    %295 = vector.multi_reduction <maximumf>, %294, %cst_136 [1] : vector<8x8xf32> to vector<8xf32>
    %296 = vector.shape_cast %295 : vector<8xf32> to vector<8x1xf32>
    %297 = vector.broadcast %296 : vector<8x1xf32> to vector<8x8xf32>
    %298 = arith.subf %294, %297 : vector<8x8xf32>
    %299 = math.exp %298 : vector<8x8xf32>
    %cst_137 = arith.constant dense<0.000000e+00> : vector<8xf32>
    %300 = vector.multi_reduction <add>, %299, %cst_137 [1] : vector<8x8xf32> to vector<8xf32>
    %301 = vector.shape_cast %300 : vector<8xf32> to vector<8x1xf32>
    %302 = tpu.reciprocal %301 {approx = true} : vector<8x1xf32> -> vector<8x1xf32>
    %303 = vector.broadcast %302 : vector<8x1xf32> to vector<8x8xf32>
    %304 = arith.mulf %299, %303 : vector<8x8xf32>
    %305 = arith.truncf %304 : vector<8x8xf32> to vector<8x8xbf16>
    %306 = arith.truncf %287 : vector<8x8xf32> to vector<8x8xbf16>
    %cst_138 = arith.constant dense<0.000000e+00> : vector<8x8xf32>
    %307 = tpu.matmul %305, %306, %cst_138 {dimension_numbers = #tpu.dot_dimension_numbers<[1], [0], [0], [1], [0, 0, 1, 1], [], []>} : vector<8x8xbf16>, vector<8x8xbf16>, vector<8x8xf32> -> vector<8x8xf32>
    %308 = arith.truncf %307 : vector<8x8xf32> to vector<8x8xbf16>
    %c1_139 = arith.constant 1 : index
    %c1_140 = arith.constant 1 : index
    %c0_141 = arith.constant 0 : index
    %c0_142 = arith.constant 0 : index
    %309 = vector.load %arg8[%c1_139, %c1_140, %c0_141, %c0_142] : memref<2x4x8x32xbf16, #tpu.memory_space<vmem>>, vector<1x1x8x32xbf16>
    %310 = vector.shape_cast %309 : vector<1x1x8x32xbf16> to vector<8x32xbf16>
    %cst_143 = arith.constant dense<0.000000e+00> : vector<8x32xf32>
    %311 = tpu.matmul %308, %310, %cst_143 {dimension_numbers = #tpu.dot_dimension_numbers<[1], [0], [0], [1], [0, 0, 1, 1], [], []>} : vector<8x8xbf16>, vector<8x32xbf16>, vector<8x32xf32> -> vector<8x32xf32>
    %312 = vector.extract_strided_slice %257 {offsets = [0, 16], sizes = [8, 8], strides = [1, 1]} : vector<8x96xf32> to vector<8x8xf32>
    %313 = vector.extract_strided_slice %257 {offsets = [0, 48], sizes = [8, 8], strides = [1, 1]} : vector<8x96xf32> to vector<8x8xf32>
    %314 = vector.extract_strided_slice %257 {offsets = [0, 80], sizes = [8, 8], strides = [1, 1]} : vector<8x96xf32> to vector<8x8xf32>
    %315 = arith.truncf %312 : vector<8x8xf32> to vector<8x8xbf16>
    %316 = arith.truncf %313 : vector<8x8xf32> to vector<8x8xbf16>
    %cst_144 = arith.constant dense<0.000000e+00> : vector<8x8xf32>
    %317 = tpu.matmul %315, %316, %cst_144 {dimension_numbers = #tpu.dot_dimension_numbers<[1], [1], [0], [0], [0, 0, 1, 0], [], []>} : vector<8x8xbf16>, vector<8x8xbf16>, vector<8x8xf32> -> vector<8x8xf32>
    %cst_145 = arith.constant 0.353553385 : f32
    %318 = vector.broadcast %cst_145 : f32 to vector<8x8xf32>
    %319 = arith.mulf %317, %318 : vector<8x8xf32>
    %cst_146 = arith.constant -1.000000e+09 : f32
    %320 = vector.broadcast %cst_146 : f32 to vector<8x8xf32>
    %321 = arith.select %21, %319, %320 : vector<8x8xi1>, vector<8x8xf32>
    %cst_147 = arith.constant dense<0xFF800000> : vector<8xf32>
    %322 = vector.multi_reduction <maximumf>, %321, %cst_147 [1] : vector<8x8xf32> to vector<8xf32>
    %323 = vector.shape_cast %322 : vector<8xf32> to vector<8x1xf32>
    %324 = vector.broadcast %323 : vector<8x1xf32> to vector<8x8xf32>
    %325 = arith.subf %321, %324 : vector<8x8xf32>
    %326 = math.exp %325 : vector<8x8xf32>
    %cst_148 = arith.constant dense<0.000000e+00> : vector<8xf32>
    %327 = vector.multi_reduction <add>, %326, %cst_148 [1] : vector<8x8xf32> to vector<8xf32>
    %328 = vector.shape_cast %327 : vector<8xf32> to vector<8x1xf32>
    %329 = tpu.reciprocal %328 {approx = true} : vector<8x1xf32> -> vector<8x1xf32>
    %330 = vector.broadcast %329 : vector<8x1xf32> to vector<8x8xf32>
    %331 = arith.mulf %326, %330 : vector<8x8xf32>
    %332 = arith.truncf %331 : vector<8x8xf32> to vector<8x8xbf16>
    %333 = arith.truncf %314 : vector<8x8xf32> to vector<8x8xbf16>
    %cst_149 = arith.constant dense<0.000000e+00> : vector<8x8xf32>
    %334 = tpu.matmul %332, %333, %cst_149 {dimension_numbers = #tpu.dot_dimension_numbers<[1], [0], [0], [1], [0, 0, 1, 1], [], []>} : vector<8x8xbf16>, vector<8x8xbf16>, vector<8x8xf32> -> vector<8x8xf32>
    %335 = arith.truncf %334 : vector<8x8xf32> to vector<8x8xbf16>
    %c1_150 = arith.constant 1 : index
    %c2_151 = arith.constant 2 : index
    %c0_152 = arith.constant 0 : index
    %c0_153 = arith.constant 0 : index
    %336 = vector.load %arg8[%c1_150, %c2_151, %c0_152, %c0_153] : memref<2x4x8x32xbf16, #tpu.memory_space<vmem>>, vector<1x1x8x32xbf16>
    %337 = vector.shape_cast %336 : vector<1x1x8x32xbf16> to vector<8x32xbf16>
    %cst_154 = arith.constant dense<0.000000e+00> : vector<8x32xf32>
    %338 = tpu.matmul %335, %337, %cst_154 {dimension_numbers = #tpu.dot_dimension_numbers<[1], [0], [0], [1], [0, 0, 1, 1], [], []>} : vector<8x8xbf16>, vector<8x32xbf16>, vector<8x32xf32> -> vector<8x32xf32>
    %339 = vector.extract_strided_slice %257 {offsets = [0, 24], sizes = [8, 8], strides = [1, 1]} : vector<8x96xf32> to vector<8x8xf32>
    %340 = vector.extract_strided_slice %257 {offsets = [0, 56], sizes = [8, 8], strides = [1, 1]} : vector<8x96xf32> to vector<8x8xf32>
    %341 = vector.extract_strided_slice %257 {offsets = [0, 88], sizes = [8, 8], strides = [1, 1]} : vector<8x96xf32> to vector<8x8xf32>
    %342 = arith.truncf %339 : vector<8x8xf32> to vector<8x8xbf16>
    %343 = arith.truncf %340 : vector<8x8xf32> to vector<8x8xbf16>
    %cst_155 = arith.constant dense<0.000000e+00> : vector<8x8xf32>
    %344 = tpu.matmul %342, %343, %cst_155 {dimension_numbers = #tpu.dot_dimension_numbers<[1], [1], [0], [0], [0, 0, 1, 0], [], []>} : vector<8x8xbf16>, vector<8x8xbf16>, vector<8x8xf32> -> vector<8x8xf32>
    %cst_156 = arith.constant 0.353553385 : f32
    %345 = vector.broadcast %cst_156 : f32 to vector<8x8xf32>
    %346 = arith.mulf %344, %345 : vector<8x8xf32>
    %cst_157 = arith.constant -1.000000e+09 : f32
    %347 = vector.broadcast %cst_157 : f32 to vector<8x8xf32>
    %348 = arith.select %21, %346, %347 : vector<8x8xi1>, vector<8x8xf32>
    %cst_158 = arith.constant dense<0xFF800000> : vector<8xf32>
    %349 = vector.multi_reduction <maximumf>, %348, %cst_158 [1] : vector<8x8xf32> to vector<8xf32>
    %350 = vector.shape_cast %349 : vector<8xf32> to vector<8x1xf32>
    %351 = vector.broadcast %350 : vector<8x1xf32> to vector<8x8xf32>
    %352 = arith.subf %348, %351 : vector<8x8xf32>
    %353 = math.exp %352 : vector<8x8xf32>
    %cst_159 = arith.constant dense<0.000000e+00> : vector<8xf32>
    %354 = vector.multi_reduction <add>, %353, %cst_159 [1] : vector<8x8xf32> to vector<8xf32>
    %355 = vector.shape_cast %354 : vector<8xf32> to vector<8x1xf32>
    %356 = tpu.reciprocal %355 {approx = true} : vector<8x1xf32> -> vector<8x1xf32>
    %357 = vector.broadcast %356 : vector<8x1xf32> to vector<8x8xf32>
    %358 = arith.mulf %353, %357 : vector<8x8xf32>
    %359 = arith.truncf %358 : vector<8x8xf32> to vector<8x8xbf16>
    %360 = arith.truncf %341 : vector<8x8xf32> to vector<8x8xbf16>
    %cst_160 = arith.constant dense<0.000000e+00> : vector<8x8xf32>
    %361 = tpu.matmul %359, %360, %cst_160 {dimension_numbers = #tpu.dot_dimension_numbers<[1], [0], [0], [1], [0, 0, 1, 1], [], []>} : vector<8x8xbf16>, vector<8x8xbf16>, vector<8x8xf32> -> vector<8x8xf32>
    %362 = arith.truncf %361 : vector<8x8xf32> to vector<8x8xbf16>
    %c1_161 = arith.constant 1 : index
    %c3_162 = arith.constant 3 : index
    %c0_163 = arith.constant 0 : index
    %c0_164 = arith.constant 0 : index
    %363 = vector.load %arg8[%c1_161, %c3_162, %c0_163, %c0_164] : memref<2x4x8x32xbf16, #tpu.memory_space<vmem>>, vector<1x1x8x32xbf16>
    %364 = vector.shape_cast %363 : vector<1x1x8x32xbf16> to vector<8x32xbf16>
    %cst_165 = arith.constant dense<0.000000e+00> : vector<8x32xf32>
    %365 = tpu.matmul %362, %364, %cst_165 {dimension_numbers = #tpu.dot_dimension_numbers<[1], [0], [0], [1], [0, 0, 1, 1], [], []>} : vector<8x8xbf16>, vector<8x32xbf16>, vector<8x32xf32> -> vector<8x32xf32>
    %cst_166 = arith.constant 0.000000e+00 : f32
    %366 = vector.broadcast %cst_166 : f32 to vector<8x32xf32>
    %367 = arith.addf %366, %284 : vector<8x32xf32>
    %368 = arith.addf %367, %311 : vector<8x32xf32>
    %369 = arith.addf %368, %338 : vector<8x32xf32>
    %370 = arith.addf %369, %365 : vector<8x32xf32>
    %371 = arith.addf %225, %370 : vector<8x32xf32>
    %c1_167 = arith.constant 1 : index
    %c0_168 = arith.constant 0 : index
    %c0_169 = arith.constant 0 : index
    %372 = vector.load %arg9[%c1_167, %c0_168, %c0_169] : memref<2x1x32xf32, #tpu.memory_space<vmem>>, vector<1x1x32xf32>
    %373 = vector.shape_cast %372 : vector<1x1x32xf32> to vector<1x32xf32>
    %374 = vector.broadcast %373 : vector<1x32xf32> to vector<8x32xf32>
    %375 = arith.addf %371, %374 : vector<8x32xf32>
    %c1_170 = arith.constant 1 : index
    %c0_171 = arith.constant 0 : index
    %c0_172 = arith.constant 0 : index
    %376 = vector.load %arg10[%c1_170, %c0_171, %c0_172] : memref<2x1x32xf32, #tpu.memory_space<vmem>>, vector<1x1x32xf32>
    %377 = vector.shape_cast %376 : vector<1x1x32xf32> to vector<1x32xf32>
    %c1_173 = arith.constant 1 : index
    %c0_174 = arith.constant 0 : index
    %c0_175 = arith.constant 0 : index
    %378 = vector.load %arg11[%c1_173, %c0_174, %c0_175] : memref<2x1x32xf32, #tpu.memory_space<vmem>>, vector<1x1x32xf32>
    %379 = vector.shape_cast %378 : vector<1x1x32xf32> to vector<1x32xf32>
    %cst_176 = arith.constant dense<0.000000e+00> : vector<8xf32>
    %380 = vector.multi_reduction <add>, %375, %cst_176 [1] : vector<8x32xf32> to vector<8xf32>
    %381 = vector.shape_cast %380 : vector<8xf32> to vector<8x1xf32>
    %cst_177 = arith.constant 3.200000e+01 : f32
    %382 = vector.broadcast %cst_177 : f32 to vector<8x1xf32>
    %383 = arith.divf %381, %382 : vector<8x1xf32>
    %384 = vector.broadcast %383 : vector<8x1xf32> to vector<8x32xf32>
    %385 = arith.subf %375, %384 : vector<8x32xf32>
    %386 = arith.mulf %385, %385 : vector<8x32xf32>
    %cst_178 = arith.constant dense<0.000000e+00> : vector<8xf32>
    %387 = vector.multi_reduction <add>, %386, %cst_178 [1] : vector<8x32xf32> to vector<8xf32>
    %388 = vector.shape_cast %387 : vector<8xf32> to vector<8x1xf32>
    %cst_179 = arith.constant 3.200000e+01 : f32
    %389 = vector.broadcast %cst_179 : f32 to vector<8x1xf32>
    %390 = arith.divf %388, %389 : vector<8x1xf32>
    %cst_180 = arith.constant 9.99999974E-6 : f32
    %391 = vector.broadcast %cst_180 : f32 to vector<8x1xf32>
    %392 = arith.addf %390, %391 : vector<8x1xf32>
    %393 = math.rsqrt %392 : vector<8x1xf32>
    %394 = vector.broadcast %393 : vector<8x1xf32> to vector<8x32xf32>
    %395 = arith.mulf %385, %394 : vector<8x32xf32>
    %396 = vector.broadcast %377 : vector<1x32xf32> to vector<8x32xf32>
    %397 = arith.mulf %395, %396 : vector<8x32xf32>
    %398 = vector.broadcast %379 : vector<1x32xf32> to vector<8x32xf32>
    %399 = arith.addf %397, %398 : vector<8x32xf32>
    %400 = arith.truncf %399 : vector<8x32xf32> to vector<8x32xbf16>
    %c1_181 = arith.constant 1 : index
    %c0_182 = arith.constant 0 : index
    %c0_183 = arith.constant 0 : index
    %401 = vector.load %arg12[%c1_181, %c0_182, %c0_183] : memref<2x32x128xbf16, #tpu.memory_space<vmem>>, vector<1x32x128xbf16>
    %402 = vector.shape_cast %401 : vector<1x32x128xbf16> to vector<32x128xbf16>
    %cst_184 = arith.constant dense<0.000000e+00> : vector<8x128xf32>
    %403 = tpu.matmul %400, %402, %cst_184 {dimension_numbers = #tpu.dot_dimension_numbers<[1], [0], [0], [1], [0, 0, 1, 1], [], []>} : vector<8x32xbf16>, vector<32x128xbf16>, vector<8x128xf32> -> vector<8x128xf32>
    %c1_185 = arith.constant 1 : index
    %c0_186 = arith.constant 0 : index
    %c0_187 = arith.constant 0 : index
    %404 = vector.load %arg13[%c1_185, %c0_186, %c0_187] : memref<2x1x128xf32, #tpu.memory_space<vmem>>, vector<1x1x128xf32>
    %405 = vector.shape_cast %404 : vector<1x1x128xf32> to vector<1x128xf32>
    %406 = vector.broadcast %405 : vector<1x128xf32> to vector<8x128xf32>
    %407 = arith.addf %403, %406 : vector<8x128xf32>
    %cst_188 = arith.constant 5.000000e-01 : f32
    %408 = vector.broadcast %cst_188 : f32 to vector<8x128xf32>
    %409 = arith.mulf %408, %407 : vector<8x128xf32>
    %cst_189 = arith.constant 4.471500e-02 : f32
    %410 = vector.broadcast %cst_189 : f32 to vector<8x128xf32>
    %411 = arith.mulf %410, %407 : vector<8x128xf32>
    %412 = arith.mulf %411, %407 : vector<8x128xf32>
    %413 = arith.mulf %412, %407 : vector<8x128xf32>
    %414 = arith.addf %407, %413 : vector<8x128xf32>
    %cst_190 = arith.constant 0.797884583 : f32
    %415 = vector.broadcast %cst_190 : f32 to vector<8x128xf32>
    %416 = arith.mulf %415, %414 : vector<8x128xf32>
    %417 = math.tanh %416 : vector<8x128xf32>
    %cst_191 = arith.constant 1.000000e+00 : f32
    %418 = vector.broadcast %cst_191 : f32 to vector<8x128xf32>
    %419 = arith.addf %418, %417 : vector<8x128xf32>
    %420 = arith.mulf %409, %419 : vector<8x128xf32>
    %421 = arith.truncf %420 : vector<8x128xf32> to vector<8x128xbf16>
    %c1_192 = arith.constant 1 : index
    %c0_193 = arith.constant 0 : index
    %c0_194 = arith.constant 0 : index
    %422 = vector.load %arg14[%c1_192, %c0_193, %c0_194] : memref<2x128x32xbf16, #tpu.memory_space<vmem>>, vector<1x128x32xbf16>
    %423 = vector.shape_cast %422 : vector<1x128x32xbf16> to vector<128x32xbf16>
    %cst_195 = arith.constant dense<0.000000e+00> : vector<8x32xf32>
    %424 = tpu.matmul %421, %423, %cst_195 {dimension_numbers = #tpu.dot_dimension_numbers<[1], [0], [0], [1], [0, 0, 1, 1], [], []>} : vector<8x128xbf16>, vector<128x32xbf16>, vector<8x32xf32> -> vector<8x32xf32>
    %c1_196 = arith.constant 1 : index
    %c0_197 = arith.constant 0 : index
    %c0_198 = arith.constant 0 : index
    %425 = vector.load %arg15[%c1_196, %c0_197, %c0_198] : memref<2x1x32xf32, #tpu.memory_space<vmem>>, vector<1x1x32xf32>
    %426 = vector.shape_cast %425 : vector<1x1x32xf32> to vector<1x32xf32>
    %427 = vector.broadcast %426 : vector<1x32xf32> to vector<8x32xf32>
    %428 = arith.addf %424, %427 : vector<8x32xf32>
    %429 = arith.addf %375, %428 : vector<8x32xf32>
    %c0_199 = arith.constant 0 : index
    %c0_200 = arith.constant 0 : index
    %430 = vector.load %arg16[%c0_199, %c0_200] : memref<1x32xf32, #tpu.memory_space<vmem>>, vector<1x32xf32>
    %c0_201 = arith.constant 0 : index
    %c0_202 = arith.constant 0 : index
    %431 = vector.load %arg17[%c0_201, %c0_202] : memref<1x32xf32, #tpu.memory_space<vmem>>, vector<1x32xf32>
    %cst_203 = arith.constant dense<0.000000e+00> : vector<8xf32>
    %432 = vector.multi_reduction <add>, %429, %cst_203 [1] : vector<8x32xf32> to vector<8xf32>
    %433 = vector.shape_cast %432 : vector<8xf32> to vector<8x1xf32>
    %cst_204 = arith.constant 3.200000e+01 : f32
    %434 = vector.broadcast %cst_204 : f32 to vector<8x1xf32>
    %435 = arith.divf %433, %434 : vector<8x1xf32>
    %436 = vector.broadcast %435 : vector<8x1xf32> to vector<8x32xf32>
    %437 = arith.subf %429, %436 : vector<8x32xf32>
    %438 = arith.mulf %437, %437 : vector<8x32xf32>
    %cst_205 = arith.constant dense<0.000000e+00> : vector<8xf32>
    %439 = vector.multi_reduction <add>, %438, %cst_205 [1] : vector<8x32xf32> to vector<8xf32>
    %440 = vector.shape_cast %439 : vector<8xf32> to vector<8x1xf32>
    %cst_206 = arith.constant 3.200000e+01 : f32
    %441 = vector.broadcast %cst_206 : f32 to vector<8x1xf32>
    %442 = arith.divf %440, %441 : vector<8x1xf32>
    %cst_207 = arith.constant 9.99999974E-6 : f32
    %443 = vector.broadcast %cst_207 : f32 to vector<8x1xf32>
    %444 = arith.addf %442, %443 : vector<8x1xf32>
    %445 = math.rsqrt %444 : vector<8x1xf32>
    %446 = vector.broadcast %445 : vector<8x1xf32> to vector<8x32xf32>
    %447 = arith.mulf %437, %446 : vector<8x32xf32>
    %448 = vector.broadcast %430 : vector<1x32xf32> to vector<8x32xf32>
    %449 = arith.mulf %447, %448 : vector<8x32xf32>
    %450 = vector.broadcast %431 : vector<1x32xf32> to vector<8x32xf32>
    %451 = arith.addf %449, %450 : vector<8x32xf32>
    %452 = arith.truncf %451 : vector<8x32xf32> to vector<8x32xbf16>
    %c0_208 = arith.constant 0 : index
    %c0_209 = arith.constant 0 : index
    %453 = vector.load %arg18[%c0_208, %c0_209] : memref<128x32xbf16, #tpu.memory_space<vmem>>, vector<128x32xbf16>
    %cst_210 = arith.constant dense<0.000000e+00> : vector<8x128xf32>
    %454 = tpu.matmul %452, %453, %cst_210 {dimension_numbers = #tpu.dot_dimension_numbers<[1], [1], [0], [0], [0, 0, 1, 0], [], []>} : vector<8x32xbf16>, vector<128x32xbf16>, vector<8x128xf32> -> vector<8x128xf32>
    %c0_211 = arith.constant 0 : index
    %c0_212 = arith.constant 0 : index
    %c0_213 = arith.constant 0 : index
    %455 = vector.load %arg19[%c0_211, %c0_212, %c0_213] : memref<1x8x128xf32, #tpu.memory_space<vmem>>, vector<1x8x128xf32>
    %456 = vector.shape_cast %455 : vector<1x8x128xf32> to vector<8x128xf32>
    %457 = vector.shape_cast %454 : vector<8x128xf32> to vector<1x8x128xf32>
    tpu.vector_store %arg19[%c0_211, %c0_212, %c0_213], %457 {strides = array<i32>} : memref<1x8x128xf32, #tpu.memory_space<vmem>>, vector<1x8x128xf32>,
    return
  }
  func.func @transform_0(%arg0: i32) -> (i32, i32, i32) {
    %c0_i32 = arith.constant 0 : i32
    %c0_i32_0 = arith.constant 0 : i32
    %c0_i32_1 = arith.constant 0 : i32
    return %arg0, %c0_i32, %c0_i32_0 : i32, i32, i32
  }
  func.func @transform_1(%arg0: i32) -> (i32, i32, i32) {
    %c0_i32 = arith.constant 0 : i32
    %c0_i32_0 = arith.constant 0 : i32
    %c0_i32_1 = arith.constant 0 : i32
    return %arg0, %c0_i32, %c0_i32_0 : i32, i32, i32
  }
  func.func @transform_2(%arg0: i32) -> (i32, i32) {
    %c0_i32 = arith.constant 0 : i32
    %c0_i32_0 = arith.constant 0 : i32
    %c0_i32_1 = arith.constant 0 : i32
    return %c0_i32, %c0_i32_0 : i32, i32
  }
  func.func @transform_3(%arg0: i32) -> (i32, i32, i32) {
    %c0_i32 = arith.constant 0 : i32
    %c0_i32_0 = arith.constant 0 : i32
    %c0_i32_1 = arith.constant 0 : i32
    %c0_i32_2 = arith.constant 0 : i32
    return %c0_i32, %c0_i32_0, %c0_i32_1 : i32, i32, i32
  }
  func.func @transform_4(%arg0: i32) -> (i32, i32, i32) {
    %c0_i32 = arith.constant 0 : i32
    %c0_i32_0 = arith.constant 0 : i32
    %c0_i32_1 = arith.constant 0 : i32
    %c0_i32_2 = arith.constant 0 : i32
    return %c0_i32, %c0_i32_0, %c0_i32_1 : i32, i32, i32
  }
  func.func @transform_5(%arg0: i32) -> (i32, i32, i32) {
    %c0_i32 = arith.constant 0 : i32
    %c0_i32_0 = arith.constant 0 : i32
    %c0_i32_1 = arith.constant 0 : i32
    %c0_i32_2 = arith.constant 0 : i32
    return %c0_i32, %c0_i32_0, %c0_i32_1 : i32, i32, i32
  }
  func.func @transform_6(%arg0: i32) -> (i32, i32, i32) {
    %c0_i32 = arith.constant 0 : i32
    %c0_i32_0 = arith.constant 0 : i32
    %c0_i32_1 = arith.constant 0 : i32
    %c0_i32_2 = arith.constant 0 : i32
    return %c0_i32, %c0_i32_0, %c0_i32_1 : i32, i32, i32
  }
  func.func @transform_7(%arg0: i32) -> (i32, i32, i32, i32) {
    %c0_i32 = arith.constant 0 : i32
    %c0_i32_0 = arith.constant 0 : i32
    %c0_i32_1 = arith.constant 0 : i32
    %c0_i32_2 = arith.constant 0 : i32
    %c0_i32_3 = arith.constant 0 : i32
    return %c0_i32, %c0_i32_0, %c0_i32_1, %c0_i32_2 : i32, i32, i32, i32
  }
  func.func @transform_8(%arg0: i32) -> (i32, i32, i32) {
    %c0_i32 = arith.constant 0 : i32
    %c0_i32_0 = arith.constant 0 : i32
    %c0_i32_1 = arith.constant 0 : i32
    %c0_i32_2 = arith.constant 0 : i32
    return %c0_i32, %c0_i32_0, %c0_i32_1 : i32, i32, i32
  }
  func.func @transform_9(%arg0: i32) -> (i32, i32, i32) {
    %c0_i32 = arith.constant 0 : i32
    %c0_i32_0 = arith.constant 0 : i32
    %c0_i32_1 = arith.constant 0 : i32
    %c0_i32_2 = arith.constant 0 : i32
    return %c0_i32, %c0_i32_0, %c0_i32_1 : i32, i32, i32
  }
  func.func @transform_10(%arg0: i32) -> (i32, i32, i32) {
    %c0_i32 = arith.constant 0 : i32
    %c0_i32_0 = arith.constant 0 : i32
    %c0_i32_1 = arith.constant 0 : i32
    %c0_i32_2 = arith.constant 0 : i32
    return %c0_i32, %c0_i32_0, %c0_i32_1 : i32, i32, i32
  }
  func.func @transform_11(%arg0: i32) -> (i32, i32, i32) {
    %c0_i32 = arith.constant 0 : i32
    %c0_i32_0 = arith.constant 0 : i32
    %c0_i32_1 = arith.constant 0 : i32
    %c0_i32_2 = arith.constant 0 : i32
    return %c0_i32, %c0_i32_0, %c0_i32_1 : i32, i32, i32
  }
  func.func @transform_12(%arg0: i32) -> (i32, i32, i32) {
    %c0_i32 = arith.constant 0 : i32
    %c0_i32_0 = arith.constant 0 : i32
    %c0_i32_1 = arith.constant 0 : i32
    %c0_i32_2 = arith.constant 0 : i32
    return %c0_i32, %c0_i32_0, %c0_i32_1 : i32, i32, i32
  }
  func.func @transform_13(%arg0: i32) -> (i32, i32, i32) {
    %c0_i32 = arith.constant 0 : i32
    %c0_i32_0 = arith.constant 0 : i32
    %c0_i32_1 = arith.constant 0 : i32
    %c0_i32_2 = arith.constant 0 : i32
    return %c0_i32, %c0_i32_0, %c0_i32_1 : i32, i32, i32
  }
  func.func @transform_14(%arg0: i32) -> (i32, i32, i32) {
    %c0_i32 = arith.constant 0 : i32
    %c0_i32_0 = arith.constant 0 : i32
    %c0_i32_1 = arith.constant 0 : i32
    %c0_i32_2 = arith.constant 0 : i32
    return %c0_i32, %c0_i32_0, %c0_i32_1 : i32, i32, i32
  }
  func.func @transform_15(%arg0: i32) -> (i32, i32) {
    %c0_i32 = arith.constant 0 : i32
    %c0_i32_0 = arith.constant 0 : i32
    %c0_i32_1 = arith.constant 0 : i32
    return %c0_i32, %c0_i32_0 : i32, i32
  }
  func.func @transform_16(%arg0: i32) -> (i32, i32) {
    %c0_i32 = arith.constant 0 : i32
    %c0_i32_0 = arith.constant 0 : i32
    %c0_i32_1 = arith.constant 0 : i32
    return %c0_i32, %c0_i32_0 : i32, i32
  }
  func.func @transform_17(%arg0: i32) -> (i32, i32) {
    %c0_i32 = arith.constant 0 : i32
    %c0_i32_0 = arith.constant 0 : i32
    %c0_i32_1 = arith.constant 0 : i32
    return %c0_i32, %c0_i32_0 : i32, i32
  }
  func.func @transform_18(%arg0: i32) -> (i32, i32, i32) {
    %c0_i32 = arith.constant 0 : i32
    %c0_i32_0 = arith.constant 0 : i32
    %c0_i32_1 = arith.constant 0 : i32
    return %arg0, %c0_i32, %c0_i32_0 : i32, i32, i32
  }
}

</mosaic_0001>

<llo_original>
// kernel: tpu_custom_call.1
$region0: #{tpu_custom_call.1}
  #allocation0 [shape = 'u32[]', space=smem, size = 0x4, offset = 0x4, fixed_abs, tag = 'smem constant byte address 0x4 - core index']
  #allocation1 [shape = 'u32[144,128]{1,0:T(1,128)}', space=vmem, size = 0x12000, scoped, tag = 'internal scratch']
  %s0 = inlined_call_operand.vmem [shape: s32[2,8,1], index: 0, kind: input, shape index: {}]
  %s1 = inlined_call_operand.vmem [shape: f32[2,1,8], index: 1, kind: input, shape index: {}]
  %s2 = inlined_call_operand.vmem [shape: f32[8,32], index: 2, kind: input, shape index: {}]
  %s3 = inlined_call_operand.vmem [shape: f32[2,1,32], index: 3, kind: input, shape index: {}]
  %s4 = inlined_call_operand.vmem [shape: f32[2,1,32], index: 4, kind: input, shape index: {}]
  %s5 = inlined_call_operand.vmem [shape: bf16[2,32,96], index: 5, kind: input, shape index: {}]
  %s6 = inlined_call_operand.vmem [shape: f32[2,1,96], index: 6, kind: input, shape index: {}]
  %s7 = inlined_call_operand.vmem [shape: bf16[2,4,8,32], index: 7, kind: input, shape index: {}]
  %s8 = inlined_call_operand.vmem [shape: f32[2,1,32], index: 8, kind: input, shape index: {}]
  %s9 = inlined_call_operand.vmem [shape: f32[2,1,32], index: 9, kind: input, shape index: {}]
  %s10 = inlined_call_operand.vmem [shape: f32[2,1,32], index: 10, kind: input, shape index: {}]
  %s11 = inlined_call_operand.vmem [shape: bf16[2,32,128], index: 11, kind: input, shape index: {}]
  %s12 = inlined_call_operand.vmem [shape: f32[2,1,128], index: 12, kind: input, shape index: {}]
  %s13 = inlined_call_operand.vmem [shape: bf16[2,128,32], index: 13, kind: input, shape index: {}]
  %s14 = inlined_call_operand.vmem [shape: f32[2,1,32], index: 14, kind: input, shape index: {}]
  %s15 = inlined_call_operand.vmem [shape: f32[1,32], index: 15, kind: input, shape index: {}]
  %s16 = inlined_call_operand.vmem [shape: f32[1,32], index: 16, kind: input, shape index: {}]
  %s17 = inlined_call_operand.vmem [shape: bf16[128,32], index: 17, kind: input, shape index: {}]
  %s18 = inlined_call_operand.hbm [shape: f32[2,8,128], index: 18, kind: output, shape index: {}]
  %s19 = sld [smem:[#allocation0]]
  $region105: #{tpu_custom_call.1} parent=0
    _
  %s21 = ssub.s32 1, %s19
  %s22 = scalar_select 0, %s21, %s19
  $region1: #{tpu_custom_call.1} parent=0
    #allocation2 [shape = 'u8[8192]{0}', space=vmem, size = 0x2000, scoped, tag = 'output window, operand 0']
    #allocation3 [shape = 's32[2]{0}', space=sflag, size = 0x8, scoped, tag = 'scoped memory for tpu_custom_call.1']
    %23 = vsyncpa [#allocation3], 0
    %s24 = scalar_lea.sflag [#allocation3], 1
    %25 = vsyncpa %s24, 0
    loop: start=0, step=1, limit=4
    $region2: #{tpu_custom_call.1} parent=1 // loop_pre_header
      _
    $region3: #{tpu_custom_call.1} parent=1 // loop_header
      %s27 = sphi 0, %s31
      %p28 = scmp.ge.s32.totalorder %s27, 4
      %s37 = sphi 0, %s39
      %s40 = sphi 0, %s37
      %s41 = sphi 0, %s40
      %s57 = sphi 0, %s41
      %s63 = sphi 0, %s65
      %s66 = sphi 0, %s63
      %s67 = sphi 0, %s66
      %s83 = sphi 0, %s67
      %s87 = sphi 0, %s87
      %s89 = sphi 0, %s87
      %s90 = sphi 0, %s89
      %s104 = sphi 0, %s90
      %s108 = sphi 0, %s108
      %s110 = sphi 0, %s108
      %s111 = sphi 0, %s110
      %s125 = sphi 0, %s111
      %s129 = sphi 0, %s129
      %s131 = sphi 0, %s129
      %s132 = sphi 0, %s131
      %s146 = sphi 0, %s132
      %s150 = sphi 0, %s150
      %s152 = sphi 0, %s150
      %s153 = sphi 0, %s152
      %s167 = sphi 0, %s153
      %s171 = sphi 0, %s171
      %s173 = sphi 0, %s171
      %s174 = sphi 0, %s173
      %s188 = sphi 0, %s174
      %s192 = sphi 0, %s192
      %s194 = sphi 0, %s192
      %s195 = sphi 0, %s194
      %s209 = sphi 0, %s195
      %s213 = sphi 0, %s213
      %s215 = sphi 0, %s213
      %s216 = sphi 0, %s215
      %s230 = sphi 0, %s216
      %s234 = sphi 0, %s234
      %s236 = sphi 0, %s234
      %s237 = sphi 0, %s236
      %s251 = sphi 0, %s237
      %s255 = sphi 0, %s255
      %s257 = sphi 0, %s255
      %s258 = sphi 0, %s257
      %s272 = sphi 0, %s258
      %s276 = sphi 0, %s276
      %s278 = sphi 0, %s276
      %s279 = sphi 0, %s278
      %s293 = sphi 0, %s279
      %s297 = sphi 0, %s297
      %s299 = sphi 0, %s297
      %s300 = sphi 0, %s299
      %s314 = sphi 0, %s300
      %s318 = sphi 0, %s318
      %s320 = sphi 0, %s318
      %s321 = sphi 0, %s320
      %s335 = sphi 0, %s321
      %s339 = sphi 0, %s339
      %s341 = sphi 0, %s339
      %s342 = sphi 0, %s341
      %s356 = sphi 0, %s342
      %s360 = sphi 0, %s360
      %s362 = sphi 0, %s360
      %s363 = sphi 0, %s362
      %s377 = sphi 0, %s363
      %s381 = sphi 0, %s381
      %s383 = sphi 0, %s381
      %s384 = sphi 0, %s383
      %s398 = sphi 0, %s384
      %s402 = sphi 0, %s402
      %s404 = sphi 0, %s402
      %s405 = sphi 0, %s404
      %s419 = sphi 0, %s405
      %s425 = sphi 0, %s427
      %s428 = sphi 0, %s425
      %s429 = sphi 0, %s428
      %s445 = sphi 0, %s429
    $region4: #{tpu_custom_call.1} parent=1 // loop_header_branch
      %30 = sbr.rel (%p28) target = $region8
    $region5: #{tpu_custom_call.1} parent=1 // loop_body
      %s32 = ssub.s32 %s27, 1
      %s33 = ssub.s32 %s27, 2
      %s34 = sadd.s32 %s27, 1
      %s35 = ssub.s32 %s27, %s34
      %p36 = scmp.eq.s32.totalorder %s35, 0
      %s38 = sadd.s32 %s37, 1
      %s39 = scalar_select %p36, %s37, %s38
      %p42 = pneg %p36
      %p43 = scmp.eq.s32.totalorder %s27, 1
      %p44 = por %p42, %p43
      %p45 = scmp.ne.s32.totalorder %s37, %s40
      %p46 = scmp.eq.s32.totalorder %s27, 0
      %p47 = por %p45, %p46
      %p48 = scmp.ne.s32.totalorder %s37, %s40
      %p49 = scmp.eq.s32.totalorder %s32, 1
      %p50 = por %p48, %p49
      %p51 = scmp.ne.s32.totalorder %s40, %s41
      %p52 = scmp.eq.s32.totalorder %s32, 0
      %p53 = por %p51, %p52
      %p54 = scmp.ne.s32.totalorder %s40, %s41
      %p55 = scmp.eq.s32.totalorder %s33, 1
      %p56 = por %p54, %p55
      %p58 = scmp.ne.s32.totalorder %s41, %s57
      %p59 = scmp.eq.s32.totalorder %s33, 0
      %p60 = por %p58, %p59
      %s61 = ssub.s32 %s27, %s34
      %p62 = scmp.eq.s32.totalorder %s61, 0
      %s64 = sadd.s32 %s63, 1
      %s65 = scalar_select %p62, %s63, %s64
      %p68 = pneg %p62
      %p69 = scmp.eq.s32.totalorder %s27, 1
      %p70 = por %p68, %p69
      %p71 = scmp.ne.s32.totalorder %s63, %s66
      %p72 = scmp.eq.s32.totalorder %s27, 0
      %p73 = por %p71, %p72
      %p74 = scmp.ne.s32.totalorder %s63, %s66
      %p75 = scmp.eq.s32.totalorder %s32, 1
      %p76 = por %p74, %p75
      %p77 = scmp.ne.s32.totalorder %s66, %s67
      %p78 = scmp.eq.s32.totalorder %s32, 0
      %p79 = por %p77, %p78
      %p80 = scmp.ne.s32.totalorder %s66, %s67
      %p81 = scmp.eq.s32.totalorder %s33, 1
      %p82 = por %p80, %p81
      %p84 = scmp.ne.s32.totalorder %s67, %s83
      %p85 = scmp.eq.s32.totalorder %s33, 0
      %p86 = por %p84, %p85
      %s88 = sadd.s32 %s87, 1
      %p91 = scmp.eq.s32.totalorder %s27, 1
      %p92 = scmp.ne.s32.totalorder %s87, %s89
      %p93 = scmp.eq.s32.totalorder %s27, 0
      %p94 = por %p92, %p93
      %p95 = scmp.ne.s32.totalorder %s87, %s89
      %p96 = scmp.eq.s32.totalorder %s32, 1
      %p97 = por %p95, %p96
      %p98 = scmp.ne.s32.totalorder %s89, %s90
      %p99 = scmp.eq.s32.totalorder %s32, 0
      %p100 = por %p98, %p99
      %p101 = scmp.ne.s32.totalorder %s89, %s90
      %p102 = scmp.eq.s32.totalorder %s33, 1
      %p103 = por %p101, %p102
      %p105 = scmp.ne.s32.totalorder %s90, %s104
      %p106 = scmp.eq.s32.totalorder %s33, 0
      %p107 = por %p105, %p106
      %s109 = sadd.s32 %s108, 1
      %p112 = scmp.eq.s32.totalorder %s27, 1
      %p113 = scmp.ne.s32.totalorder %s108, %s110
      %p114 = scmp.eq.s32.totalorder %s27, 0
      %p115 = por %p113, %p114
      %p116 = scmp.ne.s32.totalorder %s108, %s110
      %p117 = scmp.eq.s32.totalorder %s32, 1
      %p118 = por %p116, %p117
      %p119 = scmp.ne.s32.totalorder %s110, %s111
      %p120 = scmp.eq.s32.totalorder %s32, 0
      %p121 = por %p119, %p120
      %p122 = scmp.ne.s32.totalorder %s110, %s111
      %p123 = scmp.eq.s32.totalorder %s33, 1
      %p124 = por %p122, %p123
      %p126 = scmp.ne.s32.totalorder %s111, %s125
      %p127 = scmp.eq.s32.totalorder %s33, 0
      %p128 = por %p126, %p127
      %s130 = sadd.s32 %s129, 1
      %p133 = scmp.eq.s32.totalorder %s27, 1
      %p134 = scmp.ne.s32.totalorder %s129, %s131
      %p135 = scmp.eq.s32.totalorder %s27, 0
      %p136 = por %p134, %p135
      %p137 = scmp.ne.s32.totalorder %s129, %s131
      %p138 = scmp.eq.s32.totalorder %s32, 1
      %p139 = por %p137, %p138
      %p140 = scmp.ne.s32.totalorder %s131, %s132
      %p141 = scmp.eq.s32.totalorder %s32, 0
      %p142 = por %p140, %p141
      %p143 = scmp.ne.s32.totalorder %s131, %s132
      %p144 = scmp.eq.s32.totalorder %s33, 1
      %p145 = por %p143, %p144
      %p147 = scmp.ne.s32.totalorder %s132, %s146
      %p148 = scmp.eq.s32.totalorder %s33, 0
      %p149 = por %p147, %p148
      %s151 = sadd.s32 %s150, 1
      %p154 = scmp.eq.s32.totalorder %s27, 1
      %p155 = scmp.ne.s32.totalorder %s150, %s152
      %p156 = scmp.eq.s32.totalorder %s27, 0
      %p157 = por %p155, %p156
      %p158 = scmp.ne.s32.totalorder %s150, %s152
      %p159 = scmp.eq.s32.totalorder %s32, 1
      %p160 = por %p158, %p159
      %p161 = scmp.ne.s32.totalorder %s152, %s153
      %p162 = scmp.eq.s32.totalorder %s32, 0
      %p163 = por %p161, %p162
      %p164 = scmp.ne.s32.totalorder %s152, %s153
      %p165 = scmp.eq.s32.totalorder %s33, 1
      %p166 = por %p164, %p165
      %p168 = scmp.ne.s32.totalorder %s153, %s167
      %p169 = scmp.eq.s32.totalorder %s33, 0
      %p170 = por %p168, %p169
      %s172 = sadd.s32 %s171, 1
      %p175 = scmp.eq.s32.totalorder %s27, 1
      %p176 = scmp.ne.s32.totalorder %s171, %s173
      %p177 = scmp.eq.s32.totalorder %s27, 0
      %p178 = por %p176, %p177
      %p179 = scmp.ne.s32.totalorder %s171, %s173
      %p180 = scmp.eq.s32.totalorder %s32, 1
      %p181 = por %p179, %p180
      %p182 = scmp.ne.s32.totalorder %s173, %s174
      %p183 = scmp.eq.s32.totalorder %s32, 0
      %p184 = por %p182, %p183
      %p185 = scmp.ne.s32.totalorder %s173, %s174
      %p186 = scmp.eq.s32.totalorder %s33, 1
      %p187 = por %p185, %p186
      %p189 = scmp.ne.s32.totalorder %s174, %s188
      %p190 = scmp.eq.s32.totalorder %s33, 0
      %p191 = por %p189, %p190
      %s193 = sadd.s32 %s192, 1
      %p196 = scmp.eq.s32.totalorder %s27, 1
      %p197 = scmp.ne.s32.totalorder %s192, %s194
      %p198 = scmp.eq.s32.totalorder %s27, 0
      %p199 = por %p197, %p198
      %p200 = scmp.ne.s32.totalorder %s192, %s194
      %p201 = scmp.eq.s32.totalorder %s32, 1
      %p202 = por %p200, %p201
      %p203 = scmp.ne.s32.totalorder %s194, %s195
      %p204 = scmp.eq.s32.totalorder %s32, 0
      %p205 = por %p203, %p204
      %p206 = scmp.ne.s32.totalorder %s194, %s195
      %p207 = scmp.eq.s32.totalorder %s33, 1
      %p208 = por %p206, %p207
      %p210 = scmp.ne.s32.totalorder %s195, %s209
      %p211 = scmp.eq.s32.totalorder %s33, 0
      %p212 = por %p210, %p211
      %s214 = sadd.s32 %s213, 1
      %p217 = scmp.eq.s32.totalorder %s27, 1
      %p218 = scmp.ne.s32.totalorder %s213, %s215
      %p219 = scmp.eq.s32.totalorder %s27, 0
      %p220 = por %p218, %p219
      %p221 = scmp.ne.s32.totalorder %s213, %s215
      %p222 = scmp.eq.s32.totalorder %s32, 1
      %p223 = por %p221, %p222
      %p224 = scmp.ne.s32.totalorder %s215, %s216
      %p225 = scmp.eq.s32.totalorder %s32, 0
      %p226 = por %p224, %p225
      %p227 = scmp.ne.s32.totalorder %s215, %s216
      %p228 = scmp.eq.s32.totalorder %s33, 1
      %p229 = por %p227, %p228
      %p231 = scmp.ne.s32.totalorder %s216, %s230
      %p232 = scmp.eq.s32.totalorder %s33, 0
      %p233 = por %p231, %p232
      %s235 = sadd.s32 %s234, 1
      %p238 = scmp.eq.s32.totalorder %s27, 1
      %p239 = scmp.ne.s32.totalorder %s234, %s236
      %p240 = scmp.eq.s32.totalorder %s27, 0
      %p241 = por %p239, %p240
      %p242 = scmp.ne.s32.totalorder %s234, %s236
      %p243 = scmp.eq.s32.totalorder %s32, 1
      %p244 = por %p242, %p243
      %p245 = scmp.ne.s32.totalorder %s236, %s237
      %p246 = scmp.eq.s32.totalorder %s32, 0
      %p247 = por %p245, %p246
      %p248 = scmp.ne.s32.totalorder %s236, %s237
      %p249 = scmp.eq.s32.totalorder %s33, 1
      %p250 = por %p248, %p249
      %p252 = scmp.ne.s32.totalorder %s237, %s251
      %p253 = scmp.eq.s32.totalorder %s33, 0
      %p254 = por %p252, %p253
      %s256 = sadd.s32 %s255, 1
      %p259 = scmp.eq.s32.totalorder %s27, 1
      %p260 = scmp.ne.s32.totalorder %s255, %s257
      %p261 = scmp.eq.s32.totalorder %s27, 0
      %p262 = por %p260, %p261
      %p263 = scmp.ne.s32.totalorder %s255, %s257
      %p264 = scmp.eq.s32.totalorder %s32, 1
      %p265 = por %p263, %p264
      %p266 = scmp.ne.s32.totalorder %s257, %s258
      %p267 = scmp.eq.s32.totalorder %s32, 0
      %p268 = por %p266, %p267
      %p269 = scmp.ne.s32.totalorder %s257, %s258
      %p270 = scmp.eq.s32.totalorder %s33, 1
      %p271 = por %p269, %p270
      %p273 = scmp.ne.s32.totalorder %s258, %s272
      %p274 = scmp.eq.s32.totalorder %s33, 0
      %p275 = por %p273, %p274
      %s277 = sadd.s32 %s276, 1
      %p280 = scmp.eq.s32.totalorder %s27, 1
      %p281 = scmp.ne.s32.totalorder %s276, %s278
      %p282 = scmp.eq.s32.totalorder %s27, 0
      %p283 = por %p281, %p282
      %p284 = scmp.ne.s32.totalorder %s276, %s278
      %p285 = scmp.eq.s32.totalorder %s32, 1
      %p286 = por %p284, %p285
      %p287 = scmp.ne.s32.totalorder %s278, %s279
      %p288 = scmp.eq.s32.totalorder %s32, 0
      %p289 = por %p287, %p288
      %p290 = scmp.ne.s32.totalorder %s278, %s279
      %p291 = scmp.eq.s32.totalorder %s33, 1
      %p292 = por %p290, %p291
      %p294 = scmp.ne.s32.totalorder %s279, %s293
      %p295 = scmp.eq.s32.totalorder %s33, 0
      %p296 = por %p294, %p295
      %s298 = sadd.s32 %s297, 1
      %p301 = scmp.eq.s32.totalorder %s27, 1
      %p302 = scmp.ne.s32.totalorder %s297, %s299
      %p303 = scmp.eq.s32.totalorder %s27, 0
      %p304 = por %p302, %p303
      %p305 = scmp.ne.s32.totalorder %s297, %s299
      %p306 = scmp.eq.s32.totalorder %s32, 1
      %p307 = por %p305, %p306
      %p308 = scmp.ne.s32.totalorder %s299, %s300
      %p309 = scmp.eq.s32.totalorder %s32, 0
      %p310 = por %p308, %p309
      %p311 = scmp.ne.s32.totalorder %s299, %s300
      %p312 = scmp.eq.s32.totalorder %s33, 1
      %p313 = por %p311, %p312
      %p315 = scmp.ne.s32.totalorder %s300, %s314
      %p316 = scmp.eq.s32.totalorder %s33, 0
      %p317 = por %p315, %p316
      %s319 = sadd.s32 %s318, 1
      %p322 = scmp.eq.s32.totalorder %s27, 1
      %p323 = scmp.ne.s32.totalorder %s318, %s320
      %p324 = scmp.eq.s32.totalorder %s27, 0
      %p325 = por %p323, %p324
      %p326 = scmp.ne.s32.totalorder %s318, %s320
      %p327 = scmp.eq.s32.totalorder %s32, 1
      %p328 = por %p326, %p327
      %p329 = scmp.ne.s32.totalorder %s320, %s321
      %p330 = scmp.eq.s32.totalorder %s32, 0
      %p331 = por %p329, %p330
      %p332 = scmp.ne.s32.totalorder %s320, %s321
      %p333 = scmp.eq.s32.totalorder %s33, 1
      %p334 = por %p332, %p333
      %p336 = scmp.ne.s32.totalorder %s321, %s335
      %p337 = scmp.eq.s32.totalorder %s33, 0
      %p338 = por %p336, %p337
      %s340 = sadd.s32 %s339, 1
      %p343 = scmp.eq.s32.totalorder %s27, 1
      %p344 = scmp.ne.s32.totalorder %s339, %s341
      %p345 = scmp.eq.s32.totalorder %s27, 0
      %p346 = por %p344, %p345
      %p347 = scmp.ne.s32.totalorder %s339, %s341
      %p348 = scmp.eq.s32.totalorder %s32, 1
      %p349 = por %p347, %p348
      %p350 = scmp.ne.s32.totalorder %s341, %s342
      %p351 = scmp.eq.s32.totalorder %s32, 0
      %p352 = por %p350, %p351
      %p353 = scmp.ne.s32.totalorder %s341, %s342
      %p354 = scmp.eq.s32.totalorder %s33, 1
      %p355 = por %p353, %p354
      %p357 = scmp.ne.s32.totalorder %s342, %s356
      %p358 = scmp.eq.s32.totalorder %s33, 0
      %p359 = por %p357, %p358
      %s361 = sadd.s32 %s360, 1
      %p364 = scmp.eq.s32.totalorder %s27, 1
      %p365 = scmp.ne.s32.totalorder %s360, %s362
      %p366 = scmp.eq.s32.totalorder %s27, 0
      %p367 = por %p365, %p366
      %p368 = scmp.ne.s32.totalorder %s360, %s362
      %p369 = scmp.eq.s32.totalorder %s32, 1
      %p370 = por %p368, %p369
      %p371 = scmp.ne.s32.totalorder %s362, %s363
      %p372 = scmp.eq.s32.totalorder %s32, 0
      %p373 = por %p371, %p372
      %p374 = scmp.ne.s32.totalorder %s362, %s363
      %p375 = scmp.eq.s32.totalorder %s33, 1
      %p376 = por %p374, %p375
      %p378 = scmp.ne.s32.totalorder %s363, %s377
      %p379 = scmp.eq.s32.totalorder %s33, 0
      %p380 = por %p378, %p379
      %s382 = sadd.s32 %s381, 1
      %p385 = scmp.eq.s32.totalorder %s27, 1
      %p386 = scmp.ne.s32.totalorder %s381, %s383
      %p387 = scmp.eq.s32.totalorder %s27, 0
      %p388 = por %p386, %p387
      %p389 = scmp.ne.s32.totalorder %s381, %s383
      %p390 = scmp.eq.s32.totalorder %s32, 1
      %p391 = por %p389, %p390
      %p392 = scmp.ne.s32.totalorder %s383, %s384
      %p393 = scmp.eq.s32.totalorder %s32, 0
      %p394 = por %p392, %p393
      %p395 = scmp.ne.s32.totalorder %s383, %s384
      %p396 = scmp.eq.s32.totalorder %s33, 1
      %p397 = por %p395, %p396
      %p399 = scmp.ne.s32.totalorder %s384, %s398
      %p400 = scmp.eq.s32.totalorder %s33, 0
      %p401 = por %p399, %p400
      %s403 = sadd.s32 %s402, 1
      %p406 = scmp.eq.s32.totalorder %s27, 1
      %p407 = scmp.ne.s32.totalorder %s402, %s404
      %p408 = scmp.eq.s32.totalorder %s27, 0
      %p409 = por %p407, %p408
      %p410 = scmp.ne.s32.totalorder %s402, %s404
      %p411 = scmp.eq.s32.totalorder %s32, 1
      %p412 = por %p410, %p411
      %p413 = scmp.ne.s32.totalorder %s404, %s405
      %p414 = scmp.eq.s32.totalorder %s32, 0
      %p415 = por %p413, %p414
      %p416 = scmp.ne.s32.totalorder %s404, %s405
      %p417 = scmp.eq.s32.totalorder %s33, 1
      %p418 = por %p416, %p417
      %p420 = scmp.ne.s32.totalorder %s405, %s419
      %p421 = scmp.eq.s32.totalorder %s33, 0
      %p422 = por %p420, %p421
      %s423 = ssub.s32 %s27, %s34
      %p424 = scmp.eq.s32.totalorder %s423, 0
      %s426 = sadd.s32 %s425, 1
      %s427 = scalar_select %p424, %s425, %s426
      %p430 = pneg %p424
      %p431 = scmp.eq.s32.totalorder %s27, 1
      %p432 = por %p430, %p431
      %p433 = scmp.ne.s32.totalorder %s425, %s428
      %p434 = scmp.eq.s32.totalorder %s27, 0
      %p435 = por %p433, %p434
      %p436 = scmp.ne.s32.totalorder %s425, %s428
      %p437 = scmp.eq.s32.totalorder %s32, 1
      %p438 = por %p436, %p437
      %p439 = scmp.ne.s32.totalorder %s428, %s429
      %p440 = scmp.eq.s32.totalorder %s32, 0
      %p441 = por %p439, %p440
      %p442 = scmp.ne.s32.totalorder %s428, %s429
      %p443 = scmp.eq.s32.totalorder %s33, 1
      %p444 = por %p442, %p443
      %p446 = scmp.ne.s32.totalorder %s429, %s445
      %p447 = scmp.eq.s32.totalorder %s33, 0
      %p448 = por %p446, %p447
      %p449 = scmp.le.s32.totalorder 1, %s27
      %p450 = scmp.lt.s32.totalorder %s27, 3
      %p451 = pnand %p449, %p450
      %p452 = pneg %p451
      // Predicated region
      $region9: #{tpu_custom_call.1} parent=5 // pred_check
        _
      $region10: #{tpu_custom_call.1} parent=5 // pred_check_branch
        %454 = sbr.rel (%p451) target = $region12
      $region11: #{tpu_custom_call.1} parent=5 // pred_region
        %s455 = ssub.s32 %s27, 1
        // Predicated region
        $region13: #{tpu_custom_call.1} parent=11 // pred_check
          %p456 = pneg %p100
        $region14: #{tpu_custom_call.1} parent=11 // pred_check_branch
          %458 = sbr.rel (%p456) target = $region16
        $region15: #{tpu_custom_call.1} parent=11 // pred_region
          _
        $region16: #{tpu_custom_call.1} parent=11 // pred_fallthru
          _
        // Predicated region
        $region17: #{tpu_custom_call.1} parent=11 // pred_check
          %p459 = pneg %p121
        $region18: #{tpu_custom_call.1} parent=11 // pred_check_branch
          %461 = sbr.rel (%p459) target = $region20
        $region19: #{tpu_custom_call.1} parent=11 // pred_region
          _
        $region20: #{tpu_custom_call.1} parent=11 // pred_fallthru
          _
        // Predicated region
        $region21: #{tpu_custom_call.1} parent=11 // pred_check
          %p462 = pneg %p142
        $region22: #{tpu_custom_call.1} parent=11 // pred_check_branch
          %464 = sbr.rel (%p462) target = $region24
        $region23: #{tpu_custom_call.1} parent=11 // pred_region
          _
        $region24: #{tpu_custom_call.1} parent=11 // pred_fallthru
          _
        // Predicated region
        $region25: #{tpu_custom_call.1} parent=11 // pred_check
          %p465 = pneg %p163
        $region26: #{tpu_custom_call.1} parent=11 // pred_check_branch
          %467 = sbr.rel (%p465) target = $region28
        $region27: #{tpu_custom_call.1} parent=11 // pred_region
          _
        $region28: #{tpu_custom_call.1} parent=11 // pred_fallthru
          _
        // Predicated region
        $region29: #{tpu_custom_call.1} parent=11 // pred_check
          %p468 = pneg %p184
        $region30: #{tpu_custom_call.1} parent=11 // pred_check_branch
          %470 = sbr.rel (%p468) target = $region32
        $region31: #{tpu_custom_call.1} parent=11 // pred_region
          _
        $region32: #{tpu_custom_call.1} parent=11 // pred_fallthru
          _
        // Predicated region
        $region33: #{tpu_custom_call.1} parent=11 // pred_check
          %p471 = pneg %p205
        $region34: #{tpu_custom_call.1} parent=11 // pred_check_branch
          %473 = sbr.rel (%p471) target = $region36
        $region35: #{tpu_custom_call.1} parent=11 // pred_region
          _
        $region36: #{tpu_custom_call.1} parent=11 // pred_fallthru
          _
        // Predicated region
        $region37: #{tpu_custom_call.1} parent=11 // pred_check
          %p474 = pneg %p226
        $region38: #{tpu_custom_call.1} parent=11 // pred_check_branch
          %476 = sbr.rel (%p474) target = $region40
        $region39: #{tpu_custom_call.1} parent=11 // pred_region
          _
        $region40: #{tpu_custom_call.1} parent=11 // pred_fallthru
          _
        // Predicated region
        $region41: #{tpu_custom_call.1} parent=11 // pred_check
          %p477 = pneg %p247
        $region42: #{tpu_custom_call.1} parent=11 // pred_check_branch
          %479 = sbr.rel (%p477) target = $region44
        $region43: #{tpu_custom_call.1} parent=11 // pred_region
          _
        $region44: #{tpu_custom_call.1} parent=11 // pred_fallthru
          _
        // Predicated region
        $region45: #{tpu_custom_call.1} parent=11 // pred_check
          %p480 = pneg %p268
        $region46: #{tpu_custom_call.1} parent=11 // pred_check_branch
          %482 = sbr.rel (%p480) target = $region48
        $region47: #{tpu_custom_call.1} parent=11 // pred_region
          _
        $region48: #{tpu_custom_call.1} parent=11 // pred_fallthru
          _
        // Predicated region
        $region49: #{tpu_custom_call.1} parent=11 // pred_check
          %p483 = pneg %p289
        $region50: #{tpu_custom_call.1} parent=11 // pred_check_branch
          %485 = sbr.rel (%p483) target = $region52
        $region51: #{tpu_custom_call.1} parent=11 // pred_region
          _
        $region52: #{tpu_custom_call.1} parent=11 // pred_fallthru
          _
        // Predicated region
        $region53: #{tpu_custom_call.1} parent=11 // pred_check
          %p486 = pneg %p310
        $region54: #{tpu_custom_call.1} parent=11 // pred_check_branch
          %488 = sbr.rel (%p486) target = $region56
        $region55: #{tpu_custom_call.1} parent=11 // pred_region
          _
        $region56: #{tpu_custom_call.1} parent=11 // pred_fallthru
          _
        // Predicated region
        $region57: #{tpu_custom_call.1} parent=11 // pred_check
          %p489 = pneg %p331
        $region58: #{tpu_custom_call.1} parent=11 // pred_check_branch
          %491 = sbr.rel (%p489) target = $region60
        $region59: #{tpu_custom_call.1} parent=11 // pred_region
          _
        $region60: #{tpu_custom_call.1} parent=11 // pred_fallthru
          _
        // Predicated region
        $region61: #{tpu_custom_call.1} parent=11 // pred_check
          %p492 = pneg %p352
        $region62: #{tpu_custom_call.1} parent=11 // pred_check_branch
          %494 = sbr.rel (%p492) target = $region64
        $region63: #{tpu_custom_call.1} parent=11 // pred_region
          _
        $region64: #{tpu_custom_call.1} parent=11 // pred_fallthru
          _
        // Predicated region
        $region65: #{tpu_custom_call.1} parent=11 // pred_check
          %p495 = pneg %p373
        $region66: #{tpu_custom_call.1} parent=11 // pred_check_branch
          %497 = sbr.rel (%p495) target = $region68
        $region67: #{tpu_custom_call.1} parent=11 // pred_region
          _
        $region68: #{tpu_custom_call.1} parent=11 // pred_fallthru
          _
        // Predicated region
        $region69: #{tpu_custom_call.1} parent=11 // pred_check
          %p498 = pneg %p394
        $region70: #{tpu_custom_call.1} parent=11 // pred_check_branch
          %500 = sbr.rel (%p498) target = $region72
        $region71: #{tpu_custom_call.1} parent=11 // pred_region
          _
        $region72: #{tpu_custom_call.1} parent=11 // pred_fallthru
          _
        // Predicated region
        $region73: #{tpu_custom_call.1} parent=11 // pred_check
          %p501 = pneg %p415
        $region74: #{tpu_custom_call.1} parent=11 // pred_check_branch
          %503 = sbr.rel (%p501) target = $region76
        $region75: #{tpu_custom_call.1} parent=11 // pred_region
          _
        $region76: #{tpu_custom_call.1} parent=11 // pred_fallthru
          _
      $region12: #{tpu_custom_call.1} parent=5 // pred_fallthru
        _
      %p504 = scmp.lt.s32.totalorder %s27, 2
      // Predicated region
      $region77: #{tpu_custom_call.1} parent=5 // pred_check
        %p505 = pneg %p504
      $region78: #{tpu_custom_call.1} parent=5 // pred_check_branch
        %507 = sbr.rel (%p505) target = $region80
      $region79: #{tpu_custom_call.1} parent=5 // pred_region
        // Predicated region
        $region81: #{tpu_custom_call.1} parent=79 // pred_check
          %p508 = pneg %p47
        $region82: #{tpu_custom_call.1} parent=79 // pred_check_branch
          %510 = sbr.rel (%p508) target = $region84
        $region83: #{tpu_custom_call.1} parent=79 // pred_region
          %p511 = scmp.lt.s32.totalorder %s27, 1
          %s512 = scalar_select %p511, %s27, 1
          %s513 = smul.addr %s512, 8
          %s514 = scalar_lea.vmem %s0, %s513
        $region84: #{tpu_custom_call.1} parent=79 // pred_fallthru
          _
        // Predicated region
        $region85: #{tpu_custom_call.1} parent=79 // pred_check
          %p515 = pneg %p73
        $region86: #{tpu_custom_call.1} parent=79 // pred_check_branch
          %517 = sbr.rel (%p515) target = $region88
        $region87: #{tpu_custom_call.1} parent=79 // pred_region
          %p518 = scmp.lt.s32.totalorder %s27, 1
          %s519 = scalar_select %p518, %s27, 1
          %s520 = scalar_lea.vmem %s1, %s519
        $region88: #{tpu_custom_call.1} parent=79 // pred_fallthru
          _
      $region80: #{tpu_custom_call.1} parent=5 // pred_fallthru
        _
      %p521 = scmp.le.s32.totalorder 1, %s27
      %p522 = scmp.lt.s32.totalorder %s27, 3
      %p523 = pnand %p521, %p522
      %p524 = pneg %p523
      // Predicated region
      $region89: #{tpu_custom_call.1} parent=5 // pred_check
        _
      $region90: #{tpu_custom_call.1} parent=5 // pred_check_branch
        %526 = sbr.rel (%p523) target = $region92
      $region91: #{tpu_custom_call.1} parent=5 // pred_region
        %s527 = ssub.s32 %s27, 1
        %p528 = scmp.lt.s32.totalorder %s32, 1
        %s529 = scalar_select %p528, %s32, 1
        %s530 = smul.addr %s529, 8
        %s531 = scalar_lea.vmem %s0, %s530
        %p532 = pneg %p53
        %p533 = pneg %p50
        %p534 = scmp.lt.s32.totalorder %s32, 1
        %s535 = scalar_select %p534, %s32, 1
        %s536 = scalar_lea.vmem %s1, %s535
        %p537 = pneg %p79
        %p538 = pneg %p76
        %p539 = pneg %p100
        %p540 = pneg %p97
        %p541 = pneg %p121
        %p542 = pneg %p118
        %p543 = pneg %p142
        %p544 = pneg %p139
        %p545 = pneg %p163
        %p546 = pneg %p160
        %p547 = pneg %p184
        %p548 = pneg %p181
        %p549 = pneg %p205
        %p550 = pneg %p202
        %p551 = pneg %p226
        %p552 = pneg %p223
        %p553 = pneg %p247
        %p554 = pneg %p244
        %p555 = pneg %p268
        %p556 = pneg %p265
        %p557 = pneg %p289
        %p558 = pneg %p286
        %p559 = pneg %p310
        %p560 = pneg %p307
        %p561 = pneg %p331
        %p562 = pneg %p328
        %p563 = pneg %p352
        %p564 = pneg %p349
        %p565 = pneg %p373
        %p566 = pneg %p370
        %p567 = pneg %p394
        %p568 = pneg %p391
        %p569 = pneg %p415
        %p570 = pneg %p412
        %p571 = pneg %p441
        %p572 = pneg %p438
        %s573 = sand.u32 %s428, 1
        %s574 = scalar_lea.sflag [#allocation3], %s573
        %s575 = sand.u32 %s428, 1
        %s576 = smul.addr %s575, 8
        %s577 = scalar_lea.vmem [#allocation2], %s576
        %p578 = scmp.lt.s32.totalorder %s32, 1
        %s579 = scalar_select %p578, %s32, 1
        %s580 = smul.addr %s579, 8
        %s581 = scalar_lea.vmem %s0, %s580
        %p582 = scmp.lt.s32.totalorder %s32, 1
        %s583 = scalar_select %p582, %s32, 1
        %s584 = scalar_lea.vmem %s1, %s583
        %v586 = vld [vmem:[%s581] sm:$0xff]
        %v587 = vld [vmem:[%s584] sm:$0x1]
        %v588 = vlaneseq
        %v589 = vand.u32 %v588, 127
        %590 = vset.pattern.permute.xlu0 0
        %591 = vperm.xlu0 %590, %v586
        %v592 = vpop.permute.xlu0 %591
        %vm593 = vcmp.eq.s32.totalorder %v589, %v592
        %v594 = vsel %vm593, 1.0, 0.0
        %v595 = vpack.c.bf16 %v594, %v594
        %v596 = vld [vmem:[%s17] sm:$0xf]
        %v597 = vld [vmem:[%s17 + $0x4] sm:$0xf]
        %v598 = vld [vmem:[%s17 + $0x8] sm:$0xf]
        %v599 = vld [vmem:[%s17 + $0xc] sm:$0xf]
        %v600 = vld [vmem:[%s17 + $0x10] sm:$0xf]
        %v601 = vld [vmem:[%s17 + $0x14] sm:$0xf]
        %v602 = vld [vmem:[%s17 + $0x18] sm:$0xf]
        %v603 = vld [vmem:[%s17 + $0x1c] sm:$0xf]
        %v604 = vld [vmem:[%s17 + $0x20] sm:$0xf]
        %v605 = vld [vmem:[%s17 + $0x24] sm:$0xf]
        %v606 = vld [vmem:[%s17 + $0x28] sm:$0xf]
        %v607 = vld [vmem:[%s17 + $0x2c] sm:$0xf]
        %v608 = vld [vmem:[%s17 + $0x30] sm:$0xf]
        %v609 = vld [vmem:[%s17 + $0x34] sm:$0xf]
        %v610 = vld [vmem:[%s17 + $0x38] sm:$0xf]
        %v611 = vld [vmem:[%s17 + $0x3c] sm:$0xf]
        %v612 = vld [vmem:[%s2] sm:$0xff]
        %v629 = vunpack.c.l.b16 %v596
        %v630 = vunpack.c.l.b16 %v597
        %v631 = vunpack.c.l.b16 %v598
        %v632 = vunpack.c.l.b16 %v599
        %v633 = vunpack.c.l.b16 %v600
        %v634 = vunpack.c.l.b16 %v601
        %v635 = vunpack.c.l.b16 %v602
        %v636 = vunpack.c.l.b16 %v603
        %v637 = vunpack.c.l.b16 %v604
        %v638 = vunpack.c.l.b16 %v605
        %v639 = vunpack.c.l.b16 %v606
        %v640 = vunpack.c.l.b16 %v607
        %v641 = vunpack.c.l.b16 %v608
        %v642 = vunpack.c.l.b16 %v609
        %v643 = vunpack.c.l.b16 %v610
        %v644 = vunpack.c.l.b16 %v611
        %v645 = vpack.c.b16 %v630, %v629
        %v646 = vpack.c.b16 %v632, %v631
        %v647 = vpack.c.b16 %v634, %v633
        %v648 = vpack.c.b16 %v636, %v635
        %v649 = vpack.c.b16 %v638, %v637
        %v650 = vpack.c.b16 %v640, %v639
        %v651 = vpack.c.b16 %v642, %v641
        %v652 = vpack.c.b16 %v644, %v643
        %661 = vmatprep.subr.bf16.mxu0 0
        %662 = vmatpush1.bf16.msra.mxu0 %v645
        %663 = vmatprep.subr.bf16.mxu0 0
        %664 = vmatpush1.bf16.msra.mxu0 %v646
        %665 = vmatprep.subr.bf16.mxu0 0
        %666 = vmatpush1.bf16.msra.mxu0 %v647
        %667 = vmatprep.subr.bf16.mxu0 0
        %668 = vmatpush1.bf16.msra.mxu0 %v648
        %669 = vmatprep.subr.bf16.mxu0 0
        %670 = vmatpush1.bf16.msra.mxu0 %v649
        %671 = vmatprep.subr.bf16.mxu0 0
        %672 = vmatpush1.bf16.msra.mxu0 %v650
        %673 = vmatprep.subr.bf16.mxu0 0
        %674 = vmatpush1.bf16.msra.mxu0 %v651
        %675 = vmatprep.subr.bf16.mxu0 0
        %676 = vmatpush1.bf16.msra.mxu0 %v652
        %677 = vmatprep.subr.bf16.mxu0 0
        %678 = vmatpush1.bf16.msra.mxu0 0
        %679 = vmatprep.subr.bf16.mxu0 0
        %680 = vmatpush1.bf16.msra.mxu0 0
        %681 = vmatprep.subr.bf16.mxu0 0
        %682 = vmatpush1.bf16.msra.mxu0 0
        %683 = vmatprep.subr.bf16.mxu0 0
        %684 = vmatpush1.bf16.msra.mxu0 0
        %685 = vmatprep.subr.bf16.mxu0 0
        %686 = vmatpush1.bf16.msra.mxu0 0
        %687 = vmatprep.subr.bf16.mxu0 0
        %688 = vmatpush1.bf16.msra.mxu0 0
        %689 = vmatprep.subr.bf16.mxu0 0
        %690 = vmatpush1.bf16.msra.mxu0 0
        %691 = vmatprep.subr.bf16.mxu0 0
        %692 = vmatpush1.bf16.msra.mxu0 0
        %693 = vmatprep.mubr.bf16.mxu0 0
        %694 = vmatmul.mubr.bf16.gmra.mrb[0].mxu0 %v595
        %v695 = vpop.f32.mrb[0].mxu0
        %v696 = vadd.f32 %v612, %v695
        %v697 = vpop.f32.mrb[0].mxu0
        %v698 = vpop.f32.mrb[0].mxu0
        %v699 = vpop.f32.mrb[0].mxu0
        %700 = vdwg.mxu0
        %v701 = vlaneseq
        %v702 = vshrl.u32 %v701, 7
        %vm703 = vcmp.le.s32.totalorder %v589, %v702
        %vm704 = vcmp.gt.f32.partialorder %v587, 0.5
        %v705 = vsel %vm704, 1, 0
        %v706 = vlaneseq
        %v707 = vshrl.u32 %v706, 7
        %v708 = vsub.s32 0, %v707
        %v709 = vrot.slane %v705, %v708
        %vm710 = vcmp.eq.s32.totalorder %v709, 1
        %vm711 = vmand %vm703, %vm710
        %v712 = vld [vmem:[%s3] sm:$0x1]
        %v713 = vld [vmem:[%s4] sm:$0x1]
        %vm714 = vcmask 261120
        %v715 = vsel %vm714, %v696, 0.0
        %716 = vadd.xlane.f32.xlu0 %v715
        %v717 = vpop.xlane.xlu0 %716
        %v718 = vrcp.pop 32.0
        %v719 = vmul.f32 %v717, %v718
        %v720 = vsub.f32 %v696, %v719
        %v721 = vmul.f32 %v720, %v720
        %v722 = vsel %vm714, %v721, 0.0
        %723 = vadd.xlane.f32.xlu0 %v722
        %v724 = vpop.xlane.xlu0 %723
        %v725 = vmul.f32 %v724, %v718
        %v726 = vadd.f32 %v725, 1e-05
        %v727 = vrsqrt.pop %v726
        %v728 = vmul.f32 %v720, %v727
        %v730 = vlaneseq
        %v731 = vshrl.u32 %v730, 7
        %v732 = vsub.s32 0, %v731
        %v733 = vrot.slane %v712, %v732
        %v735 = vmul.f32 %v728, %v733
        %v737 = vlaneseq
        %v738 = vshrl.u32 %v737, 7
        %v739 = vsub.s32 0, %v738
        %v740 = vrot.slane %v713, %v739
        %v742 = vadd.f32 %v735, %v740
        %v743 = vpack.c.bf16 %v742, %v742
        %v744 = vld [vmem:[%s5] sm:$0xf]
        %v745 = vld [vmem:[%s5 + $0x4] sm:$0xf]
        %v746 = vld [vmem:[%s5 + $0x8] sm:$0xf]
        %v747 = vld [vmem:[%s5 + $0xc] sm:$0xf]
        %v748 = vld [vmem:[%s6] sm:$0x1]
        %v750 = vlaneseq
        %v751 = vshrl.u32 %v750, 7
        %v752 = vsub.s32 0, %v751
        %v753 = vrot.slane %v748, %v752
        %v759 = vunpack.c.l.b16 %v744
        %v760 = vunpack.c.l.b16 %v745
        %v761 = vunpack.c.l.b16 %v746
        %v762 = vunpack.c.l.b16 %v747
        %v763 = vpack.c.b16 %v760, %v759
        %v764 = vpack.c.b16 %v762, %v761
        %v768 = vsel %vm714, %v743, 0
        %770 = vmatprep.subr.bf16.mxu0 0
        %771 = vmatpush1.bf16.msra.mxu0 %v763
        %772 = vmatprep.subr.bf16.mxu0 0
        %773 = vmatpush1.bf16.msra.mxu0 %v764
        %774 = vmatprep.subr.bf16.mxu0 0
        %775 = vmatpush1.bf16.msra.mxu0 0
        %776 = vmatprep.subr.bf16.mxu0 0
        %777 = vmatpush1.bf16.msra.mxu0 0
        %778 = vmatprep.subr.bf16.mxu0 0
        %779 = vmatpush1.bf16.msra.mxu0 0
        %780 = vmatprep.subr.bf16.mxu0 0
        %781 = vmatpush1.bf16.msra.mxu0 0
        %782 = vmatprep.subr.bf16.mxu0 0
        %783 = vmatpush1.bf16.msra.mxu0 0
        %784 = vmatprep.subr.bf16.mxu0 0
        %785 = vmatpush1.bf16.msra.mxu0 0
        %786 = vmatprep.subr.bf16.mxu0 0
        %787 = vmatpush1.bf16.msra.mxu0 0
        %788 = vmatprep.subr.bf16.mxu0 0
        %789 = vmatpush1.bf16.msra.mxu0 0
        %790 = vmatprep.subr.bf16.mxu0 0
        %791 = vmatpush1.bf16.msra.mxu0 0
        %792 = vmatprep.subr.bf16.mxu0 0
        %793 = vmatpush1.bf16.msra.mxu0 0
        %794 = vmatprep.subr.bf16.mxu0 0
        %795 = vmatpush1.bf16.msra.mxu0 0
        %796 = vmatprep.subr.bf16.mxu0 0
        %797 = vmatpush1.bf16.msra.mxu0 0
        %798 = vmatprep.subr.bf16.mxu0 0
        %799 = vmatpush1.bf16.msra.mxu0 0
        %800 = vmatprep.subr.bf16.mxu0 0
        %801 = vmatpush1.bf16.msra.mxu0 0
        %802 = vmatprep.mubr.bf16.mxu0 0
        %803 = vmatmul.mubr.bf16.gmra.mrb[0].mxu0 %v768
        %v804 = vpop.f32.mrb[0].mxu0
        %v805 = vadd.f32 %v753, %v804
        %v806 = vpop.f32.mrb[0].mxu0
        %v807 = vpop.f32.mrb[0].mxu0
        %v808 = vpop.f32.mrb[0].mxu0
        %809 = vdwg.mxu0
        %v810 = vpack.c.bf16 %v805, %v805
        %812 = vrot.lane.b32.xlu0 %v810, 96
        %v813 = vpop.permute.xlu0 %812
        %vm814 = vcmask 64512
        %v816 = vsel %vm814, %v810, 0
        %v819 = vsel %vm814, %v813, 0
        %821 = vmatprep.subr.bf16.mxu0 0
        %822 = vmatpush1.bf16.xpose.msra.mxu0 %v819
        %823 = vmatprep.subr.bf16.mxu0 0
        %824 = vmatpush1.bf16.xpose.msra.mxu0 0
        %825 = vmatprep.subr.bf16.mxu0 0
        %826 = vmatpush1.bf16.xpose.msra.mxu0 0
        %827 = vmatprep.subr.bf16.mxu0 0
        %828 = vmatpush1.bf16.xpose.msra.mxu0 0
        %829 = vmatprep.subr.bf16.mxu0 0
        %830 = vmatpush1.bf16.xpose.msra.mxu0 0
        %831 = vmatprep.subr.bf16.mxu0 0
        %832 = vmatpush1.bf16.xpose.msra.mxu0 0
        %833 = vmatprep.subr.bf16.mxu0 0
        %834 = vmatpush1.bf16.xpose.msra.mxu0 0
        %835 = vmatprep.subr.bf16.mxu0 0
        %836 = vmatpush1.bf16.xpose.msra.mxu0 0
        %837 = vmatprep.subr.bf16.mxu0 0
        %838 = vmatpush1.bf16.xpose.msra.mxu0 0
        %839 = vmatprep.subr.bf16.mxu0 0
        %840 = vmatpush1.bf16.xpose.msra.mxu0 0
        %841 = vmatprep.subr.bf16.mxu0 0
        %842 = vmatpush1.bf16.xpose.msra.mxu0 0
        %843 = vmatprep.subr.bf16.mxu0 0
        %844 = vmatpush1.bf16.xpose.msra.mxu0 0
        %845 = vmatprep.subr.bf16.mxu0 0
        %846 = vmatpush1.bf16.xpose.msra.mxu0 0
        %847 = vmatprep.subr.bf16.mxu0 0
        %848 = vmatpush1.bf16.xpose.msra.mxu0 0
        %849 = vmatprep.subr.bf16.mxu0 0
        %850 = vmatpush1.bf16.xpose.msra.mxu0 0
        %851 = vmatprep.subr.bf16.mxu0 0
        %852 = vmatpush1.bf16.xpose.msra.mxu0 0
        %853 = vmatprep.mubr.bf16.mxu0 0
        %854 = vmatmul.mubr.bf16.gmra.mrb[0].mxu0 %v816
        %v855 = vpop.f32.mrb[0].mxu0
        %v856 = vadd.f32 0.0, %v855
        %v857 = vpop.f32.mrb[0].mxu0
        %v858 = vpop.f32.mrb[0].mxu0
        %v859 = vpop.f32.mrb[0].mxu0
        %860 = vdwg.mxu0
        %v861 = vmul.f32 %v856, 0.35355338
        %v862 = vsel %vm711, %v861, -1e+09
        %v863 = vsel %vm814, %v862, -inf
        %864 = vmax.xlane.f32.xlu0 %v863
        %v865 = vpop.xlane.xlu0 %864
        %v866 = vsub.f32 %v862, %v865
        %v867 = vmul.f32 %v866, 1.442695
        %v868 = vpow.pop %v867
        %v869 = vsel %vm814, %v868, 0.0
        %870 = vadd.xlane.f32.xlu0 %v869
        %v871 = vpop.xlane.xlu0 %870
        %v872 = vrcp.pop %v871
        %v873 = vmul.f32 %v868, %v872
        %v874 = vpack.c.bf16 %v873, %v873
        %875 = vrot.lane.b32.xlu0 %v810, 64
        %v876 = vpop.permute.xlu0 %875
        %v878 = vsel %vm814, %v874, 0
        %vm880 = vcmask 1043456
        %v882 = vsel %vm880, %v876, 0
        %884 = vmatprep.subr.bf16.mxu0 0
        %885 = vmatpush1.bf16.msra.mxu0 %v882
        %886 = vmatprep.subr.bf16.mxu0 0
        %887 = vmatpush1.bf16.msra.mxu0 0
        %888 = vmatprep.subr.bf16.mxu0 0
        %889 = vmatpush1.bf16.msra.mxu0 0
        %890 = vmatprep.subr.bf16.mxu0 0
        %891 = vmatpush1.bf16.msra.mxu0 0
        %892 = vmatprep.subr.bf16.mxu0 0
        %893 = vmatpush1.bf16.msra.mxu0 0
        %894 = vmatprep.subr.bf16.mxu0 0
        %895 = vmatpush1.bf16.msra.mxu0 0
        %896 = vmatprep.subr.bf16.mxu0 0
        %897 = vmatpush1.bf16.msra.mxu0 0
        %898 = vmatprep.subr.bf16.mxu0 0
        %899 = vmatpush1.bf16.msra.mxu0 0
        %900 = vmatprep.subr.bf16.mxu0 0
        %901 = vmatpush1.bf16.msra.mxu0 0
        %902 = vmatprep.subr.bf16.mxu0 0
        %903 = vmatpush1.bf16.msra.mxu0 0
        %904 = vmatprep.subr.bf16.mxu0 0
        %905 = vmatpush1.bf16.msra.mxu0 0
        %906 = vmatprep.subr.bf16.mxu0 0
        %907 = vmatpush1.bf16.msra.mxu0 0
        %908 = vmatprep.subr.bf16.mxu0 0
        %909 = vmatpush1.bf16.msra.mxu0 0
        %910 = vmatprep.subr.bf16.mxu0 0
        %911 = vmatpush1.bf16.msra.mxu0 0
        %912 = vmatprep.subr.bf16.mxu0 0
        %913 = vmatpush1.bf16.msra.mxu0 0
        %914 = vmatprep.subr.bf16.mxu0 0
        %915 = vmatpush1.bf16.msra.mxu0 0
        %916 = vmatprep.mubr.bf16.mxu0 0
        %917 = vmatmul.mubr.bf16.gmra.mrb[0].mxu0 %v878
        %v918 = vpop.f32.mrb[0].mxu0
        %v919 = vadd.f32 0.0, %v918
        %v920 = vpop.f32.mrb[0].mxu0
        %v921 = vpop.f32.mrb[0].mxu0
        %v922 = vpop.f32.mrb[0].mxu0
        %923 = vdwg.mxu0
        %v924 = vpack.c.bf16 %v919, %v919
        %v925 = vld [vmem:[%s7] sm:$0xf]
        %926 = vrot.lane.b32.xlu0 %v810, 120
        %v927 = vpop.permute.xlu0 %926
        %928 = vrot.lane.b32.xlu0 %v810, 88
        %v929 = vpop.permute.xlu0 %928
        %v931 = vsel %vm814, %v927, 0
        %v934 = vsel %vm814, %v929, 0
        %936 = vmatprep.subr.bf16.mxu0 0
        %937 = vmatpush1.bf16.xpose.msra.mxu0 %v934
        %938 = vmatprep.subr.bf16.mxu0 0
        %939 = vmatpush1.bf16.xpose.msra.mxu0 0
        %940 = vmatprep.subr.bf16.mxu0 0
        %941 = vmatpush1.bf16.xpose.msra.mxu0 0
        %942 = vmatprep.subr.bf16.mxu0 0
        %943 = vmatpush1.bf16.xpose.msra.mxu0 0
        %944 = vmatprep.subr.bf16.mxu0 0
        %945 = vmatpush1.bf16.xpose.msra.mxu0 0
        %946 = vmatprep.subr.bf16.mxu0 0
        %947 = vmatpush1.bf16.xpose.msra.mxu0 0
        %948 = vmatprep.subr.bf16.mxu0 0
        %949 = vmatpush1.bf16.xpose.msra.mxu0 0
        %950 = vmatprep.subr.bf16.mxu0 0
        %951 = vmatpush1.bf16.xpose.msra.mxu0 0
        %952 = vmatprep.subr.bf16.mxu0 0
        %953 = vmatpush1.bf16.xpose.msra.mxu0 0
        %954 = vmatprep.subr.bf16.mxu0 0
        %955 = vmatpush1.bf16.xpose.msra.mxu0 0
        %956 = vmatprep.subr.bf16.mxu0 0
        %957 = vmatpush1.bf16.xpose.msra.mxu0 0
        %958 = vmatprep.subr.bf16.mxu0 0
        %959 = vmatpush1.bf16.xpose.msra.mxu0 0
        %960 = vmatprep.subr.bf16.mxu0 0
        %961 = vmatpush1.bf16.xpose.msra.mxu0 0
        %962 = vmatprep.subr.bf16.mxu0 0
        %963 = vmatpush1.bf16.xpose.msra.mxu0 0
        %964 = vmatprep.subr.bf16.mxu0 0
        %965 = vmatpush1.bf16.xpose.msra.mxu0 0
        %966 = vmatprep.subr.bf16.mxu0 0
        %967 = vmatpush1.bf16.xpose.msra.mxu0 0
        %968 = vmatprep.mubr.bf16.mxu0 0
        %969 = vmatmul.mubr.bf16.gmra.mrb[0].mxu0 %v931
        %v970 = vpop.f32.mrb[0].mxu0
        %v971 = vadd.f32 0.0, %v970
        %v972 = vpop.f32.mrb[0].mxu0
        %v973 = vpop.f32.mrb[0].mxu0
        %v974 = vpop.f32.mrb[0].mxu0
        %975 = vdwg.mxu0
        %v976 = vmul.f32 %v971, 0.35355338
        %v977 = vsel %vm711, %v976, -1e+09
        %v978 = vsel %vm814, %v977, -inf
        %979 = vmax.xlane.f32.xlu0 %v978
        %v980 = vpop.xlane.xlu0 %979
        %v981 = vsub.f32 %v977, %v980
        %v982 = vmul.f32 %v981, 1.442695
        %v983 = vpow.pop %v982
        %v984 = vsel %vm814, %v983, 0.0
        %985 = vadd.xlane.f32.xlu0 %v984
        %v986 = vpop.xlane.xlu0 %985
        %v987 = vrcp.pop %v986
        %v988 = vmul.f32 %v983, %v987
        %v989 = vpack.c.bf16 %v988, %v988
        %990 = vrot.lane.b32.xlu0 %v810, 56
        %v991 = vpop.permute.xlu0 %990
        %v993 = vsel %vm814, %v989, 0
        %v996 = vsel %vm880, %v991, 0
        %998 = vmatprep.subr.bf16.mxu0 0
        %999 = vmatpush1.bf16.msra.mxu0 %v996
        %1000 = vmatprep.subr.bf16.mxu0 0
        %1001 = vmatpush1.bf16.msra.mxu0 0
        %1002 = vmatprep.subr.bf16.mxu0 0
        %1003 = vmatpush1.bf16.msra.mxu0 0
        %1004 = vmatprep.subr.bf16.mxu0 0
        %1005 = vmatpush1.bf16.msra.mxu0 0
        %1006 = vmatprep.subr.bf16.mxu0 0
        %1007 = vmatpush1.bf16.msra.mxu0 0
        %1008 = vmatprep.subr.bf16.mxu0 0
        %1009 = vmatpush1.bf16.msra.mxu0 0
        %1010 = vmatprep.subr.bf16.mxu0 0
        %1011 = vmatpush1.bf16.msra.mxu0 0
        %1012 = vmatprep.subr.bf16.mxu0 0
        %1013 = vmatpush1.bf16.msra.mxu0 0
        %1014 = vmatprep.subr.bf16.mxu0 0
        %1015 = vmatpush1.bf16.msra.mxu0 0
        %1016 = vmatprep.subr.bf16.mxu0 0
        %1017 = vmatpush1.bf16.msra.mxu0 0
        %1018 = vmatprep.subr.bf16.mxu0 0
        %1019 = vmatpush1.bf16.msra.mxu0 0
        %1020 = vmatprep.subr.bf16.mxu0 0
        %1021 = vmatpush1.bf16.msra.mxu0 0
        %1022 = vmatprep.subr.bf16.mxu0 0
        %1023 = vmatpush1.bf16.msra.mxu0 0
        %1024 = vmatprep.subr.bf16.mxu0 0
        %1025 = vmatpush1.bf16.msra.mxu0 0
        %1026 = vmatprep.subr.bf16.mxu0 0
        %1027 = vmatpush1.bf16.msra.mxu0 0
        %1028 = vmatprep.subr.bf16.mxu0 0
        %1029 = vmatpush1.bf16.msra.mxu0 0
        %1030 = vmatprep.mubr.bf16.mxu0 0
        %1031 = vmatmul.mubr.bf16.gmra.mrb[0].mxu0 %v993
        %v1032 = vpop.f32.mrb[0].mxu0
        %v1033 = vadd.f32 0.0, %v1032
        %v1034 = vpop.f32.mrb[0].mxu0
        %v1035 = vpop.f32.mrb[0].mxu0
        %v1036 = vpop.f32.mrb[0].mxu0
        %1037 = vdwg.mxu0
        %v1038 = vpack.c.bf16 %v1033, %v1033
        %s1039 = scalar_lea.vmem %s7, 4
        %v1040 = vld [vmem:[%s1039] sm:$0xf]
        %v1042 = vsel %vm814, %v1038, 0
        %v1045 = vsel %vm880, %v1040, 0
        %1047 = vmatprep.subr.bf16.mxu0 0
        %1048 = vmatpush1.bf16.msra.mxu0 %v1045
        %1049 = vmatprep.subr.bf16.mxu0 0
        %1050 = vmatpush1.bf16.msra.mxu0 0
        %1051 = vmatprep.subr.bf16.mxu0 0
        %1052 = vmatpush1.bf16.msra.mxu0 0
        %1053 = vmatprep.subr.bf16.mxu0 0
        %1054 = vmatpush1.bf16.msra.mxu0 0
        %1055 = vmatprep.subr.bf16.mxu0 0
        %1056 = vmatpush1.bf16.msra.mxu0 0
        %1057 = vmatprep.subr.bf16.mxu0 0
        %1058 = vmatpush1.bf16.msra.mxu0 0
        %1059 = vmatprep.subr.bf16.mxu0 0
        %1060 = vmatpush1.bf16.msra.mxu0 0
        %1061 = vmatprep.subr.bf16.mxu0 0
        %1062 = vmatpush1.bf16.msra.mxu0 0
        %1063 = vmatprep.subr.bf16.mxu0 0
        %1064 = vmatpush1.bf16.msra.mxu0 0
        %1065 = vmatprep.subr.bf16.mxu0 0
        %1066 = vmatpush1.bf16.msra.mxu0 0
        %1067 = vmatprep.subr.bf16.mxu0 0
        %1068 = vmatpush1.bf16.msra.mxu0 0
        %1069 = vmatprep.subr.bf16.mxu0 0
        %1070 = vmatpush1.bf16.msra.mxu0 0
        %1071 = vmatprep.subr.bf16.mxu0 0
        %1072 = vmatpush1.bf16.msra.mxu0 0
        %1073 = vmatprep.subr.bf16.mxu0 0
        %1074 = vmatpush1.bf16.msra.mxu0 0
        %1075 = vmatprep.subr.bf16.mxu0 0
        %1076 = vmatpush1.bf16.msra.mxu0 0
        %1077 = vmatprep.subr.bf16.mxu0 0
        %1078 = vmatpush1.bf16.msra.mxu0 0
        %1079 = vmatprep.mubr.bf16.mxu0 0
        %1080 = vmatmul.mubr.bf16.gmra.mrb[0].mxu0 %v1042
        %v1081 = vpop.f32.mrb[0].mxu0
        %v1082 = vadd.f32 0.0, %v1081
        %v1083 = vpop.f32.mrb[0].mxu0
        %v1084 = vpop.f32.mrb[0].mxu0
        %v1085 = vpop.f32.mrb[0].mxu0
        %1086 = vdwg.mxu0
        %1087 = vrot.lane.b32.xlu0 %v810, 112
        %v1088 = vpop.permute.xlu0 %1087
        %1089 = vrot.lane.b32.xlu0 %v810, 80
        %v1090 = vpop.permute.xlu0 %1089
        %v1092 = vsel %vm814, %v1088, 0
        %v1095 = vsel %vm814, %v1090, 0
        %1097 = vmatprep.subr.bf16.mxu0 0
        %1098 = vmatpush1.bf16.xpose.msra.mxu0 %v1095
        %1099 = vmatprep.subr.bf16.mxu0 0
        %1100 = vmatpush1.bf16.xpose.msra.mxu0 0
        %1101 = vmatprep.subr.bf16.mxu0 0
        %1102 = vmatpush1.bf16.xpose.msra.mxu0 0
        %1103 = vmatprep.subr.bf16.mxu0 0
        %1104 = vmatpush1.bf16.xpose.msra.mxu0 0
        %1105 = vmatprep.subr.bf16.mxu0 0
        %1106 = vmatpush1.bf16.xpose.msra.mxu0 0
        %1107 = vmatprep.subr.bf16.mxu0 0
        %1108 = vmatpush1.bf16.xpose.msra.mxu0 0
        %1109 = vmatprep.subr.bf16.mxu0 0
        %1110 = vmatpush1.bf16.xpose.msra.mxu0 0
        %1111 = vmatprep.subr.bf16.mxu0 0
        %1112 = vmatpush1.bf16.xpose.msra.mxu0 0
        %1113 = vmatprep.subr.bf16.mxu0 0
        %1114 = vmatpush1.bf16.xpose.msra.mxu0 0
        %1115 = vmatprep.subr.bf16.mxu0 0
        %1116 = vmatpush1.bf16.xpose.msra.mxu0 0
        %1117 = vmatprep.subr.bf16.mxu0 0
        %1118 = vmatpush1.bf16.xpose.msra.mxu0 0
        %1119 = vmatprep.subr.bf16.mxu0 0
        %1120 = vmatpush1.bf16.xpose.msra.mxu0 0
        %1121 = vmatprep.subr.bf16.mxu0 0
        %1122 = vmatpush1.bf16.xpose.msra.mxu0 0
        %1123 = vmatprep.subr.bf16.mxu0 0
        %1124 = vmatpush1.bf16.xpose.msra.mxu0 0
        %1125 = vmatprep.subr.bf16.mxu0 0
        %1126 = vmatpush1.bf16.xpose.msra.mxu0 0
        %1127 = vmatprep.subr.bf16.mxu0 0
        %1128 = vmatpush1.bf16.xpose.msra.mxu0 0
        %1129 = vmatprep.mubr.bf16.mxu0 0
        %1130 = vmatmul.mubr.bf16.gmra.mrb[0].mxu0 %v1092
        %v1131 = vpop.f32.mrb[0].mxu0
        %v1132 = vadd.f32 0.0, %v1131
        %v1133 = vpop.f32.mrb[0].mxu0
        %v1134 = vpop.f32.mrb[0].mxu0
        %v1135 = vpop.f32.mrb[0].mxu0
        %1136 = vdwg.mxu0
        %v1137 = vmul.f32 %v1132, 0.35355338
        %v1138 = vsel %vm711, %v1137, -1e+09
        %v1139 = vsel %vm814, %v1138, -inf
        %1140 = vmax.xlane.f32.xlu0 %v1139
        %v1141 = vpop.xlane.xlu0 %1140
        %v1142 = vsub.f32 %v1138, %v1141
        %v1143 = vmul.f32 %v1142, 1.442695
        %v1144 = vpow.pop %v1143
        %v1145 = vsel %vm814, %v1144, 0.0
        %1146 = vadd.xlane.f32.xlu0 %v1145
        %v1147 = vpop.xlane.xlu0 %1146
        %v1148 = vrcp.pop %v1147
        %v1149 = vmul.f32 %v1144, %v1148
        %v1150 = vpack.c.bf16 %v1149, %v1149
        %1151 = vrot.lane.b32.xlu0 %v810, 48
        %v1152 = vpop.permute.xlu0 %1151
        %v1154 = vsel %vm814, %v1150, 0
        %v1157 = vsel %vm880, %v1152, 0
        %1159 = vmatprep.subr.bf16.mxu0 0
        %1160 = vmatpush1.bf16.msra.mxu0 %v1157
        %1161 = vmatprep.subr.bf16.mxu0 0
        %1162 = vmatpush1.bf16.msra.mxu0 0
        %1163 = vmatprep.subr.bf16.mxu0 0
        %1164 = vmatpush1.bf16.msra.mxu0 0
        %1165 = vmatprep.subr.bf16.mxu0 0
        %1166 = vmatpush1.bf16.msra.mxu0 0
        %1167 = vmatprep.subr.bf16.mxu0 0
        %1168 = vmatpush1.bf16.msra.mxu0 0
        %1169 = vmatprep.subr.bf16.mxu0 0
        %1170 = vmatpush1.bf16.msra.mxu0 0
        %1171 = vmatprep.subr.bf16.mxu0 0
        %1172 = vmatpush1.bf16.msra.mxu0 0
        %1173 = vmatprep.subr.bf16.mxu0 0
        %1174 = vmatpush1.bf16.msra.mxu0 0
        %1175 = vmatprep.subr.bf16.mxu0 0
        %1176 = vmatpush1.bf16.msra.mxu0 0
        %1177 = vmatprep.subr.bf16.mxu0 0
        %1178 = vmatpush1.bf16.msra.mxu0 0
        %1179 = vmatprep.subr.bf16.mxu0 0
        %1180 = vmatpush1.bf16.msra.mxu0 0
        %1181 = vmatprep.subr.bf16.mxu0 0
        %1182 = vmatpush1.bf16.msra.mxu0 0
        %1183 = vmatprep.subr.bf16.mxu0 0
        %1184 = vmatpush1.bf16.msra.mxu0 0
        %1185 = vmatprep.subr.bf16.mxu0 0
        %1186 = vmatpush1.bf16.msra.mxu0 0
        %1187 = vmatprep.subr.bf16.mxu0 0
        %1188 = vmatpush1.bf16.msra.mxu0 0
        %1189 = vmatprep.subr.bf16.mxu0 0
        %1190 = vmatpush1.bf16.msra.mxu0 0
        %1191 = vmatprep.mubr.bf16.mxu0 0
        %1192 = vmatmul.mubr.bf16.gmra.mrb[0].mxu0 %v1154
        %v1193 = vpop.f32.mrb[0].mxu0
        %v1194 = vadd.f32 0.0, %v1193
        %v1195 = vpop.f32.mrb[0].mxu0
        %v1196 = vpop.f32.mrb[0].mxu0
        %v1197 = vpop.f32.mrb[0].mxu0
        %1198 = vdwg.mxu0
        %v1199 = vpack.c.bf16 %v1194, %v1194
        %s1200 = scalar_lea.vmem %s7, 8
        %v1201 = vld [vmem:[%s1200] sm:$0xf]
        %v1203 = vsel %vm814, %v1199, 0
        %v1206 = vsel %vm880, %v1201, 0
        %1208 = vmatprep.subr.bf16.mxu0 0
        %1209 = vmatpush1.bf16.msra.mxu0 %v1206
        %1210 = vmatprep.subr.bf16.mxu0 0
        %1211 = vmatpush1.bf16.msra.mxu0 0
        %1212 = vmatprep.subr.bf16.mxu0 0
        %1213 = vmatpush1.bf16.msra.mxu0 0
        %1214 = vmatprep.subr.bf16.mxu0 0
        %1215 = vmatpush1.bf16.msra.mxu0 0
        %1216 = vmatprep.subr.bf16.mxu0 0
        %1217 = vmatpush1.bf16.msra.mxu0 0
        %1218 = vmatprep.subr.bf16.mxu0 0
        %1219 = vmatpush1.bf16.msra.mxu0 0
        %1220 = vmatprep.subr.bf16.mxu0 0
        %1221 = vmatpush1.bf16.msra.mxu0 0
        %1222 = vmatprep.subr.bf16.mxu0 0
        %1223 = vmatpush1.bf16.msra.mxu0 0
        %1224 = vmatprep.subr.bf16.mxu0 0
        %1225 = vmatpush1.bf16.msra.mxu0 0
        %1226 = vmatprep.subr.bf16.mxu0 0
        %1227 = vmatpush1.bf16.msra.mxu0 0
        %1228 = vmatprep.subr.bf16.mxu0 0
        %1229 = vmatpush1.bf16.msra.mxu0 0
        %1230 = vmatprep.subr.bf16.mxu0 0
        %1231 = vmatpush1.bf16.msra.mxu0 0
        %1232 = vmatprep.subr.bf16.mxu0 0
        %1233 = vmatpush1.bf16.msra.mxu0 0
        %1234 = vmatprep.subr.bf16.mxu0 0
        %1235 = vmatpush1.bf16.msra.mxu0 0
        %1236 = vmatprep.subr.bf16.mxu0 0
        %1237 = vmatpush1.bf16.msra.mxu0 0
        %1238 = vmatprep.subr.bf16.mxu0 0
        %1239 = vmatpush1.bf16.msra.mxu0 0
        %1240 = vmatprep.mubr.bf16.mxu0 0
        %1241 = vmatmul.mubr.bf16.gmra.mrb[0].mxu0 %v1203
        %v1242 = vpop.f32.mrb[0].mxu0
        %v1243 = vadd.f32 0.0, %v1242
        %v1244 = vpop.f32.mrb[0].mxu0
        %v1245 = vpop.f32.mrb[0].mxu0
        %v1246 = vpop.f32.mrb[0].mxu0
        %1247 = vdwg.mxu0
        %1248 = vrot.lane.b32.xlu0 %v810, 104
        %v1249 = vpop.permute.xlu0 %1248
        %1250 = vrot.lane.b32.xlu0 %v810, 72
        %v1251 = vpop.permute.xlu0 %1250
        %v1253 = vsel %vm814, %v1249, 0
        %v1256 = vsel %vm814, %v1251, 0
        %1258 = vmatprep.subr.bf16.mxu0 0
        %1259 = vmatpush1.bf16.xpose.msra.mxu0 %v1256
        %1260 = vmatprep.subr.bf16.mxu0 0
        %1261 = vmatpush1.bf16.xpose.msra.mxu0 0
        %1262 = vmatprep.subr.bf16.mxu0 0
        %1263 = vmatpush1.bf16.xpose.msra.mxu0 0
        %1264 = vmatprep.subr.bf16.mxu0 0
        %1265 = vmatpush1.bf16.xpose.msra.mxu0 0
        %1266 = vmatprep.subr.bf16.mxu0 0
        %1267 = vmatpush1.bf16.xpose.msra.mxu0 0
        %1268 = vmatprep.subr.bf16.mxu0 0
        %1269 = vmatpush1.bf16.xpose.msra.mxu0 0
        %1270 = vmatprep.subr.bf16.mxu0 0
        %1271 = vmatpush1.bf16.xpose.msra.mxu0 0
        %1272 = vmatprep.subr.bf16.mxu0 0
        %1273 = vmatpush1.bf16.xpose.msra.mxu0 0
        %1274 = vmatprep.subr.bf16.mxu0 0
        %1275 = vmatpush1.bf16.xpose.msra.mxu0 0
        %1276 = vmatprep.subr.bf16.mxu0 0
        %1277 = vmatpush1.bf16.xpose.msra.mxu0 0
        %1278 = vmatprep.subr.bf16.mxu0 0
        %1279 = vmatpush1.bf16.xpose.msra.mxu0 0
        %1280 = vmatprep.subr.bf16.mxu0 0
        %1281 = vmatpush1.bf16.xpose.msra.mxu0 0
        %1282 = vmatprep.subr.bf16.mxu0 0
        %1283 = vmatpush1.bf16.xpose.msra.mxu0 0
        %1284 = vmatprep.subr.bf16.mxu0 0
        %1285 = vmatpush1.bf16.xpose.msra.mxu0 0
        %1286 = vmatprep.subr.bf16.mxu0 0
        %1287 = vmatpush1.bf16.xpose.msra.mxu0 0
        %1288 = vmatprep.subr.bf16.mxu0 0
        %1289 = vmatpush1.bf16.xpose.msra.mxu0 0
        %1290 = vmatprep.mubr.bf16.mxu0 0
        %1291 = vmatmul.mubr.bf16.gmra.mrb[0].mxu0 %v1253
        %v1292 = vpop.f32.mrb[0].mxu0
        %v1293 = vadd.f32 0.0, %v1292
        %v1294 = vpop.f32.mrb[0].mxu0
        %v1295 = vpop.f32.mrb[0].mxu0
        %v1296 = vpop.f32.mrb[0].mxu0
        %1297 = vdwg.mxu0
        %v1298 = vmul.f32 %v1293, 0.35355338
        %v1299 = vsel %vm711, %v1298, -1e+09
        %v1300 = vsel %vm814, %v1299, -inf
        %1301 = vmax.xlane.f32.xlu0 %v1300
        %v1302 = vpop.xlane.xlu0 %1301
        %v1303 = vsub.f32 %v1299, %v1302
        %v1304 = vmul.f32 %v1303, 1.442695
        %v1305 = vpow.pop %v1304
        %v1306 = vsel %vm814, %v1305, 0.0
        %1307 = vadd.xlane.f32.xlu0 %v1306
        %v1308 = vpop.xlane.xlu0 %1307
        %v1309 = vrcp.pop %v1308
        %v1310 = vmul.f32 %v1305, %v1309
        %v1311 = vpack.c.bf16 %v1310, %v1310
        %1312 = vrot.lane.b32.xlu0 %v810, 40
        %v1313 = vpop.permute.xlu0 %1312
        %v1315 = vsel %vm814, %v1311, 0
        %v1318 = vsel %vm880, %v1313, 0
        %1320 = vmatprep.subr.bf16.mxu0 0
        %1321 = vmatpush1.bf16.msra.mxu0 %v1318
        %1322 = vmatprep.subr.bf16.mxu0 0
        %1323 = vmatpush1.bf16.msra.mxu0 0
        %1324 = vmatprep.subr.bf16.mxu0 0
        %1325 = vmatpush1.bf16.msra.mxu0 0
        %1326 = vmatprep.subr.bf16.mxu0 0
        %1327 = vmatpush1.bf16.msra.mxu0 0
        %1328 = vmatprep.subr.bf16.mxu0 0
        %1329 = vmatpush1.bf16.msra.mxu0 0
        %1330 = vmatprep.subr.bf16.mxu0 0
        %1331 = vmatpush1.bf16.msra.mxu0 0
        %1332 = vmatprep.subr.bf16.mxu0 0
        %1333 = vmatpush1.bf16.msra.mxu0 0
        %1334 = vmatprep.subr.bf16.mxu0 0
        %1335 = vmatpush1.bf16.msra.mxu0 0
        %1336 = vmatprep.subr.bf16.mxu0 0
        %1337 = vmatpush1.bf16.msra.mxu0 0
        %1338 = vmatprep.subr.bf16.mxu0 0
        %1339 = vmatpush1.bf16.msra.mxu0 0
        %1340 = vmatprep.subr.bf16.mxu0 0
        %1341 = vmatpush1.bf16.msra.mxu0 0
        %1342 = vmatprep.subr.bf16.mxu0 0
        %1343 = vmatpush1.bf16.msra.mxu0 0
        %1344 = vmatprep.subr.bf16.mxu0 0
        %1345 = vmatpush1.bf16.msra.mxu0 0
        %1346 = vmatprep.subr.bf16.mxu0 0
        %1347 = vmatpush1.bf16.msra.mxu0 0
        %1348 = vmatprep.subr.bf16.mxu0 0
        %1349 = vmatpush1.bf16.msra.mxu0 0
        %1350 = vmatprep.subr.bf16.mxu0 0
        %1351 = vmatpush1.bf16.msra.mxu0 0
        %1352 = vmatprep.mubr.bf16.mxu0 0
        %1353 = vmatmul.mubr.bf16.gmra.mrb[0].mxu0 %v1315
        %v1354 = vpop.f32.mrb[0].mxu0
        %v1355 = vadd.f32 0.0, %v1354
        %v1356 = vpop.f32.mrb[0].mxu0
        %v1357 = vpop.f32.mrb[0].mxu0
        %v1358 = vpop.f32.mrb[0].mxu0
        %1359 = vdwg.mxu0
        %v1360 = vpack.c.bf16 %v1355, %v1355
        %s1361 = scalar_lea.vmem %s7, 12
        %v1362 = vld [vmem:[%s1361] sm:$0xf]
        %v1364 = vsel %vm814, %v1360, 0
        %v1367 = vsel %vm880, %v1362, 0
        %1369 = vmatprep.subr.bf16.mxu0 0
        %1370 = vmatpush1.bf16.msra.mxu0 %v1367
        %1371 = vmatprep.subr.bf16.mxu0 0
        %1372 = vmatpush1.bf16.msra.mxu0 0
        %1373 = vmatprep.subr.bf16.mxu0 0
        %1374 = vmatpush1.bf16.msra.mxu0 0
        %1375 = vmatprep.subr.bf16.mxu0 0
        %1376 = vmatpush1.bf16.msra.mxu0 0
        %1377 = vmatprep.subr.bf16.mxu0 0
        %1378 = vmatpush1.bf16.msra.mxu0 0
        %1379 = vmatprep.subr.bf16.mxu0 0
        %1380 = vmatpush1.bf16.msra.mxu0 0
        %1381 = vmatprep.subr.bf16.mxu0 0
        %1382 = vmatpush1.bf16.msra.mxu0 0
        %1383 = vmatprep.subr.bf16.mxu0 0
        %1384 = vmatpush1.bf16.msra.mxu0 0
        %1385 = vmatprep.subr.bf16.mxu0 0
        %1386 = vmatpush1.bf16.msra.mxu0 0
        %1387 = vmatprep.subr.bf16.mxu0 0
        %1388 = vmatpush1.bf16.msra.mxu0 0
        %1389 = vmatprep.subr.bf16.mxu0 0
        %1390 = vmatpush1.bf16.msra.mxu0 0
        %1391 = vmatprep.subr.bf16.mxu0 0
        %1392 = vmatpush1.bf16.msra.mxu0 0
        %1393 = vmatprep.subr.bf16.mxu0 0
        %1394 = vmatpush1.bf16.msra.mxu0 0
        %1395 = vmatprep.subr.bf16.mxu0 0
        %1396 = vmatpush1.bf16.msra.mxu0 0
        %1397 = vmatprep.subr.bf16.mxu0 0
        %1398 = vmatpush1.bf16.msra.mxu0 0
        %1399 = vmatprep.subr.bf16.mxu0 0
        %1400 = vmatpush1.bf16.msra.mxu0 0
        %1401 = vmatprep.mubr.bf16.mxu0 0
        %1402 = vmatmul.mubr.bf16.gmra.mrb[0].mxu0 %v1364
        %v1403 = vpop.f32.mrb[0].mxu0
        %v1404 = vadd.f32 0.0, %v1403
        %v1405 = vpop.f32.mrb[0].mxu0
        %v1406 = vpop.f32.mrb[0].mxu0
        %v1407 = vpop.f32.mrb[0].mxu0
        %1408 = vdwg.mxu0
        %v1410 = vsel %vm814, %v924, 0
        %v1413 = vsel %vm880, %v925, 0
        %1415 = vmatprep.subr.bf16.mxu0 0
        %1416 = vmatpush1.bf16.msra.mxu0 %v1413
        %1417 = vmatprep.subr.bf16.mxu0 0
        %1418 = vmatpush1.bf16.msra.mxu0 0
        %1419 = vmatprep.subr.bf16.mxu0 0
        %1420 = vmatpush1.bf16.msra.mxu0 0
        %1421 = vmatprep.subr.bf16.mxu0 0
        %1422 = vmatpush1.bf16.msra.mxu0 0
        %1423 = vmatprep.subr.bf16.mxu0 0
        %1424 = vmatpush1.bf16.msra.mxu0 0
        %1425 = vmatprep.subr.bf16.mxu0 0
        %1426 = vmatpush1.bf16.msra.mxu0 0
        %1427 = vmatprep.subr.bf16.mxu0 0
        %1428 = vmatpush1.bf16.msra.mxu0 0
        %1429 = vmatprep.subr.bf16.mxu0 0
        %1430 = vmatpush1.bf16.msra.mxu0 0
        %1431 = vmatprep.subr.bf16.mxu0 0
        %1432 = vmatpush1.bf16.msra.mxu0 0
        %1433 = vmatprep.subr.bf16.mxu0 0
        %1434 = vmatpush1.bf16.msra.mxu0 0
        %1435 = vmatprep.subr.bf16.mxu0 0
        %1436 = vmatpush1.bf16.msra.mxu0 0
        %1437 = vmatprep.subr.bf16.mxu0 0
        %1438 = vmatpush1.bf16.msra.mxu0 0
        %1439 = vmatprep.subr.bf16.mxu0 0
        %1440 = vmatpush1.bf16.msra.mxu0 0
        %1441 = vmatprep.subr.bf16.mxu0 0
        %1442 = vmatpush1.bf16.msra.mxu0 0
        %1443 = vmatprep.subr.bf16.mxu0 0
        %1444 = vmatpush1.bf16.msra.mxu0 0
        %1445 = vmatprep.subr.bf16.mxu0 0
        %1446 = vmatpush1.bf16.msra.mxu0 0
        %1447 = vmatprep.mubr.bf16.mxu0 0
        %1448 = vmatmul.mubr.bf16.gmra.mrb[0].mxu0 %v1410
        %v1449 = vpop.f32.mrb[0].mxu0
        %v1450 = vadd.f32 %v1082, %v1449
        %v1451 = vpop.f32.mrb[0].mxu0
        %v1452 = vpop.f32.mrb[0].mxu0
        %v1453 = vpop.f32.mrb[0].mxu0
        %1454 = vdwg.mxu0
        %v1455 = vadd.f32 %v1450, %v1243
        %v1456 = vadd.f32 %v1455, %v1404
        %v1457 = vadd.f32 %v696, %v1456
        %v1458 = vld [vmem:[%s8] sm:$0x1]
        %v1460 = vlaneseq
        %v1461 = vshrl.u32 %v1460, 7
        %v1462 = vsub.s32 0, %v1461
        %v1463 = vrot.slane %v1458, %v1462
        %v1465 = vadd.f32 %v1457, %v1463
        %v1466 = vld [vmem:[%s9] sm:$0x1]
        %v1467 = vld [vmem:[%s10] sm:$0x1]
        %v1468 = vsel %vm714, %v1465, 0.0
        %1469 = vadd.xlane.f32.xlu0 %v1468
        %v1470 = vpop.xlane.xlu0 %1469
        %v1471 = vmul.f32 %v1470, %v718
        %v1472 = vsub.f32 %v1465, %v1471
        %v1473 = vmul.f32 %v1472, %v1472
        %v1474 = vsel %vm714, %v1473, 0.0
        %1475 = vadd.xlane.f32.xlu0 %v1474
        %v1476 = vpop.xlane.xlu0 %1475
        %v1477 = vmul.f32 %v1476, %v718
        %v1478 = vadd.f32 %v1477, 1e-05
        %v1479 = vrsqrt.pop %v1478
        %v1480 = vmul.f32 %v1472, %v1479
        %v1482 = vlaneseq
        %v1483 = vshrl.u32 %v1482, 7
        %v1484 = vsub.s32 0, %v1483
        %v1485 = vrot.slane %v1466, %v1484
        %v1487 = vmul.f32 %v1480, %v1485
        %v1489 = vlaneseq
        %v1490 = vshrl.u32 %v1489, 7
        %v1491 = vsub.s32 0, %v1490
        %v1492 = vrot.slane %v1467, %v1491
        %v1494 = vadd.f32 %v1487, %v1492
        %v1495 = vpack.c.bf16 %v1494, %v1494
        %v1496 = vld [vmem:[%s11] sm:$0xf]
        %v1497 = vld [vmem:[%s11 + $0x4] sm:$0xf]
        %v1498 = vld [vmem:[%s11 + $0x8] sm:$0xf]
        %v1499 = vld [vmem:[%s11 + $0xc] sm:$0xf]
        %v1500 = vld [vmem:[%s12] sm:$0x1]
        %v1502 = vlaneseq
        %v1503 = vshrl.u32 %v1502, 7
        %v1504 = vsub.s32 0, %v1503
        %v1505 = vrot.slane %v1500, %v1504
        %v1511 = vunpack.c.l.b16 %v1496
        %v1512 = vunpack.c.l.b16 %v1497
        %v1513 = vunpack.c.l.b16 %v1498
        %v1514 = vunpack.c.l.b16 %v1499
        %v1515 = vpack.c.b16 %v1512, %v1511
        %v1516 = vpack.c.b16 %v1514, %v1513
        %v1520 = vsel %vm714, %v1495, 0
        %1522 = vmatprep.subr.bf16.mxu0 0
        %1523 = vmatpush1.bf16.msra.mxu0 %v1515
        %1524 = vmatprep.subr.bf16.mxu0 0
        %1525 = vmatpush1.bf16.msra.mxu0 %v1516
        %1526 = vmatprep.subr.bf16.mxu0 0
        %1527 = vmatpush1.bf16.msra.mxu0 0
        %1528 = vmatprep.subr.bf16.mxu0 0
        %1529 = vmatpush1.bf16.msra.mxu0 0
        %1530 = vmatprep.subr.bf16.mxu0 0
        %1531 = vmatpush1.bf16.msra.mxu0 0
        %1532 = vmatprep.subr.bf16.mxu0 0
        %1533 = vmatpush1.bf16.msra.mxu0 0
        %1534 = vmatprep.subr.bf16.mxu0 0
        %1535 = vmatpush1.bf16.msra.mxu0 0
        %1536 = vmatprep.subr.bf16.mxu0 0
        %1537 = vmatpush1.bf16.msra.mxu0 0
        %1538 = vmatprep.subr.bf16.mxu0 0
        %1539 = vmatpush1.bf16.msra.mxu0 0
        %1540 = vmatprep.subr.bf16.mxu0 0
        %1541 = vmatpush1.bf16.msra.mxu0 0
        %1542 = vmatprep.subr.bf16.mxu0 0
        %1543 = vmatpush1.bf16.msra.mxu0 0
        %1544 = vmatprep.subr.bf16.mxu0 0
        %1545 = vmatpush1.bf16.msra.mxu0 0
        %1546 = vmatprep.subr.bf16.mxu0 0
        %1547 = vmatpush1.bf16.msra.mxu0 0
        %1548 = vmatprep.subr.bf16.mxu0 0
        %1549 = vmatpush1.bf16.msra.mxu0 0
        %1550 = vmatprep.subr.bf16.mxu0 0
        %1551 = vmatpush1.bf16.msra.mxu0 0
        %1552 = vmatprep.subr.bf16.mxu0 0
        %1553 = vmatpush1.bf16.msra.mxu0 0
        %1554 = vmatprep.mubr.bf16.mxu0 0
        %1555 = vmatmul.mubr.bf16.gmra.mrb[0].mxu0 %v1520
        %v1556 = vpop.f32.mrb[0].mxu0
        %v1557 = vadd.f32 %v1505, %v1556
        %v1558 = vpop.f32.mrb[0].mxu0
        %v1559 = vpop.f32.mrb[0].mxu0
        %v1560 = vpop.f32.mrb[0].mxu0
        %1561 = vdwg.mxu0
        %v1562 = vmul.f32 %v1557, 0.5
        %v1563 = vmul.f32 %v1557, 0.044715
        %v1564 = vmul.f32 %v1563, %v1557
        %v1565 = vmul.f32 %v1564, %v1557
        %v1566 = vadd.f32 %v1557, %v1565
        %v1567 = vmul.f32 %v1566, 0.7978846
        %v1568 = vtanh.pop %v1567
        %v1569 = vadd.f32 %v1568, 1.0
        %v1570 = vmul.f32 %v1562, %v1569
        %v1571 = vpack.c.bf16 %v1570, %v1570
        %v1572 = vld [vmem:[%s13] sm:$0xf]
        %v1573 = vld [vmem:[%s13 + $0x4] sm:$0xf]
        %v1574 = vld [vmem:[%s13 + $0x8] sm:$0xf]
        %v1575 = vld [vmem:[%s13 + $0xc] sm:$0xf]
        %v1576 = vld [vmem:[%s13 + $0x10] sm:$0xf]
        %v1577 = vld [vmem:[%s13 + $0x14] sm:$0xf]
        %v1578 = vld [vmem:[%s13 + $0x18] sm:$0xf]
        %v1579 = vld [vmem:[%s13 + $0x1c] sm:$0xf]
        %v1580 = vld [vmem:[%s13 + $0x20] sm:$0xf]
        %v1581 = vld [vmem:[%s13 + $0x24] sm:$0xf]
        %v1582 = vld [vmem:[%s13 + $0x28] sm:$0xf]
        %v1583 = vld [vmem:[%s13 + $0x2c] sm:$0xf]
        %v1584 = vld [vmem:[%s13 + $0x30] sm:$0xf]
        %v1585 = vld [vmem:[%s13 + $0x34] sm:$0xf]
        %v1586 = vld [vmem:[%s13 + $0x38] sm:$0xf]
        %v1587 = vld [vmem:[%s13 + $0x3c] sm:$0xf]
        %v1588 = vld [vmem:[%s14] sm:$0x1]
        %v1590 = vlaneseq
        %v1591 = vshrl.u32 %v1590, 7
        %v1592 = vsub.s32 0, %v1591
        %v1593 = vrot.slane %v1588, %v1592
        %v1611 = vunpack.c.l.b16 %v1572
        %v1612 = vunpack.c.l.b16 %v1573
        %v1613 = vunpack.c.l.b16 %v1574
        %v1614 = vunpack.c.l.b16 %v1575
        %v1615 = vunpack.c.l.b16 %v1576
        %v1616 = vunpack.c.l.b16 %v1577
        %v1617 = vunpack.c.l.b16 %v1578
        %v1618 = vunpack.c.l.b16 %v1579
        %v1619 = vunpack.c.l.b16 %v1580
        %v1620 = vunpack.c.l.b16 %v1581
        %v1621 = vunpack.c.l.b16 %v1582
        %v1622 = vunpack.c.l.b16 %v1583
        %v1623 = vunpack.c.l.b16 %v1584
        %v1624 = vunpack.c.l.b16 %v1585
        %v1625 = vunpack.c.l.b16 %v1586
        %v1626 = vunpack.c.l.b16 %v1587
        %v1627 = vpack.c.b16 %v1612, %v1611
        %v1628 = vpack.c.b16 %v1614, %v1613
        %v1629 = vpack.c.b16 %v1616, %v1615
        %v1630 = vpack.c.b16 %v1618, %v1617
        %v1631 = vpack.c.b16 %v1620, %v1619
        %v1632 = vpack.c.b16 %v1622, %v1621
        %v1633 = vpack.c.b16 %v1624, %v1623
        %v1634 = vpack.c.b16 %v1626, %v1625
        %1643 = vmatprep.subr.bf16.mxu0 0
        %1644 = vmatpush1.bf16.msra.mxu0 %v1627
        %1645 = vmatprep.subr.bf16.mxu0 0
        %1646 = vmatpush1.bf16.msra.mxu0 %v1628
        %1647 = vmatprep.subr.bf16.mxu0 0
        %1648 = vmatpush1.bf16.msra.mxu0 %v1629
        %1649 = vmatprep.subr.bf16.mxu0 0
        %1650 = vmatpush1.bf16.msra.mxu0 %v1630
        %1651 = vmatprep.subr.bf16.mxu0 0
        %1652 = vmatpush1.bf16.msra.mxu0 %v1631
        %1653 = vmatprep.subr.bf16.mxu0 0
        %1654 = vmatpush1.bf16.msra.mxu0 %v1632
        %1655 = vmatprep.subr.bf16.mxu0 0
        %1656 = vmatpush1.bf16.msra.mxu0 %v1633
        %1657 = vmatprep.subr.bf16.mxu0 0
        %1658 = vmatpush1.bf16.msra.mxu0 %v1634
        %1659 = vmatprep.subr.bf16.mxu0 0
        %1660 = vmatpush1.bf16.msra.mxu0 0
        %1661 = vmatprep.subr.bf16.mxu0 0
        %1662 = vmatpush1.bf16.msra.mxu0 0
        %1663 = vmatprep.subr.bf16.mxu0 0
        %1664 = vmatpush1.bf16.msra.mxu0 0
        %1665 = vmatprep.subr.bf16.mxu0 0
        %1666 = vmatpush1.bf16.msra.mxu0 0
        %1667 = vmatprep.subr.bf16.mxu0 0
        %1668 = vmatpush1.bf16.msra.mxu0 0
        %1669 = vmatprep.subr.bf16.mxu0 0
        %1670 = vmatpush1.bf16.msra.mxu0 0
        %1671 = vmatprep.subr.bf16.mxu0 0
        %1672 = vmatpush1.bf16.msra.mxu0 0
        %1673 = vmatprep.subr.bf16.mxu0 0
        %1674 = vmatpush1.bf16.msra.mxu0 0
        %1675 = vmatprep.mubr.bf16.mxu0 0
        %1676 = vmatmul.mubr.bf16.gmra.mrb[0].mxu0 %v1571
        %v1677 = vpop.f32.mrb[0].mxu0
        %v1678 = vadd.f32 %v1593, %v1677
        %v1679 = vpop.f32.mrb[0].mxu0
        %v1680 = vpop.f32.mrb[0].mxu0
        %v1681 = vpop.f32.mrb[0].mxu0
        %1682 = vdwg.mxu0
        %v1683 = vadd.f32 %v1465, %v1678
        %s1684 = scalar_lea.vmem %s3, 1
        %v1685 = vld [vmem:[%s1684] sm:$0x1]
        %s1686 = scalar_lea.vmem %s4, 1
        %v1687 = vld [vmem:[%s1686] sm:$0x1]
        %v1688 = vsel %vm714, %v1683, 0.0
        %1689 = vadd.xlane.f32.xlu0 %v1688
        %v1690 = vpop.xlane.xlu0 %1689
        %v1691 = vmul.f32 %v1690, %v718
        %v1692 = vsub.f32 %v1683, %v1691
        %v1693 = vmul.f32 %v1692, %v1692
        %v1694 = vsel %vm714, %v1693, 0.0
        %1695 = vadd.xlane.f32.xlu0 %v1694
        %v1696 = vpop.xlane.xlu0 %1695
        %v1697 = vmul.f32 %v1696, %v718
        %v1698 = vadd.f32 %v1697, 1e-05
        %v1699 = vrsqrt.pop %v1698
        %v1700 = vmul.f32 %v1692, %v1699
        %v1702 = vlaneseq
        %v1703 = vshrl.u32 %v1702, 7
        %v1704 = vsub.s32 0, %v1703
        %v1705 = vrot.slane %v1685, %v1704
        %v1707 = vmul.f32 %v1700, %v1705
        %v1709 = vlaneseq
        %v1710 = vshrl.u32 %v1709, 7
        %v1711 = vsub.s32 0, %v1710
        %v1712 = vrot.slane %v1687, %v1711
        %v1714 = vadd.f32 %v1707, %v1712
        %v1715 = vpack.c.bf16 %v1714, %v1714
        %s1716 = scalar_lea.vmem %s5, 16
        %v1717 = vld [vmem:[%s1716] sm:$0xf]
        %v1718 = vld [vmem:[%s1716 + $0x4] sm:$0xf]
        %v1719 = vld [vmem:[%s1716 + $0x8] sm:$0xf]
        %v1720 = vld [vmem:[%s1716 + $0xc] sm:$0xf]
        %s1721 = scalar_lea.vmem %s6, 1
        %v1722 = vld [vmem:[%s1721] sm:$0x1]
        %v1724 = vlaneseq
        %v1725 = vshrl.u32 %v1724, 7
        %v1726 = vsub.s32 0, %v1725
        %v1727 = vrot.slane %v1722, %v1726
        %v1733 = vunpack.c.l.b16 %v1717
        %v1734 = vunpack.c.l.b16 %v1718
        %v1735 = vunpack.c.l.b16 %v1719
        %v1736 = vunpack.c.l.b16 %v1720
        %v1737 = vpack.c.b16 %v1734, %v1733
        %v1738 = vpack.c.b16 %v1736, %v1735
        %v1742 = vsel %vm714, %v1715, 0
        %1744 = vmatprep.subr.bf16.mxu0 0
        %1745 = vmatpush1.bf16.msra.mxu0 %v1737
        %1746 = vmatprep.subr.bf16.mxu0 0
        %1747 = vmatpush1.bf16.msra.mxu0 %v1738
        %1748 = vmatprep.subr.bf16.mxu0 0
        %1749 = vmatpush1.bf16.msra.mxu0 0
        %1750 = vmatprep.subr.bf16.mxu0 0
        %1751 = vmatpush1.bf16.msra.mxu0 0
        %1752 = vmatprep.subr.bf16.mxu0 0
        %1753 = vmatpush1.bf16.msra.mxu0 0
        %1754 = vmatprep.subr.bf16.mxu0 0
        %1755 = vmatpush1.bf16.msra.mxu0 0
        %1756 = vmatprep.subr.bf16.mxu0 0
        %1757 = vmatpush1.bf16.msra.mxu0 0
        %1758 = vmatprep.subr.bf16.mxu0 0
        %1759 = vmatpush1.bf16.msra.mxu0 0
        %1760 = vmatprep.subr.bf16.mxu0 0
        %1761 = vmatpush1.bf16.msra.mxu0 0
        %1762 = vmatprep.subr.bf16.mxu0 0
        %1763 = vmatpush1.bf16.msra.mxu0 0
        %1764 = vmatprep.subr.bf16.mxu0 0
        %1765 = vmatpush1.bf16.msra.mxu0 0
        %1766 = vmatprep.subr.bf16.mxu0 0
        %1767 = vmatpush1.bf16.msra.mxu0 0
        %1768 = vmatprep.subr.bf16.mxu0 0
        %1769 = vmatpush1.bf16.msra.mxu0 0
        %1770 = vmatprep.subr.bf16.mxu0 0
        %1771 = vmatpush1.bf16.msra.mxu0 0
        %1772 = vmatprep.subr.bf16.mxu0 0
        %1773 = vmatpush1.bf16.msra.mxu0 0
        %1774 = vmatprep.subr.bf16.mxu0 0
        %1775 = vmatpush1.bf16.msra.mxu0 0
        %1776 = vmatprep.mubr.bf16.mxu0 0
        %1777 = vmatmul.mubr.bf16.gmra.mrb[0].mxu0 %v1742
        %v1778 = vpop.f32.mrb[0].mxu0
        %v1779 = vadd.f32 %v1727, %v1778
        %v1780 = vpop.f32.mrb[0].mxu0
        %v1781 = vpop.f32.mrb[0].mxu0
        %v1782 = vpop.f32.mrb[0].mxu0
        %1783 = vdwg.mxu0
        %v1784 = vpack.c.bf16 %v1779, %v1779
        %1786 = vrot.lane.b32.xlu0 %v1784, 96
        %v1787 = vpop.permute.xlu0 %1786
        %v1789 = vsel %vm814, %v1784, 0
        %v1792 = vsel %vm814, %v1787, 0
        %1794 = vmatprep.subr.bf16.mxu0 0
        %1795 = vmatpush1.bf16.xpose.msra.mxu0 %v1792
        %1796 = vmatprep.subr.bf16.mxu0 0
        %1797 = vmatpush1.bf16.xpose.msra.mxu0 0
        %1798 = vmatprep.subr.bf16.mxu0 0
        %1799 = vmatpush1.bf16.xpose.msra.mxu0 0
        %1800 = vmatprep.subr.bf16.mxu0 0
        %1801 = vmatpush1.bf16.xpose.msra.mxu0 0
        %1802 = vmatprep.subr.bf16.mxu0 0
        %1803 = vmatpush1.bf16.xpose.msra.mxu0 0
        %1804 = vmatprep.subr.bf16.mxu0 0
        %1805 = vmatpush1.bf16.xpose.msra.mxu0 0
        %1806 = vmatprep.subr.bf16.mxu0 0
        %1807 = vmatpush1.bf16.xpose.msra.mxu0 0
        %1808 = vmatprep.subr.bf16.mxu0 0
        %1809 = vmatpush1.bf16.xpose.msra.mxu0 0
        %1810 = vmatprep.subr.bf16.mxu0 0
        %1811 = vmatpush1.bf16.xpose.msra.mxu0 0
        %1812 = vmatprep.subr.bf16.mxu0 0
        %1813 = vmatpush1.bf16.xpose.msra.mxu0 0
        %1814 = vmatprep.subr.bf16.mxu0 0
        %1815 = vmatpush1.bf16.xpose.msra.mxu0 0
        %1816 = vmatprep.subr.bf16.mxu0 0
        %1817 = vmatpush1.bf16.xpose.msra.mxu0 0
        %1818 = vmatprep.subr.bf16.mxu0 0
        %1819 = vmatpush1.bf16.xpose.msra.mxu0 0
        %1820 = vmatprep.subr.bf16.mxu0 0
        %1821 = vmatpush1.bf16.xpose.msra.mxu0 0
        %1822 = vmatprep.subr.bf16.mxu0 0
        %1823 = vmatpush1.bf16.xpose.msra.mxu0 0
        %1824 = vmatprep.subr.bf16.mxu0 0
        %1825 = vmatpush1.bf16.xpose.msra.mxu0 0
        %1826 = vmatprep.mubr.bf16.mxu0 0
        %1827 = vmatmul.mubr.bf16.gmra.mrb[0].mxu0 %v1789
        %v1828 = vpop.f32.mrb[0].mxu0
        %v1829 = vadd.f32 0.0, %v1828
        %v1830 = vpop.f32.mrb[0].mxu0
        %v1831 = vpop.f32.mrb[0].mxu0
        %v1832 = vpop.f32.mrb[0].mxu0
        %1833 = vdwg.mxu0
        %v1834 = vmul.f32 %v1829, 0.35355338
        %v1835 = vsel %vm711, %v1834, -1e+09
        %v1836 = vsel %vm814, %v1835, -inf
        %1837 = vmax.xlane.f32.xlu0 %v1836
        %v1838 = vpop.xlane.xlu0 %1837
        %v1839 = vsub.f32 %v1835, %v1838
        %v1840 = vmul.f32 %v1839, 1.442695
        %v1841 = vpow.pop %v1840
        %v1842 = vsel %vm814, %v1841, 0.0
        %1843 = vadd.xlane.f32.xlu0 %v1842
        %v1844 = vpop.xlane.xlu0 %1843
        %v1845 = vrcp.pop %v1844
        %v1846 = vmul.f32 %v1841, %v1845
        %v1847 = vpack.c.bf16 %v1846, %v1846
        %1848 = vrot.lane.b32.xlu0 %v1784, 64
        %v1849 = vpop.permute.xlu0 %1848
        %v1851 = vsel %vm814, %v1847, 0
        %v1854 = vsel %vm880, %v1849, 0
        %1856 = vmatprep.subr.bf16.mxu0 0
        %1857 = vmatpush1.bf16.msra.mxu0 %v1854
        %1858 = vmatprep.subr.bf16.mxu0 0
        %1859 = vmatpush1.bf16.msra.mxu0 0
        %1860 = vmatprep.subr.bf16.mxu0 0
        %1861 = vmatpush1.bf16.msra.mxu0 0
        %1862 = vmatprep.subr.bf16.mxu0 0
        %1863 = vmatpush1.bf16.msra.mxu0 0
        %1864 = vmatprep.subr.bf16.mxu0 0
        %1865 = vmatpush1.bf16.msra.mxu0 0
        %1866 = vmatprep.subr.bf16.mxu0 0
        %1867 = vmatpush1.bf16.msra.mxu0 0
        %1868 = vmatprep.subr.bf16.mxu0 0
        %1869 = vmatpush1.bf16.msra.mxu0 0
        %1870 = vmatprep.subr.bf16.mxu0 0
        %1871 = vmatpush1.bf16.msra.mxu0 0
        %1872 = vmatprep.subr.bf16.mxu0 0
        %1873 = vmatpush1.bf16.msra.mxu0 0
        %1874 = vmatprep.subr.bf16.mxu0 0
        %1875 = vmatpush1.bf16.msra.mxu0 0
        %1876 = vmatprep.subr.bf16.mxu0 0
        %1877 = vmatpush1.bf16.msra.mxu0 0
        %1878 = vmatprep.subr.bf16.mxu0 0
        %1879 = vmatpush1.bf16.msra.mxu0 0
        %1880 = vmatprep.subr.bf16.mxu0 0
        %1881 = vmatpush1.bf16.msra.mxu0 0
        %1882 = vmatprep.subr.bf16.mxu0 0
        %1883 = vmatpush1.bf16.msra.mxu0 0
        %1884 = vmatprep.subr.bf16.mxu0 0
        %1885 = vmatpush1.bf16.msra.mxu0 0
        %1886 = vmatprep.subr.bf16.mxu0 0
        %1887 = vmatpush1.bf16.msra.mxu0 0
        %1888 = vmatprep.mubr.bf16.mxu0 0
        %1889 = vmatmul.mubr.bf16.gmra.mrb[0].mxu0 %v1851
        %v1890 = vpop.f32.mrb[0].mxu0
        %v1891 = vadd.f32 0.0, %v1890
        %v1892 = vpop.f32.mrb[0].mxu0
        %v1893 = vpop.f32.mrb[0].mxu0
        %v1894 = vpop.f32.mrb[0].mxu0
        %1895 = vdwg.mxu0
        %v1896 = vpack.c.bf16 %v1891, %v1891
        %s1897 = scalar_lea.vmem %s7, 16
        %v1898 = vld [vmem:[%s1897] sm:$0xf]
        %1899 = vrot.lane.b32.xlu0 %v1784, 120
        %v1900 = vpop.permute.xlu0 %1899
        %1901 = vrot.lane.b32.xlu0 %v1784, 88
        %v1902 = vpop.permute.xlu0 %1901
        %v1904 = vsel %vm814, %v1900, 0
        %v1907 = vsel %vm814, %v1902, 0
        %1909 = vmatprep.subr.bf16.mxu0 0
        %1910 = vmatpush1.bf16.xpose.msra.mxu0 %v1907
        %1911 = vmatprep.subr.bf16.mxu0 0
        %1912 = vmatpush1.bf16.xpose.msra.mxu0 0
        %1913 = vmatprep.subr.bf16.mxu0 0
        %1914 = vmatpush1.bf16.xpose.msra.mxu0 0
        %1915 = vmatprep.subr.bf16.mxu0 0
        %1916 = vmatpush1.bf16.xpose.msra.mxu0 0
        %1917 = vmatprep.subr.bf16.mxu0 0
        %1918 = vmatpush1.bf16.xpose.msra.mxu0 0
        %1919 = vmatprep.subr.bf16.mxu0 0
        %1920 = vmatpush1.bf16.xpose.msra.mxu0 0
        %1921 = vmatprep.subr.bf16.mxu0 0
        %1922 = vmatpush1.bf16.xpose.msra.mxu0 0
        %1923 = vmatprep.subr.bf16.mxu0 0
        %1924 = vmatpush1.bf16.xpose.msra.mxu0 0
        %1925 = vmatprep.subr.bf16.mxu0 0
        %1926 = vmatpush1.bf16.xpose.msra.mxu0 0
        %1927 = vmatprep.subr.bf16.mxu0 0
        %1928 = vmatpush1.bf16.xpose.msra.mxu0 0
        %1929 = vmatprep.subr.bf16.mxu0 0
        %1930 = vmatpush1.bf16.xpose.msra.mxu0 0
        %1931 = vmatprep.subr.bf16.mxu0 0
        %1932 = vmatpush1.bf16.xpose.msra.mxu0 0
        %1933 = vmatprep.subr.bf16.mxu0 0
        %1934 = vmatpush1.bf16.xpose.msra.mxu0 0
        %1935 = vmatprep.subr.bf16.mxu0 0
        %1936 = vmatpush1.bf16.xpose.msra.mxu0 0
        %1937 = vmatprep.subr.bf16.mxu0 0
        %1938 = vmatpush1.bf16.xpose.msra.mxu0 0
        %1939 = vmatprep.subr.bf16.mxu0 0
        %1940 = vmatpush1.bf16.xpose.msra.mxu0 0
        %1941 = vmatprep.mubr.bf16.mxu0 0
        %1942 = vmatmul.mubr.bf16.gmra.mrb[0].mxu0 %v1904
        %v1943 = vpop.f32.mrb[0].mxu0
        %v1944 = vadd.f32 0.0, %v1943
        %v1945 = vpop.f32.mrb[0].mxu0
        %v1946 = vpop.f32.mrb[0].mxu0
        %v1947 = vpop.f32.mrb[0].mxu0
        %1948 = vdwg.mxu0
        %v1949 = vmul.f32 %v1944, 0.35355338
        %v1950 = vsel %vm711, %v1949, -1e+09
        %v1951 = vsel %vm814, %v1950, -inf
        %1952 = vmax.xlane.f32.xlu0 %v1951
        %v1953 = vpop.xlane.xlu0 %1952
        %v1954 = vsub.f32 %v1950, %v1953
        %v1955 = vmul.f32 %v1954, 1.442695
        %v1956 = vpow.pop %v1955
        %v1957 = vsel %vm814, %v1956, 0.0
        %1958 = vadd.xlane.f32.xlu0 %v1957
        %v1959 = vpop.xlane.xlu0 %1958
        %v1960 = vrcp.pop %v1959
        %v1961 = vmul.f32 %v1956, %v1960
        %v1962 = vpack.c.bf16 %v1961, %v1961
        %1963 = vrot.lane.b32.xlu0 %v1784, 56
        %v1964 = vpop.permute.xlu0 %1963
        %v1966 = vsel %vm814, %v1962, 0
        %v1969 = vsel %vm880, %v1964, 0
        %1971 = vmatprep.subr.bf16.mxu0 0
        %1972 = vmatpush1.bf16.msra.mxu0 %v1969
        %1973 = vmatprep.subr.bf16.mxu0 0
        %1974 = vmatpush1.bf16.msra.mxu0 0
        %1975 = vmatprep.subr.bf16.mxu0 0
        %1976 = vmatpush1.bf16.msra.mxu0 0
        %1977 = vmatprep.subr.bf16.mxu0 0
        %1978 = vmatpush1.bf16.msra.mxu0 0
        %1979 = vmatprep.subr.bf16.mxu0 0
        %1980 = vmatpush1.bf16.msra.mxu0 0
        %1981 = vmatprep.subr.bf16.mxu0 0
        %1982 = vmatpush1.bf16.msra.mxu0 0
        %1983 = vmatprep.subr.bf16.mxu0 0
        %1984 = vmatpush1.bf16.msra.mxu0 0
        %1985 = vmatprep.subr.bf16.mxu0 0
        %1986 = vmatpush1.bf16.msra.mxu0 0
        %1987 = vmatprep.subr.bf16.mxu0 0
        %1988 = vmatpush1.bf16.msra.mxu0 0
        %1989 = vmatprep.subr.bf16.mxu0 0
        %1990 = vmatpush1.bf16.msra.mxu0 0
        %1991 = vmatprep.subr.bf16.mxu0 0
        %1992 = vmatpush1.bf16.msra.mxu0 0
        %1993 = vmatprep.subr.bf16.mxu0 0
        %1994 = vmatpush1.bf16.msra.mxu0 0
        %1995 = vmatprep.subr.bf16.mxu0 0
        %1996 = vmatpush1.bf16.msra.mxu0 0
        %1997 = vmatprep.subr.bf16.mxu0 0
        %1998 = vmatpush1.bf16.msra.mxu0 0
        %1999 = vmatprep.subr.bf16.mxu0 0
        %2000 = vmatpush1.bf16.msra.mxu0 0
        %2001 = vmatprep.subr.bf16.mxu0 0
        %2002 = vmatpush1.bf16.msra.mxu0 0
        %2003 = vmatprep.mubr.bf16.mxu0 0
        %2004 = vmatmul.mubr.bf16.gmra.mrb[0].mxu0 %v1966
        %v2005 = vpop.f32.mrb[0].mxu0
        %v2006 = vadd.f32 0.0, %v2005
        %v2007 = vpop.f32.mrb[0].mxu0
        %v2008 = vpop.f32.mrb[0].mxu0
        %v2009 = vpop.f32.mrb[0].mxu0
        %2010 = vdwg.mxu0
        %v2011 = vpack.c.bf16 %v2006, %v2006
        %s2012 = scalar_lea.vmem %s7, 20
        %v2013 = vld [vmem:[%s2012] sm:$0xf]
        %v2015 = vsel %vm814, %v2011, 0
        %v2018 = vsel %vm880, %v2013, 0
        %2020 = vmatprep.subr.bf16.mxu0 0
        %2021 = vmatpush1.bf16.msra.mxu0 %v2018
        %2022 = vmatprep.subr.bf16.mxu0 0
        %2023 = vmatpush1.bf16.msra.mxu0 0
        %2024 = vmatprep.subr.bf16.mxu0 0
        %2025 = vmatpush1.bf16.msra.mxu0 0
        %2026 = vmatprep.subr.bf16.mxu0 0
        %2027 = vmatpush1.bf16.msra.mxu0 0
        %2028 = vmatprep.subr.bf16.mxu0 0
        %2029 = vmatpush1.bf16.msra.mxu0 0
        %2030 = vmatprep.subr.bf16.mxu0 0
        %2031 = vmatpush1.bf16.msra.mxu0 0
        %2032 = vmatprep.subr.bf16.mxu0 0
        %2033 = vmatpush1.bf16.msra.mxu0 0
        %2034 = vmatprep.subr.bf16.mxu0 0
        %2035 = vmatpush1.bf16.msra.mxu0 0
        %2036 = vmatprep.subr.bf16.mxu0 0
        %2037 = vmatpush1.bf16.msra.mxu0 0
        %2038 = vmatprep.subr.bf16.mxu0 0
        %2039 = vmatpush1.bf16.msra.mxu0 0
        %2040 = vmatprep.subr.bf16.mxu0 0
        %2041 = vmatpush1.bf16.msra.mxu0 0
        %2042 = vmatprep.subr.bf16.mxu0 0
        %2043 = vmatpush1.bf16.msra.mxu0 0
        %2044 = vmatprep.subr.bf16.mxu0 0
        %2045 = vmatpush1.bf16.msra.mxu0 0
        %2046 = vmatprep.subr.bf16.mxu0 0
        %2047 = vmatpush1.bf16.msra.mxu0 0
        %2048 = vmatprep.subr.bf16.mxu0 0
        %2049 = vmatpush1.bf16.msra.mxu0 0
        %2050 = vmatprep.subr.bf16.mxu0 0
        %2051 = vmatpush1.bf16.msra.mxu0 0
        %2052 = vmatprep.mubr.bf16.mxu0 0
        %2053 = vmatmul.mubr.bf16.gmra.mrb[0].mxu0 %v2015
        %v2054 = vpop.f32.mrb[0].mxu0
        %v2055 = vadd.f32 0.0, %v2054
        %v2056 = vpop.f32.mrb[0].mxu0
        %v2057 = vpop.f32.mrb[0].mxu0
        %v2058 = vpop.f32.mrb[0].mxu0
        %2059 = vdwg.mxu0
        %2060 = vrot.lane.b32.xlu0 %v1784, 112
        %v2061 = vpop.permute.xlu0 %2060
        %2062 = vrot.lane.b32.xlu0 %v1784, 80
        %v2063 = vpop.permute.xlu0 %2062
        %v2065 = vsel %vm814, %v2061, 0
        %v2068 = vsel %vm814, %v2063, 0
        %2070 = vmatprep.subr.bf16.mxu0 0
        %2071 = vmatpush1.bf16.xpose.msra.mxu0 %v2068
        %2072 = vmatprep.subr.bf16.mxu0 0
        %2073 = vmatpush1.bf16.xpose.msra.mxu0 0
        %2074 = vmatprep.subr.bf16.mxu0 0
        %2075 = vmatpush1.bf16.xpose.msra.mxu0 0
        %2076 = vmatprep.subr.bf16.mxu0 0
        %2077 = vmatpush1.bf16.xpose.msra.mxu0 0
        %2078 = vmatprep.subr.bf16.mxu0 0
        %2079 = vmatpush1.bf16.xpose.msra.mxu0 0
        %2080 = vmatprep.subr.bf16.mxu0 0
        %2081 = vmatpush1.bf16.xpose.msra.mxu0 0
        %2082 = vmatprep.subr.bf16.mxu0 0
        %2083 = vmatpush1.bf16.xpose.msra.mxu0 0
        %2084 = vmatprep.subr.bf16.mxu0 0
        %2085 = vmatpush1.bf16.xpose.msra.mxu0 0
        %2086 = vmatprep.subr.bf16.mxu0 0
        %2087 = vmatpush1.bf16.xpose.msra.mxu0 0
        %2088 = vmatprep.subr.bf16.mxu0 0
        %2089 = vmatpush1.bf16.xpose.msra.mxu0 0
        %2090 = vmatprep.subr.bf16.mxu0 0
        %2091 = vmatpush1.bf16.xpose.msra.mxu0 0
        %2092 = vmatprep.subr.bf16.mxu0 0
        %2093 = vmatpush1.bf16.xpose.msra.mxu0 0
        %2094 = vmatprep.subr.bf16.mxu0 0
        %2095 = vmatpush1.bf16.xpose.msra.mxu0 0
        %2096 = vmatprep.subr.bf16.mxu0 0
        %2097 = vmatpush1.bf16.xpose.msra.mxu0 0
        %2098 = vmatprep.subr.bf16.mxu0 0
        %2099 = vmatpush1.bf16.xpose.msra.mxu0 0
        %2100 = vmatprep.subr.bf16.mxu0 0
        %2101 = vmatpush1.bf16.xpose.msra.mxu0 0
        %2102 = vmatprep.mubr.bf16.mxu0 0
        %2103 = vmatmul.mubr.bf16.gmra.mrb[0].mxu0 %v2065
        %v2104 = vpop.f32.mrb[0].mxu0
        %v2105 = vadd.f32 0.0, %v2104
        %v2106 = vpop.f32.mrb[0].mxu0
        %v2107 = vpop.f32.mrb[0].mxu0
        %v2108 = vpop.f32.mrb[0].mxu0
        %2109 = vdwg.mxu0
        %v2110 = vmul.f32 %v2105, 0.35355338
        %v2111 = vsel %vm711, %v2110, -1e+09
        %v2112 = vsel %vm814, %v2111, -inf
        %2113 = vmax.xlane.f32.xlu0 %v2112
        %v2114 = vpop.xlane.xlu0 %2113
        %v2115 = vsub.f32 %v2111, %v2114
        %v2116 = vmul.f32 %v2115, 1.442695
        %v2117 = vpow.pop %v2116
        %v2118 = vsel %vm814, %v2117, 0.0
        %2119 = vadd.xlane.f32.xlu0 %v2118
        %v2120 = vpop.xlane.xlu0 %2119
        %v2121 = vrcp.pop %v2120
        %v2122 = vmul.f32 %v2117, %v2121
        %v2123 = vpack.c.bf16 %v2122, %v2122
        %2124 = vrot.lane.b32.xlu0 %v1784, 48
        %v2125 = vpop.permute.xlu0 %2124
        %v2127 = vsel %vm814, %v2123, 0
        %v2130 = vsel %vm880, %v2125, 0
        %2132 = vmatprep.subr.bf16.mxu0 0
        %2133 = vmatpush1.bf16.msra.mxu0 %v2130
        %2134 = vmatprep.subr.bf16.mxu0 0
        %2135 = vmatpush1.bf16.msra.mxu0 0
        %2136 = vmatprep.subr.bf16.mxu0 0
        %2137 = vmatpush1.bf16.msra.mxu0 0
        %2138 = vmatprep.subr.bf16.mxu0 0
        %2139 = vmatpush1.bf16.msra.mxu0 0
        %2140 = vmatprep.subr.bf16.mxu0 0
        %2141 = vmatpush1.bf16.msra.mxu0 0
        %2142 = vmatprep.subr.bf16.mxu0 0
        %2143 = vmatpush1.bf16.msra.mxu0 0
        %2144 = vmatprep.subr.bf16.mxu0 0
        %2145 = vmatpush1.bf16.msra.mxu0 0
        %2146 = vmatprep.subr.bf16.mxu0 0
        %2147 = vmatpush1.bf16.msra.mxu0 0
        %2148 = vmatprep.subr.bf16.mxu0 0
        %2149 = vmatpush1.bf16.msra.mxu0 0
        %2150 = vmatprep.subr.bf16.mxu0 0
        %2151 = vmatpush1.bf16.msra.mxu0 0
        %2152 = vmatprep.subr.bf16.mxu0 0
        %2153 = vmatpush1.bf16.msra.mxu0 0
        %2154 = vmatprep.subr.bf16.mxu0 0
        %2155 = vmatpush1.bf16.msra.mxu0 0
        %2156 = vmatprep.subr.bf16.mxu0 0
        %2157 = vmatpush1.bf16.msra.mxu0 0
        %2158 = vmatprep.subr.bf16.mxu0 0
        %2159 = vmatpush1.bf16.msra.mxu0 0
        %2160 = vmatprep.subr.bf16.mxu0 0
        %2161 = vmatpush1.bf16.msra.mxu0 0
        %2162 = vmatprep.subr.bf16.mxu0 0
        %2163 = vmatpush1.bf16.msra.mxu0 0
        %2164 = vmatprep.mubr.bf16.mxu0 0
        %2165 = vmatmul.mubr.bf16.gmra.mrb[0].mxu0 %v2127
        %v2166 = vpop.f32.mrb[0].mxu0
        %v2167 = vadd.f32 0.0, %v2166
        %v2168 = vpop.f32.mrb[0].mxu0
        %v2169 = vpop.f32.mrb[0].mxu0
        %v2170 = vpop.f32.mrb[0].mxu0
        %2171 = vdwg.mxu0
        %v2172 = vpack.c.bf16 %v2167, %v2167
        %s2173 = scalar_lea.vmem %s7, 24
        %v2174 = vld [vmem:[%s2173] sm:$0xf]
        %v2176 = vsel %vm814, %v2172, 0
        %v2179 = vsel %vm880, %v2174, 0
        %2181 = vmatprep.subr.bf16.mxu0 0
        %2182 = vmatpush1.bf16.msra.mxu0 %v2179
        %2183 = vmatprep.subr.bf16.mxu0 0
        %2184 = vmatpush1.bf16.msra.mxu0 0
        %2185 = vmatprep.subr.bf16.mxu0 0
        %2186 = vmatpush1.bf16.msra.mxu0 0
        %2187 = vmatprep.subr.bf16.mxu0 0
        %2188 = vmatpush1.bf16.msra.mxu0 0
        %2189 = vmatprep.subr.bf16.mxu0 0
        %2190 = vmatpush1.bf16.msra.mxu0 0
        %2191 = vmatprep.subr.bf16.mxu0 0
        %2192 = vmatpush1.bf16.msra.mxu0 0
        %2193 = vmatprep.subr.bf16.mxu0 0
        %2194 = vmatpush1.bf16.msra.mxu0 0
        %2195 = vmatprep.subr.bf16.mxu0 0
        %2196 = vmatpush1.bf16.msra.mxu0 0
        %2197 = vmatprep.subr.bf16.mxu0 0
        %2198 = vmatpush1.bf16.msra.mxu0 0
        %2199 = vmatprep.subr.bf16.mxu0 0
        %2200 = vmatpush1.bf16.msra.mxu0 0
        %2201 = vmatprep.subr.bf16.mxu0 0
        %2202 = vmatpush1.bf16.msra.mxu0 0
        %2203 = vmatprep.subr.bf16.mxu0 0
        %2204 = vmatpush1.bf16.msra.mxu0 0
        %2205 = vmatprep.subr.bf16.mxu0 0
        %2206 = vmatpush1.bf16.msra.mxu0 0
        %2207 = vmatprep.subr.bf16.mxu0 0
        %2208 = vmatpush1.bf16.msra.mxu0 0
        %2209 = vmatprep.subr.bf16.mxu0 0
        %2210 = vmatpush1.bf16.msra.mxu0 0
        %2211 = vmatprep.subr.bf16.mxu0 0
        %2212 = vmatpush1.bf16.msra.mxu0 0
        %2213 = vmatprep.mubr.bf16.mxu0 0
        %2214 = vmatmul.mubr.bf16.gmra.mrb[0].mxu0 %v2176
        %v2215 = vpop.f32.mrb[0].mxu0
        %v2216 = vadd.f32 0.0, %v2215
        %v2217 = vpop.f32.mrb[0].mxu0
        %v2218 = vpop.f32.mrb[0].mxu0
        %v2219 = vpop.f32.mrb[0].mxu0
        %2220 = vdwg.mxu0
        %2221 = vrot.lane.b32.xlu0 %v1784, 104
        %v2222 = vpop.permute.xlu0 %2221
        %2223 = vrot.lane.b32.xlu0 %v1784, 72
        %v2224 = vpop.permute.xlu0 %2223
        %v2226 = vsel %vm814, %v2222, 0
        %v2229 = vsel %vm814, %v2224, 0
        %2231 = vmatprep.subr.bf16.mxu0 0
        %2232 = vmatpush1.bf16.xpose.msra.mxu0 %v2229
        %2233 = vmatprep.subr.bf16.mxu0 0
        %2234 = vmatpush1.bf16.xpose.msra.mxu0 0
        %2235 = vmatprep.subr.bf16.mxu0 0
        %2236 = vmatpush1.bf16.xpose.msra.mxu0 0
        %2237 = vmatprep.subr.bf16.mxu0 0
        %2238 = vmatpush1.bf16.xpose.msra.mxu0 0
        %2239 = vmatprep.subr.bf16.mxu0 0
        %2240 = vmatpush1.bf16.xpose.msra.mxu0 0
        %2241 = vmatprep.subr.bf16.mxu0 0
        %2242 = vmatpush1.bf16.xpose.msra.mxu0 0
        %2243 = vmatprep.subr.bf16.mxu0 0
        %2244 = vmatpush1.bf16.xpose.msra.mxu0 0
        %2245 = vmatprep.subr.bf16.mxu0 0
        %2246 = vmatpush1.bf16.xpose.msra.mxu0 0
        %2247 = vmatprep.subr.bf16.mxu0 0
        %2248 = vmatpush1.bf16.xpose.msra.mxu0 0
        %2249 = vmatprep.subr.bf16.mxu0 0
        %2250 = vmatpush1.bf16.xpose.msra.mxu0 0
        %2251 = vmatprep.subr.bf16.mxu0 0
        %2252 = vmatpush1.bf16.xpose.msra.mxu0 0
        %2253 = vmatprep.subr.bf16.mxu0 0
        %2254 = vmatpush1.bf16.xpose.msra.mxu0 0
        %2255 = vmatprep.subr.bf16.mxu0 0
        %2256 = vmatpush1.bf16.xpose.msra.mxu0 0
        %2257 = vmatprep.subr.bf16.mxu0 0
        %2258 = vmatpush1.bf16.xpose.msra.mxu0 0
        %2259 = vmatprep.subr.bf16.mxu0 0
        %2260 = vmatpush1.bf16.xpose.msra.mxu0 0
        %2261 = vmatprep.subr.bf16.mxu0 0
        %2262 = vmatpush1.bf16.xpose.msra.mxu0 0
        %2263 = vmatprep.mubr.bf16.mxu0 0
        %2264 = vmatmul.mubr.bf16.gmra.mrb[0].mxu0 %v2226
        %v2265 = vpop.f32.mrb[0].mxu0
        %v2266 = vadd.f32 0.0, %v2265
        %v2267 = vpop.f32.mrb[0].mxu0
        %v2268 = vpop.f32.mrb[0].mxu0
        %v2269 = vpop.f32.mrb[0].mxu0
        %2270 = vdwg.mxu0
        %v2271 = vmul.f32 %v2266, 0.35355338
        %v2272 = vsel %vm711, %v2271, -1e+09
        %v2273 = vsel %vm814, %v2272, -inf
        %2274 = vmax.xlane.f32.xlu0 %v2273
        %v2275 = vpop.xlane.xlu0 %2274
        %v2276 = vsub.f32 %v2272, %v2275
        %v2277 = vmul.f32 %v2276, 1.442695
        %v2278 = vpow.pop %v2277
        %v2279 = vsel %vm814, %v2278, 0.0
        %2280 = vadd.xlane.f32.xlu0 %v2279
        %v2281 = vpop.xlane.xlu0 %2280
        %v2282 = vrcp.pop %v2281
        %v2283 = vmul.f32 %v2278, %v2282
        %v2284 = vpack.c.bf16 %v2283, %v2283
        %2285 = vrot.lane.b32.xlu0 %v1784, 40
        %v2286 = vpop.permute.xlu0 %2285
        %v2288 = vsel %vm814, %v2284, 0
        %v2291 = vsel %vm880, %v2286, 0
        %2293 = vmatprep.subr.bf16.mxu0 0
        %2294 = vmatpush1.bf16.msra.mxu0 %v2291
        %2295 = vmatprep.subr.bf16.mxu0 0
        %2296 = vmatpush1.bf16.msra.mxu0 0
        %2297 = vmatprep.subr.bf16.mxu0 0
        %2298 = vmatpush1.bf16.msra.mxu0 0
        %2299 = vmatprep.subr.bf16.mxu0 0
        %2300 = vmatpush1.bf16.msra.mxu0 0
        %2301 = vmatprep.subr.bf16.mxu0 0
        %2302 = vmatpush1.bf16.msra.mxu0 0
        %2303 = vmatprep.subr.bf16.mxu0 0
        %2304 = vmatpush1.bf16.msra.mxu0 0
        %2305 = vmatprep.subr.bf16.mxu0 0
        %2306 = vmatpush1.bf16.msra.mxu0 0
        %2307 = vmatprep.subr.bf16.mxu0 0
        %2308 = vmatpush1.bf16.msra.mxu0 0
        %2309 = vmatprep.subr.bf16.mxu0 0
        %2310 = vmatpush1.bf16.msra.mxu0 0
        %2311 = vmatprep.subr.bf16.mxu0 0
        %2312 = vmatpush1.bf16.msra.mxu0 0
        %2313 = vmatprep.subr.bf16.mxu0 0
        %2314 = vmatpush1.bf16.msra.mxu0 0
        %2315 = vmatprep.subr.bf16.mxu0 0
        %2316 = vmatpush1.bf16.msra.mxu0 0
        %2317 = vmatprep.subr.bf16.mxu0 0
        %2318 = vmatpush1.bf16.msra.mxu0 0
        %2319 = vmatprep.subr.bf16.mxu0 0
        %2320 = vmatpush1.bf16.msra.mxu0 0
        %2321 = vmatprep.subr.bf16.mxu0 0
        %2322 = vmatpush1.bf16.msra.mxu0 0
        %2323 = vmatprep.subr.bf16.mxu0 0
        %2324 = vmatpush1.bf16.msra.mxu0 0
        %2325 = vmatprep.mubr.bf16.mxu0 0
        %2326 = vmatmul.mubr.bf16.gmra.mrb[0].mxu0 %v2288
        %v2327 = vpop.f32.mrb[0].mxu0
        %v2328 = vadd.f32 0.0, %v2327
        %v2329 = vpop.f32.mrb[0].mxu0
        %v2330 = vpop.f32.mrb[0].mxu0
        %v2331 = vpop.f32.mrb[0].mxu0
        %2332 = vdwg.mxu0
        %v2333 = vpack.c.bf16 %v2328, %v2328
        %s2334 = scalar_lea.vmem %s7, 28
        %v2335 = vld [vmem:[%s2334] sm:$0xf]
        %v2337 = vsel %vm814, %v2333, 0
        %v2340 = vsel %vm880, %v2335, 0
        %2342 = vmatprep.subr.bf16.mxu0 0
        %2343 = vmatpush1.bf16.msra.mxu0 %v2340
        %2344 = vmatprep.subr.bf16.mxu0 0
        %2345 = vmatpush1.bf16.msra.mxu0 0
        %2346 = vmatprep.subr.bf16.mxu0 0
        %2347 = vmatpush1.bf16.msra.mxu0 0
        %2348 = vmatprep.subr.bf16.mxu0 0
        %2349 = vmatpush1.bf16.msra.mxu0 0
        %2350 = vmatprep.subr.bf16.mxu0 0
        %2351 = vmatpush1.bf16.msra.mxu0 0
        %2352 = vmatprep.subr.bf16.mxu0 0
        %2353 = vmatpush1.bf16.msra.mxu0 0
        %2354 = vmatprep.subr.bf16.mxu0 0
        %2355 = vmatpush1.bf16.msra.mxu0 0
        %2356 = vmatprep.subr.bf16.mxu0 0
        %2357 = vmatpush1.bf16.msra.mxu0 0
        %2358 = vmatprep.subr.bf16.mxu0 0
        %2359 = vmatpush1.bf16.msra.mxu0 0
        %2360 = vmatprep.subr.bf16.mxu0 0
        %2361 = vmatpush1.bf16.msra.mxu0 0
        %2362 = vmatprep.subr.bf16.mxu0 0
        %2363 = vmatpush1.bf16.msra.mxu0 0
        %2364 = vmatprep.subr.bf16.mxu0 0
        %2365 = vmatpush1.bf16.msra.mxu0 0
        %2366 = vmatprep.subr.bf16.mxu0 0
        %2367 = vmatpush1.bf16.msra.mxu0 0
        %2368 = vmatprep.subr.bf16.mxu0 0
        %2369 = vmatpush1.bf16.msra.mxu0 0
        %2370 = vmatprep.subr.bf16.mxu0 0
        %2371 = vmatpush1.bf16.msra.mxu0 0
        %2372 = vmatprep.subr.bf16.mxu0 0
        %2373 = vmatpush1.bf16.msra.mxu0 0
        %2374 = vmatprep.mubr.bf16.mxu0 0
        %2375 = vmatmul.mubr.bf16.gmra.mrb[0].mxu0 %v2337
        %v2376 = vpop.f32.mrb[0].mxu0
        %v2377 = vadd.f32 0.0, %v2376
        %v2378 = vpop.f32.mrb[0].mxu0
        %v2379 = vpop.f32.mrb[0].mxu0
        %v2380 = vpop.f32.mrb[0].mxu0
        %2381 = vdwg.mxu0
        %v2383 = vsel %vm814, %v1896, 0
        %v2386 = vsel %vm880, %v1898, 0
        %2388 = vmatprep.subr.bf16.mxu0 0
        %2389 = vmatpush1.bf16.msra.mxu0 %v2386
        %2390 = vmatprep.subr.bf16.mxu0 0
        %2391 = vmatpush1.bf16.msra.mxu0 0
        %2392 = vmatprep.subr.bf16.mxu0 0
        %2393 = vmatpush1.bf16.msra.mxu0 0
        %2394 = vmatprep.subr.bf16.mxu0 0
        %2395 = vmatpush1.bf16.msra.mxu0 0
        %2396 = vmatprep.subr.bf16.mxu0 0
        %2397 = vmatpush1.bf16.msra.mxu0 0
        %2398 = vmatprep.subr.bf16.mxu0 0
        %2399 = vmatpush1.bf16.msra.mxu0 0
        %2400 = vmatprep.subr.bf16.mxu0 0
        %2401 = vmatpush1.bf16.msra.mxu0 0
        %2402 = vmatprep.subr.bf16.mxu0 0
        %2403 = vmatpush1.bf16.msra.mxu0 0
        %2404 = vmatprep.subr.bf16.mxu0 0
        %2405 = vmatpush1.bf16.msra.mxu0 0
        %2406 = vmatprep.subr.bf16.mxu0 0
        %2407 = vmatpush1.bf16.msra.mxu0 0
        %2408 = vmatprep.subr.bf16.mxu0 0
        %2409 = vmatpush1.bf16.msra.mxu0 0
        %2410 = vmatprep.subr.bf16.mxu0 0
        %2411 = vmatpush1.bf16.msra.mxu0 0
        %2412 = vmatprep.subr.bf16.mxu0 0
        %2413 = vmatpush1.bf16.msra.mxu0 0
        %2414 = vmatprep.subr.bf16.mxu0 0
        %2415 = vmatpush1.bf16.msra.mxu0 0
        %2416 = vmatprep.subr.bf16.mxu0 0
        %2417 = vmatpush1.bf16.msra.mxu0 0
        %2418 = vmatprep.subr.bf16.mxu0 0
        %2419 = vmatpush1.bf16.msra.mxu0 0
        %2420 = vmatprep.mubr.bf16.mxu0 0
        %2421 = vmatmul.mubr.bf16.gmra.mrb[0].mxu0 %v2383
        %v2422 = vpop.f32.mrb[0].mxu0
        %v2423 = vadd.f32 %v2055, %v2422
        %v2424 = vpop.f32.mrb[0].mxu0
        %v2425 = vpop.f32.mrb[0].mxu0
        %v2426 = vpop.f32.mrb[0].mxu0
        %2427 = vdwg.mxu0
        %v2428 = vadd.f32 %v2423, %v2216
        %v2429 = vadd.f32 %v2428, %v2377
        %v2430 = vadd.f32 %v1683, %v2429
        %s2431 = scalar_lea.vmem %s8, 1
        %v2432 = vld [vmem:[%s2431] sm:$0x1]
        %v2434 = vlaneseq
        %v2435 = vshrl.u32 %v2434, 7
        %v2436 = vsub.s32 0, %v2435
        %v2437 = vrot.slane %v2432, %v2436
        %v2439 = vadd.f32 %v2430, %v2437
        %s2440 = scalar_lea.vmem %s9, 1
        %v2441 = vld [vmem:[%s2440] sm:$0x1]
        %s2442 = scalar_lea.vmem %s10, 1
        %v2443 = vld [vmem:[%s2442] sm:$0x1]
        %v2444 = vsel %vm714, %v2439, 0.0
        %2445 = vadd.xlane.f32.xlu0 %v2444
        %v2446 = vpop.xlane.xlu0 %2445
        %v2447 = vmul.f32 %v2446, %v718
        %v2448 = vsub.f32 %v2439, %v2447
        %v2449 = vmul.f32 %v2448, %v2448
        %v2450 = vsel %vm714, %v2449, 0.0
        %2451 = vadd.xlane.f32.xlu0 %v2450
        %v2452 = vpop.xlane.xlu0 %2451
        %v2453 = vmul.f32 %v2452, %v718
        %v2454 = vadd.f32 %v2453, 1e-05
        %v2455 = vrsqrt.pop %v2454
        %v2456 = vmul.f32 %v2448, %v2455
        %v2458 = vlaneseq
        %v2459 = vshrl.u32 %v2458, 7
        %v2460 = vsub.s32 0, %v2459
        %v2461 = vrot.slane %v2441, %v2460
        %v2463 = vmul.f32 %v2456, %v2461
        %v2465 = vlaneseq
        %v2466 = vshrl.u32 %v2465, 7
        %v2467 = vsub.s32 0, %v2466
        %v2468 = vrot.slane %v2443, %v2467
        %v2470 = vadd.f32 %v2463, %v2468
        %v2471 = vpack.c.bf16 %v2470, %v2470
        %s2472 = scalar_lea.vmem %s11, 16
        %v2473 = vld [vmem:[%s2472] sm:$0xf]
        %v2474 = vld [vmem:[%s2472 + $0x4] sm:$0xf]
        %v2475 = vld [vmem:[%s2472 + $0x8] sm:$0xf]
        %v2476 = vld [vmem:[%s2472 + $0xc] sm:$0xf]
        %s2477 = scalar_lea.vmem %s12, 1
        %v2478 = vld [vmem:[%s2477] sm:$0x1]
        %v2480 = vlaneseq
        %v2481 = vshrl.u32 %v2480, 7
        %v2482 = vsub.s32 0, %v2481
        %v2483 = vrot.slane %v2478, %v2482
        %v2489 = vunpack.c.l.b16 %v2473
        %v2490 = vunpack.c.l.b16 %v2474
        %v2491 = vunpack.c.l.b16 %v2475
        %v2492 = vunpack.c.l.b16 %v2476
        %v2493 = vpack.c.b16 %v2490, %v2489
        %v2494 = vpack.c.b16 %v2492, %v2491
        %v2498 = vsel %vm714, %v2471, 0
        %2500 = vmatprep.subr.bf16.mxu0 0
        %2501 = vmatpush1.bf16.msra.mxu0 %v2493
        %2502 = vmatprep.subr.bf16.mxu0 0
        %2503 = vmatpush1.bf16.msra.mxu0 %v2494
        %2504 = vmatprep.subr.bf16.mxu0 0
        %2505 = vmatpush1.bf16.msra.mxu0 0
        %2506 = vmatprep.subr.bf16.mxu0 0
        %2507 = vmatpush1.bf16.msra.mxu0 0
        %2508 = vmatprep.subr.bf16.mxu0 0
        %2509 = vmatpush1.bf16.msra.mxu0 0
        %2510 = vmatprep.subr.bf16.mxu0 0
        %2511 = vmatpush1.bf16.msra.mxu0 0
        %2512 = vmatprep.subr.bf16.mxu0 0
        %2513 = vmatpush1.bf16.msra.mxu0 0
        %2514 = vmatprep.subr.bf16.mxu0 0
        %2515 = vmatpush1.bf16.msra.mxu0 0
        %2516 = vmatprep.subr.bf16.mxu0 0
        %2517 = vmatpush1.bf16.msra.mxu0 0
        %2518 = vmatprep.subr.bf16.mxu0 0
        %2519 = vmatpush1.bf16.msra.mxu0 0
        %2520 = vmatprep.subr.bf16.mxu0 0
        %2521 = vmatpush1.bf16.msra.mxu0 0
        %2522 = vmatprep.subr.bf16.mxu0 0
        %2523 = vmatpush1.bf16.msra.mxu0 0
        %2524 = vmatprep.subr.bf16.mxu0 0
        %2525 = vmatpush1.bf16.msra.mxu0 0
        %2526 = vmatprep.subr.bf16.mxu0 0
        %2527 = vmatpush1.bf16.msra.mxu0 0
        %2528 = vmatprep.subr.bf16.mxu0 0
        %2529 = vmatpush1.bf16.msra.mxu0 0
        %2530 = vmatprep.subr.bf16.mxu0 0
        %2531 = vmatpush1.bf16.msra.mxu0 0
        %2532 = vmatprep.mubr.bf16.mxu0 0
        %2533 = vmatmul.mubr.bf16.gmra.mrb[0].mxu0 %v2498
        %v2534 = vpop.f32.mrb[0].mxu0
        %v2535 = vadd.f32 %v2483, %v2534
        %v2536 = vpop.f32.mrb[0].mxu0
        %v2537 = vpop.f32.mrb[0].mxu0
        %v2538 = vpop.f32.mrb[0].mxu0
        %2539 = vdwg.mxu0
        %v2540 = vmul.f32 %v2535, 0.5
        %v2541 = vmul.f32 %v2535, 0.044715
        %v2542 = vmul.f32 %v2541, %v2535
        %v2543 = vmul.f32 %v2542, %v2535
        %v2544 = vadd.f32 %v2535, %v2543
        %v2545 = vmul.f32 %v2544, 0.7978846
        %v2546 = vtanh.pop %v2545
        %v2547 = vadd.f32 %v2546, 1.0
        %v2548 = vmul.f32 %v2540, %v2547
        %v2549 = vpack.c.bf16 %v2548, %v2548
        %s2550 = scalar_lea.vmem %s13, 64
        %v2551 = vld [vmem:[%s2550] sm:$0xf]
        %v2552 = vld [vmem:[%s2550 + $0x4] sm:$0xf]
        %v2553 = vld [vmem:[%s2550 + $0x8] sm:$0xf]
        %v2554 = vld [vmem:[%s2550 + $0xc] sm:$0xf]
        %v2555 = vld [vmem:[%s2550 + $0x10] sm:$0xf]
        %v2556 = vld [vmem:[%s2550 + $0x14] sm:$0xf]
        %v2557 = vld [vmem:[%s2550 + $0x18] sm:$0xf]
        %v2558 = vld [vmem:[%s2550 + $0x1c] sm:$0xf]
        %v2559 = vld [vmem:[%s2550 + $0x20] sm:$0xf]
        %v2560 = vld [vmem:[%s2550 + $0x24] sm:$0xf]
        %v2561 = vld [vmem:[%s2550 + $0x28] sm:$0xf]
        %v2562 = vld [vmem:[%s2550 + $0x2c] sm:$0xf]
        %v2563 = vld [vmem:[%s2550 + $0x30] sm:$0xf]
        %v2564 = vld [vmem:[%s2550 + $0x34] sm:$0xf]
        %v2565 = vld [vmem:[%s2550 + $0x38] sm:$0xf]
        %v2566 = vld [vmem:[%s2550 + $0x3c] sm:$0xf]
        %s2567 = scalar_lea.vmem %s14, 1
        %v2568 = vld [vmem:[%s2567] sm:$0x1]
        %v2570 = vlaneseq
        %v2571 = vshrl.u32 %v2570, 7
        %v2572 = vsub.s32 0, %v2571
        %v2573 = vrot.slane %v2568, %v2572
        %v2591 = vunpack.c.l.b16 %v2551
        %v2592 = vunpack.c.l.b16 %v2552
        %v2593 = vunpack.c.l.b16 %v2553
        %v2594 = vunpack.c.l.b16 %v2554
        %v2595 = vunpack.c.l.b16 %v2555
        %v2596 = vunpack.c.l.b16 %v2556
        %v2597 = vunpack.c.l.b16 %v2557
        %v2598 = vunpack.c.l.b16 %v2558
        %v2599 = vunpack.c.l.b16 %v2559
        %v2600 = vunpack.c.l.b16 %v2560
        %v2601 = vunpack.c.l.b16 %v2561
        %v2602 = vunpack.c.l.b16 %v2562
        %v2603 = vunpack.c.l.b16 %v2563
        %v2604 = vunpack.c.l.b16 %v2564
        %v2605 = vunpack.c.l.b16 %v2565
        %v2606 = vunpack.c.l.b16 %v2566
        %v2607 = vpack.c.b16 %v2592, %v2591
        %v2608 = vpack.c.b16 %v2594, %v2593
        %v2609 = vpack.c.b16 %v2596, %v2595
        %v2610 = vpack.c.b16 %v2598, %v2597
        %v2611 = vpack.c.b16 %v2600, %v2599
        %v2612 = vpack.c.b16 %v2602, %v2601
        %v2613 = vpack.c.b16 %v2604, %v2603
        %v2614 = vpack.c.b16 %v2606, %v2605
        %2623 = vmatprep.subr.bf16.mxu0 0
        %2624 = vmatpush1.bf16.msra.mxu0 %v2607
        %2625 = vmatprep.subr.bf16.mxu0 0
        %2626 = vmatpush1.bf16.msra.mxu0 %v2608
        %2627 = vmatprep.subr.bf16.mxu0 0
        %2628 = vmatpush1.bf16.msra.mxu0 %v2609
        %2629 = vmatprep.subr.bf16.mxu0 0
        %2630 = vmatpush1.bf16.msra.mxu0 %v2610
        %2631 = vmatprep.subr.bf16.mxu0 0
        %2632 = vmatpush1.bf16.msra.mxu0 %v2611
        %2633 = vmatprep.subr.bf16.mxu0 0
        %2634 = vmatpush1.bf16.msra.mxu0 %v2612
        %2635 = vmatprep.subr.bf16.mxu0 0
        %2636 = vmatpush1.bf16.msra.mxu0 %v2613
        %2637 = vmatprep.subr.bf16.mxu0 0
        %2638 = vmatpush1.bf16.msra.mxu0 %v2614
        %2639 = vmatprep.subr.bf16.mxu0 0
        %2640 = vmatpush1.bf16.msra.mxu0 0
        %2641 = vmatprep.subr.bf16.mxu0 0
        %2642 = vmatpush1.bf16.msra.mxu0 0
        %2643 = vmatprep.subr.bf16.mxu0 0
        %2644 = vmatpush1.bf16.msra.mxu0 0
        %2645 = vmatprep.subr.bf16.mxu0 0
        %2646 = vmatpush1.bf16.msra.mxu0 0
        %2647 = vmatprep.subr.bf16.mxu0 0
        %2648 = vmatpush1.bf16.msra.mxu0 0
        %2649 = vmatprep.subr.bf16.mxu0 0
        %2650 = vmatpush1.bf16.msra.mxu0 0
        %2651 = vmatprep.subr.bf16.mxu0 0
        %2652 = vmatpush1.bf16.msra.mxu0 0
        %2653 = vmatprep.subr.bf16.mxu0 0
        %2654 = vmatpush1.bf16.msra.mxu0 0
        %2655 = vmatprep.mubr.bf16.mxu0 0
        %2656 = vmatmul.mubr.bf16.gmra.mrb[0].mxu0 %v2549
        %v2657 = vpop.f32.mrb[0].mxu0
        %v2658 = vadd.f32 %v2573, %v2657
        %v2659 = vpop.f32.mrb[0].mxu0
        %v2660 = vpop.f32.mrb[0].mxu0
        %v2661 = vpop.f32.mrb[0].mxu0
        %2662 = vdwg.mxu0
        %v2663 = vadd.f32 %v2439, %v2658
        %v2664 = vld [vmem:[%s15] sm:$0x1]
        %v2665 = vld [vmem:[%s16] sm:$0x1]
        %v2666 = vsel %vm714, %v2663, 0.0
        %2667 = vadd.xlane.f32.xlu0 %v2666
        %v2668 = vpop.xlane.xlu0 %2667
        %v2669 = vmul.f32 %v2668, %v718
        %v2670 = vsub.f32 %v2663, %v2669
        %v2671 = vmul.f32 %v2670, %v2670
        %v2672 = vsel %vm714, %v2671, 0.0
        %2673 = vadd.xlane.f32.xlu0 %v2672
        %v2674 = vpop.xlane.xlu0 %2673
        %v2675 = vmul.f32 %v2674, %v718
        %v2676 = vadd.f32 %v2675, 1e-05
        %v2677 = vrsqrt.pop %v2676
        %v2678 = vmul.f32 %v2670, %v2677
        %v2680 = vlaneseq
        %v2681 = vshrl.u32 %v2680, 7
        %v2682 = vsub.s32 0, %v2681
        %v2683 = vrot.slane %v2664, %v2682
        %v2685 = vmul.f32 %v2678, %v2683
        %v2687 = vlaneseq
        %v2688 = vshrl.u32 %v2687, 7
        %v2689 = vsub.s32 0, %v2688
        %v2690 = vrot.slane %v2665, %v2689
        %v2692 = vadd.f32 %v2685, %v2690
        %v2693 = vpack.c.bf16 %v2692, %v2692
        %v2695 = vsel %vm714, %v2693, 0
        %v2698 = vsel %vm714, %v645, 0
        %v2701 = vsel %vm714, %v646, 0
        %v2704 = vsel %vm714, %v647, 0
        %v2707 = vsel %vm714, %v648, 0
        %v2710 = vsel %vm714, %v649, 0
        %v2713 = vsel %vm714, %v650, 0
        %v2716 = vsel %vm714, %v651, 0
        %v2719 = vsel %vm714, %v652, 0
        %2721 = vmatprep.subr.bf16.mxu0 0
        %2722 = vmatpush1.bf16.xpose.msra.mxu0 %v2698
        %2723 = vmatprep.subr.bf16.mxu0 0
        %2724 = vmatpush1.bf16.xpose.msra.mxu0 %v2701
        %2725 = vmatprep.subr.bf16.mxu0 0
        %2726 = vmatpush1.bf16.xpose.msra.mxu0 %v2704
        %2727 = vmatprep.subr.bf16.mxu0 0
        %2728 = vmatpush1.bf16.xpose.msra.mxu0 %v2707
        %2729 = vmatprep.subr.bf16.mxu0 0
        %2730 = vmatpush1.bf16.xpose.msra.mxu0 %v2710
        %2731 = vmatprep.subr.bf16.mxu0 0
        %2732 = vmatpush1.bf16.xpose.msra.mxu0 %v2713
        %2733 = vmatprep.subr.bf16.mxu0 0
        %2734 = vmatpush1.bf16.xpose.msra.mxu0 %v2716
        %2735 = vmatprep.subr.bf16.mxu0 0
        %2736 = vmatpush1.bf16.xpose.msra.mxu0 %v2719
        %2737 = vmatprep.subr.bf16.mxu0 0
        %2738 = vmatpush1.bf16.xpose.msra.mxu0 0
        %2739 = vmatprep.subr.bf16.mxu0 0
        %2740 = vmatpush1.bf16.xpose.msra.mxu0 0
        %2741 = vmatprep.subr.bf16.mxu0 0
        %2742 = vmatpush1.bf16.xpose.msra.mxu0 0
        %2743 = vmatprep.subr.bf16.mxu0 0
        %2744 = vmatpush1.bf16.xpose.msra.mxu0 0
        %2745 = vmatprep.subr.bf16.mxu0 0
        %2746 = vmatpush1.bf16.xpose.msra.mxu0 0
        %2747 = vmatprep.subr.bf16.mxu0 0
        %2748 = vmatpush1.bf16.xpose.msra.mxu0 0
        %2749 = vmatprep.subr.bf16.mxu0 0
        %2750 = vmatpush1.bf16.xpose.msra.mxu0 0
        %2751 = vmatprep.subr.bf16.mxu0 0
        %2752 = vmatpush1.bf16.xpose.msra.mxu0 0
        %2753 = vmatprep.mubr.bf16.mxu0 0
        %2754 = vmatmul.mubr.bf16.gmra.mrb[0].mxu0 %v2695
        %v2755 = vpop.f32.mrb[0].mxu0
        %v2756 = vadd.f32 0.0, %v2755
        %v2757 = vpop.f32.mrb[0].mxu0
        %v2758 = vpop.f32.mrb[0].mxu0
        %v2759 = vpop.f32.mrb[0].mxu0
        %2760 = vdwg.mxu0
        %2761 = vst [vmem:[%s577] sm:$0xff] %v2756
        %s2762 = sand.u32 %s428, 1
        %s2763 = scalar_lea.sflag [#allocation3], %s2762
        %s2764 = sand.u32 %s428, 1
        %s2765 = smul.addr %s2764, 8
        %s2766 = scalar_lea.vmem [#allocation2], %s2765
        // Predicated region
        $region93: #{tpu_custom_call.1} parent=91 // pred_check
          %p2767 = pneg %p438
        $region94: #{tpu_custom_call.1} parent=91 // pred_check_branch
          %2769 = sbr.rel (%p2767) target = $region96
        $region95: #{tpu_custom_call.1} parent=91 // pred_region
          %s2771 = ssub.s32 128, 128
          %2772 = vsyncadd %s2763, %s2771
          %s2773 = smul.addr %s32, 128
          %s2774 = scalar_lea.hbm %s18, %s2773
          %s2776 = sshll.u32 %s2766, 4
          %s2777 = int_to_ptr.vmem [resolvable:$true] %s2776
          %2779 = dma.vmem_to_hbm [thread:$0]  %s2777, 128, %s2774, %s2763
        $region96: #{tpu_custom_call.1} parent=91 // pred_fallthru
          _
      $region92: #{tpu_custom_call.1} parent=5 // pred_fallthru
        _
      %p2780 = scmp.le.s32.totalorder 2, %s27
      // Predicated region
      $region97: #{tpu_custom_call.1} parent=5 // pred_check
        %p2781 = pneg %p2780
      $region98: #{tpu_custom_call.1} parent=5 // pred_check_branch
        %2783 = sbr.rel (%p2781) target = $region100
      $region99: #{tpu_custom_call.1} parent=5 // pred_region
        %s2784 = ssub.s32 %s27, 2
        // Predicated region
        $region101: #{tpu_custom_call.1} parent=99 // pred_check
          %p2785 = pneg %p444
        $region102: #{tpu_custom_call.1} parent=99 // pred_check_branch
          %2787 = sbr.rel (%p2785) target = $region104
        $region103: #{tpu_custom_call.1} parent=99 // pred_region
          %s2788 = sand.u32 %s429, 1
          %s2789 = scalar_lea.sflag [#allocation3], %s2788
          %s2790 = sand.u32 %s429, 1
          %s2791 = smul.addr %s2790, 8
          %s2792 = scalar_lea.vmem [#allocation2], %s2791
          %2793 = dma.done %s2789, 128
        $region104: #{tpu_custom_call.1} parent=99 // pred_fallthru
          _
      $region100: #{tpu_custom_call.1} parent=5 // pred_fallthru
        _
    $region6: #{tpu_custom_call.1} parent=1 // loop_footer
      %s31 = sadd.s32 1, %s27
    $region7: #{tpu_custom_call.1} parent=1 // loop_footer_branch
      %26 = sbr.rel target = $region3
    $region8: #{tpu_custom_call.1} parent=1 // loop_exit
      _
    %2794 = vsyncpa [#allocation3], 1
    %s2795 = scalar_lea.sflag [#allocation3], 1
    %2796 = vsyncpa %s2795, 1

</llo_original>
